<compile_context>
chip_gen: v5e
topology: v5e:2x2
jax: 0.10.0
libtpu: 0.0.40
codegen_flags: <defaults>
</compile_context>

<pallas_src>
import math
from functools import partial

import jax
import jax.numpy as jnp
from jax.experimental import pallas as pl
from jax.experimental.pallas import tpu as pltpu

LN_EPS = 1e-5            # torch.nn.LayerNorm default
NEG_INF = -1e30          # masked_fill(-inf) surrogate (avoids NaN on fully-masked rows)

# index maps for grid-constant blocks
_c1 = lambda i: (0, 0)
_c2 = lambda i, j: (0, 0)


# ------------------------------ small helpers --------------------------------

def _round_up(n, m):
    return ((n + m - 1) // m) * m


def _row_plan(n, cap=512):
    """Row tile (multiple of 8, <= cap) and the padded row count it implies."""
    tm = min(cap, _round_up(n, 8))
    return tm, _round_up(n, tm)


def _pad_rows(x, n_pad):
    n = x.shape[0]
    return x if n == n_pad else jnp.pad(x, ((0, n_pad - n), (0, 0)))


def _q_tile(length):
    for t in (256, 128, 64, 32, 16, 8):
        if length % t == 0:
            return t
    return length


def _col_tile(n, cap=512):
    """Lane-dim tile: a multiple of 128 dividing n, else the full dim (no tiling)."""
    for t in (cap, 384, 256, 128):
        if t <= cap and n % t == 0:
            return t
    return n


def _vmem_limit(per_step_bytes):
    # double-buffer + compiler scratch margin; never below the 32 MiB default.
    return int(min(max(2 * per_step_bytes + (4 << 20), 32 << 20), 112 << 20))


def _params(sem, vmem_bytes):
    return pltpu.CompilerParams(dimension_semantics=sem, vmem_limit_bytes=vmem_bytes)


_BUFFERED_OK = None


def _buffered_ok():
    """Probe once whether pipeline_mode=pl.Buffered(1) is supported on this JAX/TPU."""
    global _BUFFERED_OK
    if _BUFFERED_OK is not None:
        return _BUFFERED_OK
    ok = hasattr(pl, "Buffered")
    if ok:
        try:
            def k(x_ref, w_ref, o_ref):
                o_ref[...] = x_ref[...] + w_ref[...]
            x = jnp.zeros((8, 128), jnp.float32)
            f = pl.pallas_call(
                k, out_shape=jax.ShapeDtypeStruct((8, 128), jnp.float32),
                grid=(1,),
                in_specs=[pl.BlockSpec((8, 128), _c1),
                          pl.BlockSpec((8, 128), _c1, pipeline_mode=pl.Buffered(1))],
                out_specs=pl.BlockSpec((8, 128), _c1))
            jax.block_until_ready(f(x, x))
        except Exception:
            ok = False
    _BUFFERED_OK = ok
    return ok


def _w_spec(shape, index_map):
    """BlockSpec for grid-constant weights/biases: single-buffered when supported."""
    if _buffered_ok():
        return pl.BlockSpec(shape, index_map, pipeline_mode=pl.Buffered(1))
    return pl.BlockSpec(shape, index_map)


def _ln_f32(x, g, b):
    mean = jnp.mean(x, axis=-1, keepdims=True)
    var = jnp.mean(jnp.square(x - mean), axis=-1, keepdims=True)
    return (x - mean) * jax.lax.rsqrt(var + LN_EPS) * g + b


# ------------------------- fused LN + Linear kernel --------------------------

def _ln_linear_kernel(x_ref, g_ref, b_ref, w_ref, wb_ref, o_ref):
    x = x_ref[...].astype(jnp.float32)
    xn = _ln_f32(x, g_ref[...], b_ref[...])
    y = jnp.dot(xn.astype(jnp.bfloat16), w_ref[...],
                preferred_element_type=jnp.float32) + wb_ref[...]
    o_ref[...] = y.astype(o_ref.dtype)


def ln_linear(x2d, g, b, w, wb, out_dtype=None):
    """y = LayerNorm(x) @ W + b   (W bf16, f32 accumulation, bf16-storable output)."""
    N, D = x2d.shape
    Dout = w.shape[1]
    if out_dtype is None:
        out_dtype = x2d.dtype
    tm, n_pad = _row_plan(N)
    x_p = _pad_rows(x2d, n_pad)
    # TODO(synk): add Dout-tiling of the fused QKV weight for D >= 1024 (v7x VMEM headroom).
    vmem = _vmem_limit(2 * tm * D * 4 + w.nbytes + 2 * tm * Dout * 4)
    out = pl.pallas_call(
        _ln_linear_kernel,
        out_shape=jax.ShapeDtypeStruct((n_pad, Dout), out_dtype),
        grid=(n_pad // tm,),
        in_specs=[pl.BlockSpec((tm, D), lambda i: (i, 0)),
                  _w_spec((1, D), _c1), _w_spec((1, D), _c1),
                  _w_spec((D, Dout), _c1), _w_spec((1, Dout), _c1)],
        out_specs=pl.BlockSpec((tm, Dout), lambda i: (i, 0)),
        compiler_params=_params(("parallel",), vmem),
    )(x_p, g, b, w, wb)
    return out[:N]


# ------------------------------- plain Linear ---------------------------------

def _linear_kernel(x_ref, w_ref, b_ref, o_ref):
    y = jnp.dot(x_ref[...], w_ref[...], preferred_element_type=jnp.float32) + b_ref[...]
    o_ref[...] = y.astype(o_ref.dtype)


def linear(x2d, w, b, out_dtype=None):
    """y = x @ W + b  with x and W already bf16 (memory KV projection)."""
    N, D = x2d.shape
    Dout = w.shape[1]
    if out_dtype is None:
        out_dtype = x2d.dtype
    tm, n_pad = _row_plan(N)
    x_p = _pad_rows(x2d, n_pad)
    vmem = _vmem_limit(2 * tm * D * 2 + w.nbytes + 2 * tm * Dout * 4)
    out = pl.pallas_call(
        _linear_kernel,
        out_shape=jax.ShapeDtypeStruct((n_pad, Dout), out_dtype),
        grid=(n_pad // tm,),
        in_specs=[pl.BlockSpec((tm, D), lambda i: (i, 0)),
                  _w_spec((D, Dout), _c1), _w_spec((1, Dout), _c1)],
        out_specs=pl.BlockSpec((tm, Dout), lambda i: (i, 0)),
        compiler_params=_params(("parallel",), vmem),
    )(x_p, w, b)
    return out[:N]


# ----------------- fused MHA + output projection + residual -------------------

def _mha_core(q, k, v, bias, wo, bo, res, H, Dh, want_probs):
    """q:[tq,D] k,v:[Lk,D] bf16; bias additive f32; wo bf16 [D,D]; bo [1,D]; res [tq,D] f32.

    Per-head ctx slices are concatenated and sent through ONE output-projection matmul.
    Returns (out, head_mean_probs_or_None)."""
    ctx_parts = []
    probs_acc = None
    for h in range(H):          # TODO(synk): head-pairing / flash-style Lk streaming for long seqs
        sl = slice(h * Dh, (h + 1) * Dh)
        s = jnp.einsum('qd,kd->qk', q[:, sl], k[:, sl],
                       preferred_element_type=jnp.float32) + bias
        m = jnp.max(s, axis=-1, keepdims=True)
        e = jnp.exp(s - m)
        denom = jnp.sum(e, axis=-1, keepdims=True)
        if want_probs:
            p = e / denom                                     # exact (returned probabilities)
            probs_acc = p if probs_acc is None else probs_acc + p
        else:
            p = e * pl.reciprocal(denom, approx=True)         # EUP slot, not returned
        ctx_parts.append(jnp.dot(p.astype(jnp.bfloat16), v[:, sl],
                                 preferred_element_type=jnp.float32))
    ctx = jnp.concatenate(ctx_parts, axis=-1)                 # [tq, D] f32
    out = jnp.dot(ctx.astype(jnp.bfloat16), wo,
                  preferred_element_type=jnp.float32) + bo + res
    if want_probs:
        return out, probs_acc * jnp.float32(1.0 / H)
    return out, None


def _self_attn_kernel(qkv_ref, mask_ref, wo_ref, bo_ref, res_ref,
                      ln2g_ref, ln2b_ref, wq_ref, bq_ref,
                      xo_ref, qo_ref, *, H, Dh, tq):
    D = H * Dh
    Lq = qkv_ref.shape[1]
    row0 = pl.multiple_of(pl.program_id(1) * tq, tq)
    q = qkv_ref[0, pl.ds(row0, tq), 0:D]                      # [tq, D]  bf16
    k = qkv_ref[0, :, D:2 * D]                                # [Lq, D]  bf16
    v = qkv_ref[0, :, 2 * D:3 * D]                            # [Lq, D]  bf16
    pad = mask_ref[0] > 0                                     # [1, Lq] key-padding
    rows = row0 + jax.lax.broadcasted_iota(jnp.int32, (tq, Lq), 0)
    cols = jax.lax.broadcasted_iota(jnp.int32, (tq, Lq), 1)
    bias = jnp.where((rows >= cols) & pad, jnp.float32(0.0), jnp.float32(NEG_INF))
    out, _ = _mha_core(q, k, v, bias, wo_ref[...], bo_ref[...],
                       res_ref[0].astype(jnp.float32), H, Dh, want_probs=False)
    xo_ref[0] = out.astype(xo_ref.dtype)
    # fused epilogue: LN2 + cross-attention Q projection (1/sqrt(Dh) pre-folded into wq/bq)
    qn = _ln_f32(out, ln2g_ref[...], ln2b_ref[...])
    qo_ref[0] = (jnp.dot(qn.astype(jnp.bfloat16), wq_ref[...],
                         preferred_element_type=jnp.float32) + bq_ref[...]).astype(qo_ref.dtype)


def _cross_attn_kernel(q_ref, kv_ref, mask_ref, wo_ref, bo_ref, res_ref,
                       o_ref, p_ref=None, *, H, Dh):
    D = H * Dh
    q = q_ref[0]                                              # [tq, D] bf16
    k = kv_ref[0, :, 0:D]                                     # [Lk, D] bf16
    v = kv_ref[0, :, D:2 * D]                                 # [Lk, D] bf16
    bias = jnp.where(mask_ref[0] > 0, jnp.float32(0.0), jnp.float32(NEG_INF))  # [1, Lk]
    out, probs = _mha_core(q, k, v, bias, wo_ref[...], bo_ref[...],
                           res_ref[0].astype(jnp.float32), H, Dh,
                           want_probs=p_ref is not None)
    o_ref[0] = out.astype(o_ref.dtype)
    if p_ref is not None:
        p_ref[0] = probs


def self_attn_block(qkv, trg_mask_i32, wo, bo, residual, ln2_g, ln2_b, ca_wq, ca_bq, H):
    B, Lq, threeD = qkv.shape
    D = threeD // 3
    Dh = D // H
    tq = _q_tile(Lq)
    imap_b = lambda b, t: (b, 0, 0)
    imap_bt = lambda b, t: (b, t, 0)
    vmem = _vmem_limit(2 * Lq * threeD * 2 + wo.nbytes + ca_wq.nbytes
                       + 8 * tq * D * 4 + tq * Lq * 4)
    return pl.pallas_call(
        partial(_self_attn_kernel, H=H, Dh=Dh, tq=tq),
        out_shape=(jax.ShapeDtypeStruct((B, Lq, D), residual.dtype),
                   jax.ShapeDtypeStruct((B, Lq, D), jnp.bfloat16)),
        grid=(B, Lq // tq),
        in_specs=[pl.BlockSpec((1, Lq, threeD), imap_b),      # qkv (resident across q tiles)
                  pl.BlockSpec((1, 1, Lq), imap_b),           # key-padding mask
                  _w_spec((D, D), _c2), _w_spec((1, D), _c2),
                  pl.BlockSpec((1, tq, D), imap_bt),          # residual
                  _w_spec((1, D), _c2), _w_spec((1, D), _c2), # LN2 gamma/beta
                  _w_spec((D, D), _c2), _w_spec((1, D), _c2)],# cross-attn Wq/bq
        out_specs=(pl.BlockSpec((1, tq, D), imap_bt),
                   pl.BlockSpec((1, tq, D), imap_bt)),
        compiler_params=_params(("parallel", "parallel"), vmem),
    )(qkv, trg_mask_i32, wo, bo, residual, ln2_g, ln2_b, ca_wq, ca_bq)


def cross_attn_block(q, kv, src_mask_i32, wo, bo, residual, H, want_probs):
    B, Lq, D = q.shape
    Lk = kv.shape[1]
    Dh = D // H
    tq = _q_tile(Lq)
    imap_b = lambda b, t: (b, 0, 0)
    imap_bt = lambda b, t: (b, t, 0)
    o_shape = jax.ShapeDtypeStruct((B, Lq, D), residual.dtype)
    o_spec = pl.BlockSpec((1, tq, D), imap_bt)
    if want_probs:
        out_shape = (o_shape, jax.ShapeDtypeStruct((B, Lq, Lk), jnp.float32))
        out_specs = (o_spec, pl.BlockSpec((1, tq, Lk), imap_bt))
    else:
        out_shape, out_specs = o_shape, o_spec
    vmem = _vmem_limit(2 * Lk * 2 * D * 2 + wo.nbytes + 8 * tq * D * 4 + tq * Lk * 4)
    res = pl.pallas_call(
        partial(_cross_attn_kernel, H=H, Dh=Dh),
        out_shape=out_shape,
        grid=(B, Lq // tq),
        in_specs=[pl.BlockSpec((1, tq, D), imap_bt),          # q (bf16, scale pre-folded)
                  pl.BlockSpec((1, Lk, 2 * D), imap_b),       # memory K|V (bf16, resident)
                  pl.BlockSpec((1, 1, Lk), imap_b),
                  _w_spec((D, D), _c2), _w_spec((1, D), _c2),
                  pl.BlockSpec((1, tq, D), imap_bt)],         # residual
        out_specs=out_specs,
        compiler_params=_params(("parallel", "parallel"), vmem),
    )(q, kv, src_mask_i32, wo, bo, residual)
    if want_probs:
        return res[0], res[1]
    return res, None


# --------------- fused pre-norm FFN + residual (+ final LN), F-tiled ----------

def _ffn_kernel(x_ref, g_ref, b_ref, w1_ref, b1_ref, w2_ref, b2_ref,
                *rest, apply_final_ln):
    if apply_final_ln:
        fg_ref, fb_ref, o_ref, acc_ref, xn_ref = rest
    else:
        o_ref, acc_ref, xn_ref = rest
    ft = pl.program_id(1)

    @pl.when(ft == 0)
    def _():
        x = x_ref[...].astype(jnp.float32)
        xn_ref[...] = _ln_f32(x, g_ref[...], b_ref[...]).astype(jnp.bfloat16)
        acc_ref[...] = jnp.zeros_like(acc_ref)

    h = jnp.maximum(jnp.dot(xn_ref[...], w1_ref[...],
                            preferred_element_type=jnp.float32) + b1_ref[...], 0.0)
    acc_ref[...] += jnp.dot(h.astype(jnp.bfloat16), w2_ref[...],
                            preferred_element_type=jnp.float32)

    @pl.when(ft == pl.num_programs(1) - 1)
    def _():
        y = acc_ref[...] + b2_ref[...] + x_ref[...].astype(jnp.float32)
        if apply_final_ln:
            y = _ln_f32(y, fg_ref[...], fb_ref[...])
        o_ref[...] = y.astype(o_ref.dtype)


def ffn_block(x2d, g, b, w1, b1, w2, b2, final_g=None, final_b=None):
    N, D = x2d.shape
    F = w1.shape[1]
    tm, n_pad = _row_plan(N)
    x_p = _pad_rows(x2d, n_pad)
    tf = _col_tile(F)
    apply_final = final_g is not None
    vmem = _vmem_limit(3 * tm * D * 4 + 4 * D * tf * 2 + tm * tf * 4)
    args = [x_p, g, b, w1, b1, w2, b2]
    in_specs = [pl.BlockSpec((tm, D), lambda i, f: (i, 0)),
                _w_spec((1, D), _c2), _w_spec((1, D), _c2),
                pl.BlockSpec((D, tf), lambda i, f: (0, f)),
                pl.BlockSpec((1, tf), lambda i, f: (0, f)),
                pl.BlockSpec((tf, D), lambda i, f: (f, 0)),
                _w_spec((1, D), _c2)]
    if apply_final:
        args += [final_g, final_b]
        in_specs += [_w_spec((1, D), _c2), _w_spec((1, D), _c2)]
    out = pl.pallas_call(
        partial(_ffn_kernel, apply_final_ln=apply_final),
        out_shape=jax.ShapeDtypeStruct((n_pad, D), x2d.dtype),
        grid=(n_pad // tm, F // tf),
        in_specs=in_specs,
        out_specs=pl.BlockSpec((tm, D), lambda i, f: (i, 0)),
        scratch_shapes=[pltpu.VMEM((tm, D), jnp.float32),
                        pltpu.VMEM((tm, D), jnp.bfloat16)],
        compiler_params=_params(("parallel", "arbitrary"), vmem),
    )(*args)
    return out[:N]


# ------------------------------ JAX glue (model) ------------------------------

def sinusoidal_pe(length, dim):
    position = jnp.arange(length, dtype=jnp.float32)[:, None]
    div_term = jnp.exp(jnp.arange(0, dim, 2, dtype=jnp.float32)
                       * -(math.log(10000.0) / dim))
    pe = jnp.zeros((length, dim), jnp.float32)
    pe = pe.at[:, 0::2].set(jnp.sin(position * div_term))
    pe = pe.at[:, 1::2].set(jnp.cos(position * div_term))
    return pe


def decoder_layer(fp, x, memory_bf16, src_mask_i32, trg_mask_i32, H, last,
                  final_g, final_b):
    B, Lt, D = x.shape
    Ls = memory_bf16.shape[0] // B
    # LN1 + fused QKV projection (bf16 intermediate)
    qkv = ln_linear(x.reshape(B * Lt, D), fp['ln1_g'], fp['ln1_b'],
                    fp['sa_wqkv'], fp['sa_bqkv'],
                    out_dtype=jnp.bfloat16).reshape(B, Lt, 3 * D)
    # self-attention + Wo + residual, with fused LN2 + cross-attn Q epilogue
    x, q = self_attn_block(qkv, trg_mask_i32, fp['sa_wo'], fp['sa_bo'], x,
                           fp['ln2_g'], fp['ln2_b'], fp['ca_wq'], fp['ca_bq'], H)
    q = q.reshape(B, Lt, D)
    # memory K|V projection (bf16 in / bf16 out)
    kv = linear(memory_bf16, fp['ca_wkv'], fp['ca_bkv'],
                out_dtype=jnp.bfloat16).reshape(B, Ls, 2 * D)
    # cross-attention + Wo + residual (+ head-mean probs on the last layer only)
    x, cross_w = cross_attn_block(q, kv, src_mask_i32, fp['ca_wo'], fp['ca_bo'],
                                  x, H, want_probs=last)
    pre_ffn = x   # == layers[-1].context_representation(penultimate, ...) for the last layer
    # pre-norm FFN + residual (+ fused final decoder LayerNorm on the last layer)
    x = ffn_block(x.reshape(B * Lt, D), fp['ff_ln_g'], fp['ff_ln_b'],
                  fp['ff_w1'], fp['ff_b1'], fp['ff_w2'], fp['ff_b2'],
                  final_g=final_g if last else None,
                  final_b=final_b if last else None).reshape(B, Lt, D)
    return x, pre_ffn, cross_w


def transformer_decoder_forward(fparams, embed_trg, encoder_output, src_mask, trg_mask, H):
    B, Lt, D = embed_trg.shape
    Ls = encoder_output.shape[1]
    # absolute sinusoidal positional encoding; emb_dropout == identity (eval)
    x = embed_trg.astype(jnp.float32) + sinusoidal_pe(Lt, D)[None]
    # compact key-padding masks; the causal part is generated inside the kernel
    trg_mask_i32 = trg_mask.astype(jnp.int32)     # [B, 1, Lt]
    src_mask_i32 = src_mask.astype(jnp.int32)     # [B, 1, Ls]
    # encoder memory cast to bf16 ONCE (re-read for the KV projection every layer)
    memory_bf16 = encoder_output.astype(jnp.bfloat16).reshape(B * Ls, D)

    n_layers = len(fparams['layers'])
    cross_w = None
    pen_rep = None
    for li, lp in enumerate(fparams['layers']):
        last = li == n_layers - 1
        x, pre_ffn, cw = decoder_layer(lp, x, memory_bf16, src_mask_i32, trg_mask_i32,
                                       H, last, fparams['final_ln_g'], fparams['final_ln_b'])
        if last:
            cross_w = cw
            pen_rep = pre_ffn
    # final LayerNorm already fused into the last layer's FFN kernel
    return x, pen_rep, cross_w


# ----------------------------- parameter handling ------------------------------

def init_params(key, D, F, num_layers):
    state = {'key': key}

    def nxt():
        state['key'], sub = jax.random.split(state['key'])
        return sub

    def dense(din, dout):
        return jax.random.normal(nxt(), (din, dout), jnp.float32) * 0.02

    def attn():
        return dict(wq=dense(D, D), bq=jnp.zeros(D, jnp.float32),
                    wk=dense(D, D), bk=jnp.zeros(D, jnp.float32),
                    wv=dense(D, D), bv=jnp.zeros(D, jnp.float32),
                    wo=dense(D, D), bo=jnp.zeros(D, jnp.float32))

    layers = []
    for _ in range(num_layers):
        layers.append(dict(
            ln1_g=jnp.ones(D, jnp.float32), ln1_b=jnp.zeros(D, jnp.float32),
            self_attn=attn(),
            ln2_g=jnp.ones(D, jnp.float32), ln2_b=jnp.zeros(D, jnp.float32),
            cross_attn=attn(),
            ff=dict(ln_g=jnp.ones(D, jnp.float32), ln_b=jnp.zeros(D, jnp.float32),
                    w1=dense(D, F), b1=jnp.zeros(F, jnp.float32),
                    w2=dense(F, D), b2=jnp.zeros(D, jnp.float32)),
        ))
    return dict(layers=layers,
                final_ln_g=jnp.ones(D, jnp.float32),
                final_ln_b=jnp.zeros(D, jnp.float32))


def prepare_params(params, H):
    """Fuse QKV / KV weights, fold 1/sqrt(Dh) into Q, pre-cast matmul weights to bf16."""
    D = params['layers'][0]['ln1_g'].shape[0]
    scale = 1.0 / math.sqrt(D // H)

    def row(v):
        return v.reshape(1, -1).astype(jnp.float32)

    def fuse_layer(lp):
        sa, ca, ff = lp['self_attn'], lp['cross_attn'], lp['ff']
        return dict(
            ln1_g=row(lp['ln1_g']), ln1_b=row(lp['ln1_b']),
            sa_wqkv=jnp.concatenate([sa['wq'] * scale, sa['wk'], sa['wv']],
                                    axis=1).astype(jnp.bfloat16),
            sa_bqkv=row(jnp.concatenate([sa['bq'] * scale, sa['bk'], sa['bv']])),
            sa_wo=sa['wo'].astype(jnp.bfloat16), sa_bo=row(sa['bo']),
            ln2_g=row(lp['ln2_g']), ln2_b=row(lp['ln2_b']),
            ca_wq=(ca['wq'] * scale).astype(jnp.bfloat16), ca_bq=row(ca['bq'] * scale),
            ca_wkv=jnp.concatenate([ca['wk'], ca['wv']], axis=1).astype(jnp.bfloat16),
            ca_bkv=row(jnp.concatenate([ca['bk'], ca['bv']])),
            ca_wo=ca['wo'].astype(jnp.bfloat16), ca_bo=row(ca['bo']),
            ff_ln_g=row(ff['ln_g']), ff_ln_b=row(ff['ln_b']),
            ff_w1=ff['w1'].astype(jnp.bfloat16), ff_b1=row(ff['b1']),
            ff_w2=ff['w2'].astype(jnp.bfloat16), ff_b2=row(ff['b2']),
        )

    return dict(layers=[fuse_layer(lp) for lp in params['layers']],
                final_ln_g=row(params['final_ln_g']),
                final_ln_b=row(params['final_ln_b']))


# ------------------------------------ main -------------------------------------

if __name__ == "__main__":
    B, Lt, Ls = 2, 8, 8
    D, F, H, NL = 32, 64, 4, 2

    key = jax.random.PRNGKey(0)
    k_emb, k_enc, k_par = jax.random.split(key, 3)
    embed_trg = jax.random.normal(k_emb, (B, Lt, D), jnp.float32)
    encoder_output = jax.random.normal(k_enc, (B, Ls, D), jnp.float32)

    src_lens = jnp.array([Ls, Ls - 2])
    trg_lens = jnp.array([Lt, Lt - 1])
    src_mask = (jnp.arange(Ls)[None, :] < src_lens[:, None])[:, None, :]   # [B,1,Ls]
    trg_mask = (jnp.arange(Lt)[None, :] < trg_lens[:, None])[:, None, :]   # [B,1,Lt]

    params = init_params(k_par, D, F, NL)
    fparams = prepare_params(params, H)   # QKV/KV fusion, scale folding, bf16 cast (once)

    _buffered_ok()                        # probe Buffered(1) support outside the jit trace

    fwd = jax.jit(partial(transformer_decoder_forward, H=H))
    out, pen_rep, cross_w = fwd(fparams, embed_trg, encoder_output, src_mask, trg_mask)
    jax.block_until_ready((out, pen_rep, cross_w))

    # TODO(synk): the exact head-reduction of the returned cross-attention weights is not in
    # the prompt; the head-mean is used to produce the documented [B, trg_len, src_len] shape.
    assert out.shape == (B, Lt, D)
    assert pen_rep.shape == (B, Lt, D)
    assert cross_w.shape == (B, Lt, Ls)
    assert bool(jnp.all(jnp.isfinite(out)))
    assert bool(jnp.all(jnp.isfinite(pen_rep)))
    assert bool(jnp.all(jnp.isfinite(cross_w)))
    print("KERNEL_OK")
</pallas_src>

<mosaic_0001>
module attributes {stable_mosaic.version = 11 : i64} {
  func.func @k(%arg0: i32, %arg1: memref<8x128xf32, #tpu.memory_space<vmem>>, %arg2: memref<8x128xf32, #tpu.memory_space<vmem>>, %arg3: memref<8x128xf32, #tpu.memory_space<vmem>>) attributes {dimension_semantics = [#tpu.dimension_semantics<arbitrary>], iteration_bounds = array<i64: 1>, scalar_prefetch = 0 : i64, scratch_operands = 0 : i64, tpu.core_type = #tpu.core_type<tc>, window_params = [{pipeline_mode = #tpu.pipeline_mode<synchronous>, transform_indices = @transform_0, window_bounds = array<i64: 8, 128>}, {pipeline_mode = #tpu.pipeline_mode<synchronous>, transform_indices = @transform_1, window_bounds = array<i64: 8, 128>}, {pipeline_mode = #tpu.pipeline_mode<synchronous>, transform_indices = @transform_2, window_bounds = array<i64: 8, 128>}]} {
    %c0 = arith.constant 0 : index
    %c0_0 = arith.constant 0 : index
    %0 = vector.load %arg1[%c0, %c0_0] : memref<8x128xf32, #tpu.memory_space<vmem>>, vector<8x128xf32>
    %c0_1 = arith.constant 0 : index
    %c0_2 = arith.constant 0 : index
    %1 = vector.load %arg2[%c0_1, %c0_2] : memref<8x128xf32, #tpu.memory_space<vmem>>, vector<8x128xf32>
    %2 = arith.addf %0, %1 : vector<8x128xf32>
    %c0_3 = arith.constant 0 : index
    %c0_4 = arith.constant 0 : index
    %3 = vector.load %arg3[%c0_3, %c0_4] : memref<8x128xf32, #tpu.memory_space<vmem>>, vector<8x128xf32>
    tpu.vector_store %arg3[%c0_3, %c0_4], %2 {strides = array<i32>} : memref<8x128xf32, #tpu.memory_space<vmem>>, vector<8x128xf32>,
    return
  }
  func.func @transform_0(%arg0: i32) -> (i32, i32) {
    %c0_i32 = arith.constant 0 : i32
    %c0_i32_0 = arith.constant 0 : i32
    %c0_i32_1 = arith.constant 0 : i32
    return %c0_i32, %c0_i32_0 : i32, i32
  }
  func.func @transform_1(%arg0: i32) -> (i32, i32) {
    %c0_i32 = arith.constant 0 : i32
    %c0_i32_0 = arith.constant 0 : i32
    %c0_i32_1 = arith.constant 0 : i32
    return %c0_i32, %c0_i32_0 : i32, i32
  }
  func.func @transform_2(%arg0: i32) -> (i32, i32) {
    %c0_i32 = arith.constant 0 : i32
    %c0_i32_0 = arith.constant 0 : i32
    %c0_i32_1 = arith.constant 0 : i32
    return %c0_i32, %c0_i32_0 : i32, i32
  }
}

module attributes {stable_mosaic.version = 11 : i64} {
  func.func @_ln_linear_kernel(%arg0: i32, %arg1: memref<16x32xf32, #tpu.memory_space<vmem>>, %arg2: memref<1x32xf32, #tpu.memory_space<vmem>>, %arg3: memref<1x32xf32, #tpu.memory_space<vmem>>, %arg4: memref<32x96xbf16, #tpu.memory_space<vmem>>, %arg5: memref<1x96xf32, #tpu.memory_space<vmem>>, %arg6: memref<16x96xbf16, #tpu.memory_space<vmem>>) attributes {dimension_semantics = [#tpu.dimension_semantics<parallel>], iteration_bounds = array<i64: 1>, scalar_prefetch = 0 : i64, scratch_operands = 0 : i64, tpu.core_type = #tpu.core_type<tc>, window_params = [{transform_indices = @transform_0, window_bounds = array<i64: 16, 32>}, {pipeline_mode = #tpu.pipeline_mode<synchronous>, transform_indices = @transform_1, window_bounds = array<i64: 1, 32>}, {pipeline_mode = #tpu.pipeline_mode<synchronous>, transform_indices = @transform_2, window_bounds = array<i64: 1, 32>}, {pipeline_mode = #tpu.pipeline_mode<synchronous>, transform_indices = @transform_3, window_bounds = array<i64: 32, 96>}, {pipeline_mode = #tpu.pipeline_mode<synchronous>, transform_indices = @transform_4, window_bounds = array<i64: 1, 96>}, {transform_indices = @transform_5, window_bounds = array<i64: 16, 96>}]} {
    %c0 = arith.constant 0 : index
    %c0_0 = arith.constant 0 : index
    %0 = vector.load %arg1[%c0, %c0_0] : memref<16x32xf32, #tpu.memory_space<vmem>>, vector<16x32xf32>
    %c0_1 = arith.constant 0 : index
    %c0_2 = arith.constant 0 : index
    %1 = vector.load %arg2[%c0_1, %c0_2] : memref<1x32xf32, #tpu.memory_space<vmem>>, vector<1x32xf32>
    %c0_3 = arith.constant 0 : index
    %c0_4 = arith.constant 0 : index
    %2 = vector.load %arg3[%c0_3, %c0_4] : memref<1x32xf32, #tpu.memory_space<vmem>>, vector<1x32xf32>
    %cst = arith.constant dense<0.000000e+00> : vector<16xf32>
    %3 = vector.multi_reduction <add>, %0, %cst [1] : vector<16x32xf32> to vector<16xf32>
    %4 = vector.shape_cast %3 : vector<16xf32> to vector<16x1xf32>
    %cst_5 = arith.constant 3.200000e+01 : f32
    %5 = vector.broadcast %cst_5 : f32 to vector<16x1xf32>
    %6 = arith.divf %4, %5 : vector<16x1xf32>
    %7 = vector.broadcast %6 : vector<16x1xf32> to vector<16x32xf32>
    %8 = arith.subf %0, %7 : vector<16x32xf32>
    %9 = arith.mulf %8, %8 : vector<16x32xf32>
    %cst_6 = arith.constant dense<0.000000e+00> : vector<16xf32>
    %10 = vector.multi_reduction <add>, %9, %cst_6 [1] : vector<16x32xf32> to vector<16xf32>
    %11 = vector.shape_cast %10 : vector<16xf32> to vector<16x1xf32>
    %cst_7 = arith.constant 3.200000e+01 : f32
    %12 = vector.broadcast %cst_7 : f32 to vector<16x1xf32>
    %13 = arith.divf %11, %12 : vector<16x1xf32>
    %14 = vector.broadcast %6 : vector<16x1xf32> to vector<16x32xf32>
    %15 = arith.subf %0, %14 : vector<16x32xf32>
    %cst_8 = arith.constant 9.99999974E-6 : f32
    %16 = vector.broadcast %cst_8 : f32 to vector<16x1xf32>
    %17 = arith.addf %13, %16 : vector<16x1xf32>
    %18 = math.rsqrt %17 : vector<16x1xf32>
    %19 = vector.broadcast %18 : vector<16x1xf32> to vector<16x32xf32>
    %20 = arith.mulf %15, %19 : vector<16x32xf32>
    %21 = vector.broadcast %1 : vector<1x32xf32> to vector<16x32xf32>
    %22 = arith.mulf %20, %21 : vector<16x32xf32>
    %23 = vector.broadcast %2 : vector<1x32xf32> to vector<16x32xf32>
    %24 = arith.addf %22, %23 : vector<16x32xf32>
    %25 = arith.truncf %24 : vector<16x32xf32> to vector<16x32xbf16>
    %c0_9 = arith.constant 0 : index
    %c0_10 = arith.constant 0 : index
    %26 = vector.load %arg4[%c0_9, %c0_10] : memref<32x96xbf16, #tpu.memory_space<vmem>>, vector<32x96xbf16>
    %cst_11 = arith.constant dense<0.000000e+00> : vector<16x96xf32>
    %27 = tpu.matmul %25, %26, %cst_11 {dimension_numbers = #tpu.dot_dimension_numbers<[1], [0], [0], [1], [0, 0, 1, 1], [], []>} : vector<16x32xbf16>, vector<32x96xbf16>, vector<16x96xf32> -> vector<16x96xf32>
    %c0_12 = arith.constant 0 : index
    %c0_13 = arith.constant 0 : index
    %28 = vector.load %arg5[%c0_12, %c0_13] : memref<1x96xf32, #tpu.memory_space<vmem>>, vector<1x96xf32>
    %29 = vector.broadcast %28 : vector<1x96xf32> to vector<16x96xf32>
    %30 = arith.addf %27, %29 : vector<16x96xf32>
    %31 = arith.truncf %30 : vector<16x96xf32> to vector<16x96xbf16>
    %c0_14 = arith.constant 0 : index
    %c0_15 = arith.constant 0 : index
    %32 = vector.load %arg6[%c0_14, %c0_15] : memref<16x96xbf16, #tpu.memory_space<vmem>>, vector<16x96xbf16>
    tpu.vector_store %arg6[%c0_14, %c0_15], %31 {strides = array<i32>} : memref<16x96xbf16, #tpu.memory_space<vmem>>, vector<16x96xbf16>,
    return
  }
  func.func @transform_0(%arg0: i32) -> (i32, i32) {
    %c0_i32 = arith.constant 0 : i32
    %c0_i32_0 = arith.constant 0 : i32
    return %arg0, %c0_i32 : i32, i32
  }
  func.func @transform_1(%arg0: i32) -> (i32, i32) {
    %c0_i32 = arith.constant 0 : i32
    %c0_i32_0 = arith.constant 0 : i32
    %c0_i32_1 = arith.constant 0 : i32
    return %c0_i32, %c0_i32_0 : i32, i32
  }
  func.func @transform_2(%arg0: i32) -> (i32, i32) {
    %c0_i32 = arith.constant 0 : i32
    %c0_i32_0 = arith.constant 0 : i32
    %c0_i32_1 = arith.constant 0 : i32
    return %c0_i32, %c0_i32_0 : i32, i32
  }
  func.func @transform_3(%arg0: i32) -> (i32, i32) {
    %c0_i32 = arith.constant 0 : i32
    %c0_i32_0 = arith.constant 0 : i32
    %c0_i32_1 = arith.constant 0 : i32
    return %c0_i32, %c0_i32_0 : i32, i32
  }
  func.func @transform_4(%arg0: i32) -> (i32, i32) {
    %c0_i32 = arith.constant 0 : i32
    %c0_i32_0 = arith.constant 0 : i32
    %c0_i32_1 = arith.constant 0 : i32
    return %c0_i32, %c0_i32_0 : i32, i32
  }
  func.func @transform_5(%arg0: i32) -> (i32, i32) {
    %c0_i32 = arith.constant 0 : i32
    %c0_i32_0 = arith.constant 0 : i32
    return %arg0, %c0_i32 : i32, i32
  }
}

module attributes {stable_mosaic.version = 11 : i64} {
  func.func @_self_attn_kernel(%arg0: i32, %arg1: i32, %arg2: memref<1x8x96xbf16, #tpu.memory_space<vmem>>, %arg3: memref<1x1x8xi32, #tpu.memory_space<vmem>>, %arg4: memref<32x32xbf16, #tpu.memory_space<vmem>>, %arg5: memref<1x32xf32, #tpu.memory_space<vmem>>, %arg6: memref<1x8x32xf32, #tpu.memory_space<vmem>>, %arg7: memref<1x32xf32, #tpu.memory_space<vmem>>, %arg8: memref<1x32xf32, #tpu.memory_space<vmem>>, %arg9: memref<32x32xbf16, #tpu.memory_space<vmem>>, %arg10: memref<1x32xf32, #tpu.memory_space<vmem>>, %arg11: memref<1x8x32xf32, #tpu.memory_space<vmem>>, %arg12: memref<1x8x32xbf16, #tpu.memory_space<vmem>>) attributes {dimension_semantics = [#tpu.dimension_semantics<parallel>, #tpu.dimension_semantics<parallel>], iteration_bounds = array<i64: 2, 1>, scalar_prefetch = 0 : i64, scratch_operands = 0 : i64, tpu.core_type = #tpu.core_type<tc>, window_params = [{transform_indices = @transform_0, window_bounds = array<i64: 1, 8, 96>}, {transform_indices = @transform_1, window_bounds = array<i64: 1, 1, 8>}, {pipeline_mode = #tpu.pipeline_mode<synchronous>, transform_indices = @transform_2, window_bounds = array<i64: 32, 32>}, {pipeline_mode = #tpu.pipeline_mode<synchronous>, transform_indices = @transform_3, window_bounds = array<i64: 1, 32>}, {transform_indices = @transform_4, window_bounds = array<i64: 1, 8, 32>}, {pipeline_mode = #tpu.pipeline_mode<synchronous>, transform_indices = @transform_5, window_bounds = array<i64: 1, 32>}, {pipeline_mode = #tpu.pipeline_mode<synchronous>, transform_indices = @transform_6, window_bounds = array<i64: 1, 32>}, {pipeline_mode = #tpu.pipeline_mode<synchronous>, transform_indices = @transform_7, window_bounds = array<i64: 32, 32>}, {pipeline_mode = #tpu.pipeline_mode<synchronous>, transform_indices = @transform_8, window_bounds = array<i64: 1, 32>}, {transform_indices = @transform_9, window_bounds = array<i64: 1, 8, 32>}, {transform_indices = @transform_10, window_bounds = array<i64: 1, 8, 32>}]} {
    %c8_i32 = arith.constant 8 : i32
    %0 = arith.muli %arg1, %c8_i32 : i32
    %1 = tpu.assume_multiple %0, 8 : i32
    %c0 = arith.constant 0 : index
    %2 = arith.index_cast %1 : i32 to index
    %c0_0 = arith.constant 0 : index
    %3 = vector.load %arg2[%c0, %2, %c0_0] : memref<1x8x96xbf16, #tpu.memory_space<vmem>>, vector<1x8x32xbf16>
    %4 = vector.shape_cast %3 : vector<1x8x32xbf16> to vector<8x32xbf16>
    %c0_1 = arith.constant 0 : index
    %c0_2 = arith.constant 0 : index
    %c32 = arith.constant 32 : index
    %5 = vector.load %arg2[%c0_1, %c0_2, %c32] : memref<1x8x96xbf16, #tpu.memory_space<vmem>>, vector<1x8x32xbf16>
    %6 = vector.shape_cast %5 : vector<1x8x32xbf16> to vector<8x32xbf16>
    %c0_3 = arith.constant 0 : index
    %c0_4 = arith.constant 0 : index
    %c64 = arith.constant 64 : index
    %7 = vector.load %arg2[%c0_3, %c0_4, %c64] : memref<1x8x96xbf16, #tpu.memory_space<vmem>>, vector<1x8x32xbf16>
    %8 = vector.shape_cast %7 : vector<1x8x32xbf16> to vector<8x32xbf16>
    %c0_5 = arith.constant 0 : index
    %c0_6 = arith.constant 0 : index
    %c0_7 = arith.constant 0 : index
    %9 = vector.load %arg3[%c0_5, %c0_6, %c0_7] : memref<1x1x8xi32, #tpu.memory_space<vmem>>, vector<1x1x8xi32>
    %10 = vector.shape_cast %9 : vector<1x1x8xi32> to vector<1x8xi32>
    %c0_i32 = arith.constant 0 : i32
    %11 = vector.broadcast %c0_i32 : i32 to vector<1x8xi32>
    %12 = arith.cmpi sgt, %10, %11 : vector<1x8xi32>
    %13 = tpu.iota {dimensions = array<i32: 0>} : vector<8x8xi32>
    %14 = vector.broadcast %1 : i32 to vector<8x8xi32>
    %15 = arith.addi %14, %13 : vector<8x8xi32>
    %16 = tpu.iota {dimensions = array<i32: 1>} : vector<8x8xi32>
    %17 = arith.cmpi sge, %15, %16 : vector<8x8xi32>
    %18 = vector.broadcast %12 : vector<1x8xi1> to vector<8x8xi1>
    %19 = arith.andi %17, %18 : vector<8x8xi1>
    %cst = arith.constant 0.000000e+00 : f32
    %cst_8 = arith.constant -1.000000e+30 : f32
    %20 = vector.broadcast %cst : f32 to vector<8x8xf32>
    %21 = vector.broadcast %cst_8 : f32 to vector<8x8xf32>
    %22 = arith.select %19, %20, %21 : vector<8x8xi1>, vector<8x8xf32>
    %c0_9 = arith.constant 0 : index
    %c0_10 = arith.constant 0 : index
    %23 = vector.load %arg4[%c0_9, %c0_10] : memref<32x32xbf16, #tpu.memory_space<vmem>>, vector<32x32xbf16>
    %c0_11 = arith.constant 0 : index
    %c0_12 = arith.constant 0 : index
    %24 = vector.load %arg5[%c0_11, %c0_12] : memref<1x32xf32, #tpu.memory_space<vmem>>, vector<1x32xf32>
    %c0_13 = arith.constant 0 : index
    %c0_14 = arith.constant 0 : index
    %c0_15 = arith.constant 0 : index
    %25 = vector.load %arg6[%c0_13, %c0_14, %c0_15] : memref<1x8x32xf32, #tpu.memory_space<vmem>>, vector<1x8x32xf32>
    %26 = vector.shape_cast %25 : vector<1x8x32xf32> to vector<8x32xf32>
    %27 = vector.extract_strided_slice %4 {offsets = [0, 0], sizes = [8, 8], strides = [1, 1]} : vector<8x32xbf16> to vector<8x8xbf16>
    %28 = vector.extract_strided_slice %6 {offsets = [0, 0], sizes = [8, 8], strides = [1, 1]} : vector<8x32xbf16> to vector<8x8xbf16>
    "tpu.trace_start"() <{level = 10 : i32, message = "qd,kd->qk"}> : () -> ()
    %cst_16 = arith.constant dense<0.000000e+00> : vector<8x8xf32>
    %29 = tpu.matmul %27, %28, %cst_16 {dimension_numbers = #tpu.dot_dimension_numbers<[1], [1], [0], [0], [0, 0, 1, 0], [], []>} : vector<8x8xbf16>, vector<8x8xbf16>, vector<8x8xf32> -> vector<8x8xf32>
    "tpu.trace_stop"() : () -> ()
    %30 = arith.addf %29, %22 : vector<8x8xf32>
    %cst_17 = arith.constant dense<0xFF800000> : vector<8xf32>
    %31 = vector.multi_reduction <maximumf>, %30, %cst_17 [1] : vector<8x8xf32> to vector<8xf32>
    %32 = vector.shape_cast %31 : vector<8xf32> to vector<8x1xf32>
    %33 = vector.broadcast %32 : vector<8x1xf32> to vector<8x8xf32>
    %34 = arith.subf %30, %33 : vector<8x8xf32>
    %35 = math.exp %34 : vector<8x8xf32>
    %cst_18 = arith.constant dense<0.000000e+00> : vector<8xf32>
    %36 = vector.multi_reduction <add>, %35, %cst_18 [1] : vector<8x8xf32> to vector<8xf32>
    %37 = vector.shape_cast %36 : vector<8xf32> to vector<8x1xf32>
    %38 = tpu.reciprocal %37 {approx = true} : vector<8x1xf32> -> vector<8x1xf32>
    %39 = vector.broadcast %38 : vector<8x1xf32> to vector<8x8xf32>
    %40 = arith.mulf %35, %39 : vector<8x8xf32>
    %41 = arith.truncf %40 : vector<8x8xf32> to vector<8x8xbf16>
    %42 = vector.extract_strided_slice %8 {offsets = [0, 0], sizes = [8, 8], strides = [1, 1]} : vector<8x32xbf16> to vector<8x8xbf16>
    %cst_19 = arith.constant dense<0.000000e+00> : vector<8x8xf32>
    %43 = tpu.matmul %41, %42, %cst_19 {dimension_numbers = #tpu.dot_dimension_numbers<[1], [0], [0], [1], [0, 0, 1, 1], [], []>} : vector<8x8xbf16>, vector<8x8xbf16>, vector<8x8xf32> -> vector<8x8xf32>
    %44 = vector.extract_strided_slice %4 {offsets = [0, 8], sizes = [8, 8], strides = [1, 1]} : vector<8x32xbf16> to vector<8x8xbf16>
    %45 = vector.extract_strided_slice %6 {offsets = [0, 8], sizes = [8, 8], strides = [1, 1]} : vector<8x32xbf16> to vector<8x8xbf16>
    "tpu.trace_start"() <{level = 10 : i32, message = "qd,kd->qk"}> : () -> ()
    %cst_20 = arith.constant dense<0.000000e+00> : vector<8x8xf32>
    %46 = tpu.matmul %44, %45, %cst_20 {dimension_numbers = #tpu.dot_dimension_numbers<[1], [1], [0], [0], [0, 0, 1, 0], [], []>} : vector<8x8xbf16>, vector<8x8xbf16>, vector<8x8xf32> -> vector<8x8xf32>
    "tpu.trace_stop"() : () -> ()
    %47 = arith.addf %46, %22 : vector<8x8xf32>
    %cst_21 = arith.constant dense<0xFF800000> : vector<8xf32>
    %48 = vector.multi_reduction <maximumf>, %47, %cst_21 [1] : vector<8x8xf32> to vector<8xf32>
    %49 = vector.shape_cast %48 : vector<8xf32> to vector<8x1xf32>
    %50 = vector.broadcast %49 : vector<8x1xf32> to vector<8x8xf32>
    %51 = arith.subf %47, %50 : vector<8x8xf32>
    %52 = math.exp %51 : vector<8x8xf32>
    %cst_22 = arith.constant dense<0.000000e+00> : vector<8xf32>
    %53 = vector.multi_reduction <add>, %52, %cst_22 [1] : vector<8x8xf32> to vector<8xf32>
    %54 = vector.shape_cast %53 : vector<8xf32> to vector<8x1xf32>
    %55 = tpu.reciprocal %54 {approx = true} : vector<8x1xf32> -> vector<8x1xf32>
    %56 = vector.broadcast %55 : vector<8x1xf32> to vector<8x8xf32>
    %57 = arith.mulf %52, %56 : vector<8x8xf32>
    %58 = arith.truncf %57 : vector<8x8xf32> to vector<8x8xbf16>
    %59 = vector.extract_strided_slice %8 {offsets = [0, 8], sizes = [8, 8], strides = [1, 1]} : vector<8x32xbf16> to vector<8x8xbf16>
    %cst_23 = arith.constant dense<0.000000e+00> : vector<8x8xf32>
    %60 = tpu.matmul %58, %59, %cst_23 {dimension_numbers = #tpu.dot_dimension_numbers<[1], [0], [0], [1], [0, 0, 1, 1], [], []>} : vector<8x8xbf16>, vector<8x8xbf16>, vector<8x8xf32> -> vector<8x8xf32>
    %61 = vector.extract_strided_slice %4 {offsets = [0, 16], sizes = [8, 8], strides = [1, 1]} : vector<8x32xbf16> to vector<8x8xbf16>
    %62 = vector.extract_strided_slice %6 {offsets = [0, 16], sizes = [8, 8], strides = [1, 1]} : vector<8x32xbf16> to vector<8x8xbf16>
    "tpu.trace_start"() <{level = 10 : i32, message = "qd,kd->qk"}> : () -> ()
    %cst_24 = arith.constant dense<0.000000e+00> : vector<8x8xf32>
    %63 = tpu.matmul %61, %62, %cst_24 {dimension_numbers = #tpu.dot_dimension_numbers<[1], [1], [0], [0], [0, 0, 1, 0], [], []>} : vector<8x8xbf16>, vector<8x8xbf16>, vector<8x8xf32> -> vector<8x8xf32>
    "tpu.trace_stop"() : () -> ()
    %64 = arith.addf %63, %22 : vector<8x8xf32>
    %cst_25 = arith.constant dense<0xFF800000> : vector<8xf32>
    %65 = vector.multi_reduction <maximumf>, %64, %cst_25 [1] : vector<8x8xf32> to vector<8xf32>
    %66 = vector.shape_cast %65 : vector<8xf32> to vector<8x1xf32>
    %67 = vector.broadcast %66 : vector<8x1xf32> to vector<8x8xf32>
    %68 = arith.subf %64, %67 : vector<8x8xf32>
    %69 = math.exp %68 : vector<8x8xf32>
    %cst_26 = arith.constant dense<0.000000e+00> : vector<8xf32>
    %70 = vector.multi_reduction <add>, %69, %cst_26 [1] : vector<8x8xf32> to vector<8xf32>
    %71 = vector.shape_cast %70 : vector<8xf32> to vector<8x1xf32>
    %72 = tpu.reciprocal %71 {approx = true} : vector<8x1xf32> -> vector<8x1xf32>
    %73 = vector.broadcast %72 : vector<8x1xf32> to vector<8x8xf32>
    %74 = arith.mulf %69, %73 : vector<8x8xf32>
    %75 = arith.truncf %74 : vector<8x8xf32> to vector<8x8xbf16>
    %76 = vector.extract_strided_slice %8 {offsets = [0, 16], sizes = [8, 8], strides = [1, 1]} : vector<8x32xbf16> to vector<8x8xbf16>
    %cst_27 = arith.constant dense<0.000000e+00> : vector<8x8xf32>
    %77 = tpu.matmul %75, %76, %cst_27 {dimension_numbers = #tpu.dot_dimension_numbers<[1], [0], [0], [1], [0, 0, 1, 1], [], []>} : vector<8x8xbf16>, vector<8x8xbf16>, vector<8x8xf32> -> vector<8x8xf32>
    %78 = vector.extract_strided_slice %4 {offsets = [0, 24], sizes = [8, 8], strides = [1, 1]} : vector<8x32xbf16> to vector<8x8xbf16>
    %79 = vector.extract_strided_slice %6 {offsets = [0, 24], sizes = [8, 8], strides = [1, 1]} : vector<8x32xbf16> to vector<8x8xbf16>
    "tpu.trace_start"() <{level = 10 : i32, message = "qd,kd->qk"}> : () -> ()
    %cst_28 = arith.constant dense<0.000000e+00> : vector<8x8xf32>
    %80 = tpu.matmul %78, %79, %cst_28 {dimension_numbers = #tpu.dot_dimension_numbers<[1], [1], [0], [0], [0, 0, 1, 0], [], []>} : vector<8x8xbf16>, vector<8x8xbf16>, vector<8x8xf32> -> vector<8x8xf32>
    "tpu.trace_stop"() : () -> ()
    %81 = arith.addf %80, %22 : vector<8x8xf32>
    %cst_29 = arith.constant dense<0xFF800000> : vector<8xf32>
    %82 = vector.multi_reduction <maximumf>, %81, %cst_29 [1] : vector<8x8xf32> to vector<8xf32>
    %83 = vector.shape_cast %82 : vector<8xf32> to vector<8x1xf32>
    %84 = vector.broadcast %83 : vector<8x1xf32> to vector<8x8xf32>
    %85 = arith.subf %81, %84 : vector<8x8xf32>
    %86 = math.exp %85 : vector<8x8xf32>
    %cst_30 = arith.constant dense<0.000000e+00> : vector<8xf32>
    %87 = vector.multi_reduction <add>, %86, %cst_30 [1] : vector<8x8xf32> to vector<8xf32>
    %88 = vector.shape_cast %87 : vector<8xf32> to vector<8x1xf32>
    %89 = tpu.reciprocal %88 {approx = true} : vector<8x1xf32> -> vector<8x1xf32>
    %90 = vector.broadcast %89 : vector<8x1xf32> to vector<8x8xf32>
    %91 = arith.mulf %86, %90 : vector<8x8xf32>
    %92 = arith.truncf %91 : vector<8x8xf32> to vector<8x8xbf16>
    %93 = vector.extract_strided_slice %8 {offsets = [0, 24], sizes = [8, 8], strides = [1, 1]} : vector<8x32xbf16> to vector<8x8xbf16>
    %cst_31 = arith.constant dense<0.000000e+00> : vector<8x8xf32>
    %94 = tpu.matmul %92, %93, %cst_31 {dimension_numbers = #tpu.dot_dimension_numbers<[1], [0], [0], [1], [0, 0, 1, 1], [], []>} : vector<8x8xbf16>, vector<8x8xbf16>, vector<8x8xf32> -> vector<8x8xf32>
    %95 = tpu.concatenate %43, %60, %77, %94 in 1 : vector<8x8xf32>, vector<8x8xf32>, vector<8x8xf32>, vector<8x8xf32> -> vector<8x32xf32>
    %96 = arith.truncf %95 : vector<8x32xf32> to vector<8x32xbf16>
    %cst_32 = arith.constant dense<0.000000e+00> : vector<8x32xf32>
    %97 = tpu.matmul %96, %23, %cst_32 {dimension_numbers = #tpu.dot_dimension_numbers<[1], [0], [0], [1], [0, 0, 1, 1], [], []>} : vector<8x32xbf16>, vector<32x32xbf16>, vector<8x32xf32> -> vector<8x32xf32>
    %98 = vector.broadcast %24 : vector<1x32xf32> to vector<8x32xf32>
    %99 = arith.addf %97, %98 : vector<8x32xf32>
    %100 = arith.addf %99, %26 : vector<8x32xf32>
    %c0_33 = arith.constant 0 : index
    %c0_34 = arith.constant 0 : index
    %c0_35 = arith.constant 0 : index
    %101 = vector.load %arg11[%c0_33, %c0_34, %c0_35] : memref<1x8x32xf32, #tpu.memory_space<vmem>>, vector<1x8x32xf32>
    %102 = vector.shape_cast %101 : vector<1x8x32xf32> to vector<8x32xf32>
    %103 = vector.shape_cast %100 : vector<8x32xf32> to vector<1x8x32xf32>
    tpu.vector_store %arg11[%c0_33, %c0_34, %c0_35], %103 {strides = array<i32>} : memref<1x8x32xf32, #tpu.memory_space<vmem>>, vector<1x8x32xf32>,
    %c0_36 = arith.constant 0 : index
    %c0_37 = arith.constant 0 : index
    %104 = vector.load %arg7[%c0_36, %c0_37] : memref<1x32xf32, #tpu.memory_space<vmem>>, vector<1x32xf32>
    %c0_38 = arith.constant 0 : index
    %c0_39 = arith.constant 0 : index
    %105 = vector.load %arg8[%c0_38, %c0_39] : memref<1x32xf32, #tpu.memory_space<vmem>>, vector<1x32xf32>
    %cst_40 = arith.constant dense<0.000000e+00> : vector<8xf32>
    %106 = vector.multi_reduction <add>, %100, %cst_40 [1] : vector<8x32xf32> to vector<8xf32>
    %107 = vector.shape_cast %106 : vector<8xf32> to vector<8x1xf32>
    %cst_41 = arith.constant 3.200000e+01 : f32
    %108 = vector.broadcast %cst_41 : f32 to vector<8x1xf32>
    %109 = arith.divf %107, %108 : vector<8x1xf32>
    %110 = vector.broadcast %109 : vector<8x1xf32> to vector<8x32xf32>
    %111 = arith.subf %100, %110 : vector<8x32xf32>
    %112 = arith.mulf %111, %111 : vector<8x32xf32>
    %cst_42 = arith.constant dense<0.000000e+00> : vector<8xf32>
    %113 = vector.multi_reduction <add>, %112, %cst_42 [1] : vector<8x32xf32> to vector<8xf32>
    %114 = vector.shape_cast %113 : vector<8xf32> to vector<8x1xf32>
    %cst_43 = arith.constant 3.200000e+01 : f32
    %115 = vector.broadcast %cst_43 : f32 to vector<8x1xf32>
    %116 = arith.divf %114, %115 : vector<8x1xf32>
    %117 = vector.broadcast %109 : vector<8x1xf32> to vector<8x32xf32>
    %118 = arith.subf %100, %117 : vector<8x32xf32>
    %cst_44 = arith.constant 9.99999974E-6 : f32
    %119 = vector.broadcast %cst_44 : f32 to vector<8x1xf32>
    %120 = arith.addf %116, %119 : vector<8x1xf32>
    %121 = math.rsqrt %120 : vector<8x1xf32>
    %122 = vector.broadcast %121 : vector<8x1xf32> to vector<8x32xf32>
    %123 = arith.mulf %118, %122 : vector<8x32xf32>
    %124 = vector.broadcast %104 : vector<1x32xf32> to vector<8x32xf32>
    %125 = arith.mulf %123, %124 : vector<8x32xf32>
    %126 = vector.broadcast %105 : vector<1x32xf32> to vector<8x32xf32>
    %127 = arith.addf %125, %126 : vector<8x32xf32>
    %128 = arith.truncf %127 : vector<8x32xf32> to vector<8x32xbf16>
    %c0_45 = arith.constant 0 : index
    %c0_46 = arith.constant 0 : index
    %129 = vector.load %arg9[%c0_45, %c0_46] : memref<32x32xbf16, #tpu.memory_space<vmem>>, vector<32x32xbf16>
    %cst_47 = arith.constant dense<0.000000e+00> : vector<8x32xf32>
    %130 = tpu.matmul %128, %129, %cst_47 {dimension_numbers = #tpu.dot_dimension_numbers<[1], [0], [0], [1], [0, 0, 1, 1], [], []>} : vector<8x32xbf16>, vector<32x32xbf16>, vector<8x32xf32> -> vector<8x32xf32>
    %c0_48 = arith.constant 0 : index
    %c0_49 = arith.constant 0 : index
    %131 = vector.load %arg10[%c0_48, %c0_49] : memref<1x32xf32, #tpu.memory_space<vmem>>, vector<1x32xf32>
    %132 = vector.broadcast %131 : vector<1x32xf32> to vector<8x32xf32>
    %133 = arith.addf %130, %132 : vector<8x32xf32>
    %134 = arith.truncf %133 : vector<8x32xf32> to vector<8x32xbf16>
    %c0_50 = arith.constant 0 : index
    %c0_51 = arith.constant 0 : index
    %c0_52 = arith.constant 0 : index
    %135 = vector.load %arg12[%c0_50, %c0_51, %c0_52] : memref<1x8x32xbf16, #tpu.memory_space<vmem>>, vector<1x8x32xbf16>
    %136 = vector.shape_cast %135 : vector<1x8x32xbf16> to vector<8x32xbf16>
    %137 = vector.shape_cast %134 : vector<8x32xbf16> to vector<1x8x32xbf16>
    tpu.vector_store %arg12[%c0_50, %c0_51, %c0_52], %137 {strides = array<i32>} : memref<1x8x32xbf16, #tpu.memory_space<vmem>>, vector<1x8x32xbf16>,
    return
  }
  func.func @transform_0(%arg0: i32, %arg1: i32) -> (i32, i32, i32) {
    %c0_i32 = arith.constant 0 : i32
    %c0_i32_0 = arith.constant 0 : i32
    %c0_i32_1 = arith.constant 0 : i32
    return %arg0, %c0_i32, %c0_i32_0 : i32, i32, i32
  }
  func.func @transform_1(%arg0: i32, %arg1: i32) -> (i32, i32, i32) {
    %c0_i32 = arith.constant 0 : i32
    %c0_i32_0 = arith.constant 0 : i32
    %c0_i32_1 = arith.constant 0 : i32
    return %arg0, %c0_i32, %c0_i32_0 : i32, i32, i32
  }
  func.func @transform_2(%arg0: i32, %arg1: i32) -> (i32, i32) {
    %c0_i32 = arith.constant 0 : i32
    %c0_i32_0 = arith.constant 0 : i32
    %c0_i32_1 = arith.constant 0 : i32
    return %c0_i32, %c0_i32_0 : i32, i32
  }
  func.func @transform_3(%arg0: i32, %arg1: i32) -> (i32, i32) {
    %c0_i32 = arith.constant 0 : i32
    %c0_i32_0 = arith.constant 0 : i32
    %c0_i32_1 = arith.constant 0 : i32
    return %c0_i32, %c0_i32_0 : i32, i32
  }
  func.func @transform_4(%arg0: i32, %arg1: i32) -> (i32, i32, i32) {
    %c0_i32 = arith.constant 0 : i32
    %c0_i32_0 = arith.constant 0 : i32
    return %arg0, %arg1, %c0_i32 : i32, i32, i32
  }
  func.func @transform_5(%arg0: i32, %arg1: i32) -> (i32, i32) {
    %c0_i32 = arith.constant 0 : i32
    %c0_i32_0 = arith.constant 0 : i32
    %c0_i32_1 = arith.constant 0 : i32
    return %c0_i32, %c0_i32_0 : i32, i32
  }
  func.func @transform_6(%arg0: i32, %arg1: i32) -> (i32, i32) {
    %c0_i32 = arith.constant 0 : i32
    %c0_i32_0 = arith.constant 0 : i32
    %c0_i32_1 = arith.constant 0 : i32
    return %c0_i32, %c0_i32_0 : i32, i32
  }
  func.func @transform_7(%arg0: i32, %arg1: i32) -> (i32, i32) {
    %c0_i32 = arith.constant 0 : i32
    %c0_i32_0 = arith.constant 0 : i32
    %c0_i32_1 = arith.constant 0 : i32
    return %c0_i32, %c0_i32_0 : i32, i32
  }
  func.func @transform_8(%arg0: i32, %arg1: i32) -> (i32, i32) {
    %c0_i32 = arith.constant 0 : i32
    %c0_i32_0 = arith.constant 0 : i32
    %c0_i32_1 = arith.constant 0 : i32
    return %c0_i32, %c0_i32_0 : i32, i32
  }
  func.func @transform_9(%arg0: i32, %arg1: i32) -> (i32, i32, i32) {
    %c0_i32 = arith.constant 0 : i32
    %c0_i32_0 = arith.constant 0 : i32
    return %arg0, %arg1, %c0_i32 : i32, i32, i32
  }
  func.func @transform_10(%arg0: i32, %arg1: i32) -> (i32, i32, i32) {
    %c0_i32 = arith.constant 0 : i32
    %c0_i32_0 = arith.constant 0 : i32
    return %arg0, %arg1, %c0_i32 : i32, i32, i32
  }
}

module attributes {stable_mosaic.version = 11 : i64} {
  func.func @_linear_kernel(%arg0: i32, %arg1: memref<16x32xbf16, #tpu.memory_space<vmem>>, %arg2: memref<32x64xbf16, #tpu.memory_space<vmem>>, %arg3: memref<1x64xf32, #tpu.memory_space<vmem>>, %arg4: memref<16x64xbf16, #tpu.memory_space<vmem>>) attributes {dimension_semantics = [#tpu.dimension_semantics<parallel>], iteration_bounds = array<i64: 1>, scalar_prefetch = 0 : i64, scratch_operands = 0 : i64, tpu.core_type = #tpu.core_type<tc>, window_params = [{transform_indices = @transform_0, window_bounds = array<i64: 16, 32>}, {pipeline_mode = #tpu.pipeline_mode<synchronous>, transform_indices = @transform_1, window_bounds = array<i64: 32, 64>}, {pipeline_mode = #tpu.pipeline_mode<synchronous>, transform_indices = @transform_2, window_bounds = array<i64: 1, 64>}, {transform_indices = @transform_3, window_bounds = array<i64: 16, 64>}]} {
    %c0 = arith.constant 0 : index
    %c0_0 = arith.constant 0 : index
    %0 = vector.load %arg1[%c0, %c0_0] : memref<16x32xbf16, #tpu.memory_space<vmem>>, vector<16x32xbf16>
    %c0_1 = arith.constant 0 : index
    %c0_2 = arith.constant 0 : index
    %1 = vector.load %arg2[%c0_1, %c0_2] : memref<32x64xbf16, #tpu.memory_space<vmem>>, vector<32x64xbf16>
    %cst = arith.constant dense<0.000000e+00> : vector<16x64xf32>
    %2 = tpu.matmul %0, %1, %cst {dimension_numbers = #tpu.dot_dimension_numbers<[1], [0], [0], [1], [0, 0, 1, 1], [], []>} : vector<16x32xbf16>, vector<32x64xbf16>, vector<16x64xf32> -> vector<16x64xf32>
    %c0_3 = arith.constant 0 : index
    %c0_4 = arith.constant 0 : index
    %3 = vector.load %arg3[%c0_3, %c0_4] : memref<1x64xf32, #tpu.memory_space<vmem>>, vector<1x64xf32>
    %4 = vector.broadcast %3 : vector<1x64xf32> to vector<16x64xf32>
    %5 = arith.addf %2, %4 : vector<16x64xf32>
    %6 = arith.truncf %5 : vector<16x64xf32> to vector<16x64xbf16>
    %c0_5 = arith.constant 0 : index
    %c0_6 = arith.constant 0 : index
    %7 = vector.load %arg4[%c0_5, %c0_6] : memref<16x64xbf16, #tpu.memory_space<vmem>>, vector<16x64xbf16>
    tpu.vector_store %arg4[%c0_5, %c0_6], %6 {strides = array<i32>} : memref<16x64xbf16, #tpu.memory_space<vmem>>, vector<16x64xbf16>,
    return
  }
  func.func @transform_0(%arg0: i32) -> (i32, i32) {
    %c0_i32 = arith.constant 0 : i32
    %c0_i32_0 = arith.constant 0 : i32
    return %arg0, %c0_i32 : i32, i32
  }
  func.func @transform_1(%arg0: i32) -> (i32, i32) {
    %c0_i32 = arith.constant 0 : i32
    %c0_i32_0 = arith.constant 0 : i32
    %c0_i32_1 = arith.constant 0 : i32
    return %c0_i32, %c0_i32_0 : i32, i32
  }
  func.func @transform_2(%arg0: i32) -> (i32, i32) {
    %c0_i32 = arith.constant 0 : i32
    %c0_i32_0 = arith.constant 0 : i32
    %c0_i32_1 = arith.constant 0 : i32
    return %c0_i32, %c0_i32_0 : i32, i32
  }
  func.func @transform_3(%arg0: i32) -> (i32, i32) {
    %c0_i32 = arith.constant 0 : i32
    %c0_i32_0 = arith.constant 0 : i32
    return %arg0, %c0_i32 : i32, i32
  }
}

module attributes {stable_mosaic.version = 11 : i64} {
  func.func @_cross_attn_kernel(%arg0: i32, %arg1: i32, %arg2: memref<1x8x32xbf16, #tpu.memory_space<vmem>>, %arg3: memref<1x8x64xbf16, #tpu.memory_space<vmem>>, %arg4: memref<1x1x8xi32, #tpu.memory_space<vmem>>, %arg5: memref<32x32xbf16, #tpu.memory_space<vmem>>, %arg6: memref<1x32xf32, #tpu.memory_space<vmem>>, %arg7: memref<1x8x32xf32, #tpu.memory_space<vmem>>, %arg8: memref<1x8x32xf32, #tpu.memory_space<vmem>>) attributes {dimension_semantics = [#tpu.dimension_semantics<parallel>, #tpu.dimension_semantics<parallel>], iteration_bounds = array<i64: 2, 1>, scalar_prefetch = 0 : i64, scratch_operands = 0 : i64, tpu.core_type = #tpu.core_type<tc>, window_params = [{transform_indices = @transform_0, window_bounds = array<i64: 1, 8, 32>}, {transform_indices = @transform_1, window_bounds = array<i64: 1, 8, 64>}, {transform_indices = @transform_2, window_bounds = array<i64: 1, 1, 8>}, {pipeline_mode = #tpu.pipeline_mode<synchronous>, transform_indices = @transform_3, window_bounds = array<i64: 32, 32>}, {pipeline_mode = #tpu.pipeline_mode<synchronous>, transform_indices = @transform_4, window_bounds = array<i64: 1, 32>}, {transform_indices = @transform_5, window_bounds = array<i64: 1, 8, 32>}, {transform_indices = @transform_6, window_bounds = array<i64: 1, 8, 32>}]} {
    %c0 = arith.constant 0 : index
    %c0_0 = arith.constant 0 : index
    %c0_1 = arith.constant 0 : index
    %0 = vector.load %arg2[%c0, %c0_0, %c0_1] : memref<1x8x32xbf16, #tpu.memory_space<vmem>>, vector<1x8x32xbf16>
    %1 = vector.shape_cast %0 : vector<1x8x32xbf16> to vector<8x32xbf16>
    %c0_2 = arith.constant 0 : index
    %c0_3 = arith.constant 0 : index
    %c0_4 = arith.constant 0 : index
    %2 = vector.load %arg3[%c0_2, %c0_3, %c0_4] : memref<1x8x64xbf16, #tpu.memory_space<vmem>>, vector<1x8x32xbf16>
    %3 = vector.shape_cast %2 : vector<1x8x32xbf16> to vector<8x32xbf16>
    %c0_5 = arith.constant 0 : index
    %c0_6 = arith.constant 0 : index
    %c32 = arith.constant 32 : index
    %4 = vector.load %arg3[%c0_5, %c0_6, %c32] : memref<1x8x64xbf16, #tpu.memory_space<vmem>>, vector<1x8x32xbf16>
    %5 = vector.shape_cast %4 : vector<1x8x32xbf16> to vector<8x32xbf16>
    %c0_7 = arith.constant 0 : index
    %c0_8 = arith.constant 0 : index
    %c0_9 = arith.constant 0 : index
    %6 = vector.load %arg4[%c0_7, %c0_8, %c0_9] : memref<1x1x8xi32, #tpu.memory_space<vmem>>, vector<1x1x8xi32>
    %7 = vector.shape_cast %6 : vector<1x1x8xi32> to vector<1x8xi32>
    %c0_i32 = arith.constant 0 : i32
    %8 = vector.broadcast %c0_i32 : i32 to vector<1x8xi32>
    %9 = arith.cmpi sgt, %7, %8 : vector<1x8xi32>
    %cst = arith.constant 0.000000e+00 : f32
    %cst_10 = arith.constant -1.000000e+30 : f32
    %10 = vector.broadcast %cst : f32 to vector<1x8xf32>
    %11 = vector.broadcast %cst_10 : f32 to vector<1x8xf32>
    %12 = arith.select %9, %10, %11 : vector<1x8xi1>, vector<1x8xf32>
    %c0_11 = arith.constant 0 : index
    %c0_12 = arith.constant 0 : index
    %13 = vector.load %arg5[%c0_11, %c0_12] : memref<32x32xbf16, #tpu.memory_space<vmem>>, vector<32x32xbf16>
    %c0_13 = arith.constant 0 : index
    %c0_14 = arith.constant 0 : index
    %14 = vector.load %arg6[%c0_13, %c0_14] : memref<1x32xf32, #tpu.memory_space<vmem>>, vector<1x32xf32>
    %c0_15 = arith.constant 0 : index
    %c0_16 = arith.constant 0 : index
    %c0_17 = arith.constant 0 : index
    %15 = vector.load %arg7[%c0_15, %c0_16, %c0_17] : memref<1x8x32xf32, #tpu.memory_space<vmem>>, vector<1x8x32xf32>
    %16 = vector.shape_cast %15 : vector<1x8x32xf32> to vector<8x32xf32>
    %17 = vector.extract_strided_slice %1 {offsets = [0, 0], sizes = [8, 8], strides = [1, 1]} : vector<8x32xbf16> to vector<8x8xbf16>
    %18 = vector.extract_strided_slice %3 {offsets = [0, 0], sizes = [8, 8], strides = [1, 1]} : vector<8x32xbf16> to vector<8x8xbf16>
    "tpu.trace_start"() <{level = 10 : i32, message = "qd,kd->qk"}> : () -> ()
    %cst_18 = arith.constant dense<0.000000e+00> : vector<8x8xf32>
    %19 = tpu.matmul %17, %18, %cst_18 {dimension_numbers = #tpu.dot_dimension_numbers<[1], [1], [0], [0], [0, 0, 1, 0], [], []>} : vector<8x8xbf16>, vector<8x8xbf16>, vector<8x8xf32> -> vector<8x8xf32>
    "tpu.trace_stop"() : () -> ()
    %20 = vector.broadcast %12 : vector<1x8xf32> to vector<8x8xf32>
    %21 = arith.addf %19, %20 : vector<8x8xf32>
    %cst_19 = arith.constant dense<0xFF800000> : vector<8xf32>
    %22 = vector.multi_reduction <maximumf>, %21, %cst_19 [1] : vector<8x8xf32> to vector<8xf32>
    %23 = vector.shape_cast %22 : vector<8xf32> to vector<8x1xf32>
    %24 = vector.broadcast %23 : vector<8x1xf32> to vector<8x8xf32>
    %25 = arith.subf %21, %24 : vector<8x8xf32>
    %26 = math.exp %25 : vector<8x8xf32>
    %cst_20 = arith.constant dense<0.000000e+00> : vector<8xf32>
    %27 = vector.multi_reduction <add>, %26, %cst_20 [1] : vector<8x8xf32> to vector<8xf32>
    %28 = vector.shape_cast %27 : vector<8xf32> to vector<8x1xf32>
    %29 = tpu.reciprocal %28 {approx = true} : vector<8x1xf32> -> vector<8x1xf32>
    %30 = vector.broadcast %29 : vector<8x1xf32> to vector<8x8xf32>
    %31 = arith.mulf %26, %30 : vector<8x8xf32>
    %32 = arith.truncf %31 : vector<8x8xf32> to vector<8x8xbf16>
    %33 = vector.extract_strided_slice %5 {offsets = [0, 0], sizes = [8, 8], strides = [1, 1]} : vector<8x32xbf16> to vector<8x8xbf16>
    %cst_21 = arith.constant dense<0.000000e+00> : vector<8x8xf32>
    %34 = tpu.matmul %32, %33, %cst_21 {dimension_numbers = #tpu.dot_dimension_numbers<[1], [0], [0], [1], [0, 0, 1, 1], [], []>} : vector<8x8xbf16>, vector<8x8xbf16>, vector<8x8xf32> -> vector<8x8xf32>
    %35 = vector.extract_strided_slice %1 {offsets = [0, 8], sizes = [8, 8], strides = [1, 1]} : vector<8x32xbf16> to vector<8x8xbf16>
    %36 = vector.extract_strided_slice %3 {offsets = [0, 8], sizes = [8, 8], strides = [1, 1]} : vector<8x32xbf16> to vector<8x8xbf16>
    "tpu.trace_start"() <{level = 10 : i32, message = "qd,kd->qk"}> : () -> ()
    %cst_22 = arith.constant dense<0.000000e+00> : vector<8x8xf32>
    %37 = tpu.matmul %35, %36, %cst_22 {dimension_numbers = #tpu.dot_dimension_numbers<[1], [1], [0], [0], [0, 0, 1, 0], [], []>} : vector<8x8xbf16>, vector<8x8xbf16>, vector<8x8xf32> -> vector<8x8xf32>
    "tpu.trace_stop"() : () -> ()
    %38 = vector.broadcast %12 : vector<1x8xf32> to vector<8x8xf32>
    %39 = arith.addf %37, %38 : vector<8x8xf32>
    %cst_23 = arith.constant dense<0xFF800000> : vector<8xf32>
    %40 = vector.multi_reduction <maximumf>, %39, %cst_23 [1] : vector<8x8xf32> to vector<8xf32>
    %41 = vector.shape_cast %40 : vector<8xf32> to vector<8x1xf32>
    %42 = vector.broadcast %41 : vector<8x1xf32> to vector<8x8xf32>
    %43 = arith.subf %39, %42 : vector<8x8xf32>
    %44 = math.exp %43 : vector<8x8xf32>
    %cst_24 = arith.constant dense<0.000000e+00> : vector<8xf32>
    %45 = vector.multi_reduction <add>, %44, %cst_24 [1] : vector<8x8xf32> to vector<8xf32>
    %46 = vector.shape_cast %45 : vector<8xf32> to vector<8x1xf32>
    %47 = tpu.reciprocal %46 {approx = true} : vector<8x1xf32> -> vector<8x1xf32>
    %48 = vector.broadcast %47 : vector<8x1xf32> to vector<8x8xf32>
    %49 = arith.mulf %44, %48 : vector<8x8xf32>
    %50 = arith.truncf %49 : vector<8x8xf32> to vector<8x8xbf16>
    %51 = vector.extract_strided_slice %5 {offsets = [0, 8], sizes = [8, 8], strides = [1, 1]} : vector<8x32xbf16> to vector<8x8xbf16>
    %cst_25 = arith.constant dense<0.000000e+00> : vector<8x8xf32>
    %52 = tpu.matmul %50, %51, %cst_25 {dimension_numbers = #tpu.dot_dimension_numbers<[1], [0], [0], [1], [0, 0, 1, 1], [], []>} : vector<8x8xbf16>, vector<8x8xbf16>, vector<8x8xf32> -> vector<8x8xf32>
    %53 = vector.extract_strided_slice %1 {offsets = [0, 16], sizes = [8, 8], strides = [1, 1]} : vector<8x32xbf16> to vector<8x8xbf16>
    %54 = vector.extract_strided_slice %3 {offsets = [0, 16], sizes = [8, 8], strides = [1, 1]} : vector<8x32xbf16> to vector<8x8xbf16>
    "tpu.trace_start"() <{level = 10 : i32, message = "qd,kd->qk"}> : () -> ()
    %cst_26 = arith.constant dense<0.000000e+00> : vector<8x8xf32>
    %55 = tpu.matmul %53, %54, %cst_26 {dimension_numbers = #tpu.dot_dimension_numbers<[1], [1], [0], [0], [0, 0, 1, 0], [], []>} : vector<8x8xbf16>, vector<8x8xbf16>, vector<8x8xf32> -> vector<8x8xf32>
    "tpu.trace_stop"() : () -> ()
    %56 = vector.broadcast %12 : vector<1x8xf32> to vector<8x8xf32>
    %57 = arith.addf %55, %56 : vector<8x8xf32>
    %cst_27 = arith.constant dense<0xFF800000> : vector<8xf32>
    %58 = vector.multi_reduction <maximumf>, %57, %cst_27 [1] : vector<8x8xf32> to vector<8xf32>
    %59 = vector.shape_cast %58 : vector<8xf32> to vector<8x1xf32>
    %60 = vector.broadcast %59 : vector<8x1xf32> to vector<8x8xf32>
    %61 = arith.subf %57, %60 : vector<8x8xf32>
    %62 = math.exp %61 : vector<8x8xf32>
    %cst_28 = arith.constant dense<0.000000e+00> : vector<8xf32>
    %63 = vector.multi_reduction <add>, %62, %cst_28 [1] : vector<8x8xf32> to vector<8xf32>
    %64 = vector.shape_cast %63 : vector<8xf32> to vector<8x1xf32>
    %65 = tpu.reciprocal %64 {approx = true} : vector<8x1xf32> -> vector<8x1xf32>
    %66 = vector.broadcast %65 : vector<8x1xf32> to vector<8x8xf32>
    %67 = arith.mulf %62, %66 : vector<8x8xf32>
    %68 = arith.truncf %67 : vector<8x8xf32> to vector<8x8xbf16>
    %69 = vector.extract_strided_slice %5 {offsets = [0, 16], sizes = [8, 8], strides = [1, 1]} : vector<8x32xbf16> to vector<8x8xbf16>
    %cst_29 = arith.constant dense<0.000000e+00> : vector<8x8xf32>
    %70 = tpu.matmul %68, %69, %cst_29 {dimension_numbers = #tpu.dot_dimension_numbers<[1], [0], [0], [1], [0, 0, 1, 1], [], []>} : vector<8x8xbf16>, vector<8x8xbf16>, vector<8x8xf32> -> vector<8x8xf32>
    %71 = vector.extract_strided_slice %1 {offsets = [0, 24], sizes = [8, 8], strides = [1, 1]} : vector<8x32xbf16> to vector<8x8xbf16>
    %72 = vector.extract_strided_slice %3 {offsets = [0, 24], sizes = [8, 8], strides = [1, 1]} : vector<8x32xbf16> to vector<8x8xbf16>
    "tpu.trace_start"() <{level = 10 : i32, message = "qd,kd->qk"}> : () -> ()
    %cst_30 = arith.constant dense<0.000000e+00> : vector<8x8xf32>
    %73 = tpu.matmul %71, %72, %cst_30 {dimension_numbers = #tpu.dot_dimension_numbers<[1], [1], [0], [0], [0, 0, 1, 0], [], []>} : vector<8x8xbf16>, vector<8x8xbf16>, vector<8x8xf32> -> vector<8x8xf32>
    "tpu.trace_stop"() : () -> ()
    %74 = vector.broadcast %12 : vector<1x8xf32> to vector<8x8xf32>
    %75 = arith.addf %73, %74 : vector<8x8xf32>
    %cst_31 = arith.constant dense<0xFF800000> : vector<8xf32>
    %76 = vector.multi_reduction <maximumf>, %75, %cst_31 [1] : vector<8x8xf32> to vector<8xf32>
    %77 = vector.shape_cast %76 : vector<8xf32> to vector<8x1xf32>
    %78 = vector.broadcast %77 : vector<8x1xf32> to vector<8x8xf32>
    %79 = arith.subf %75, %78 : vector<8x8xf32>
    %80 = math.exp %79 : vector<8x8xf32>
    %cst_32 = arith.constant dense<0.000000e+00> : vector<8xf32>
    %81 = vector.multi_reduction <add>, %80, %cst_32 [1] : vector<8x8xf32> to vector<8xf32>
    %82 = vector.shape_cast %81 : vector<8xf32> to vector<8x1xf32>
    %83 = tpu.reciprocal %82 {approx = true} : vector<8x1xf32> -> vector<8x1xf32>
    %84 = vector.broadcast %83 : vector<8x1xf32> to vector<8x8xf32>
    %85 = arith.mulf %80, %84 : vector<8x8xf32>
    %86 = arith.truncf %85 : vector<8x8xf32> to vector<8x8xbf16>
    %87 = vector.extract_strided_slice %5 {offsets = [0, 24], sizes = [8, 8], strides = [1, 1]} : vector<8x32xbf16> to vector<8x8xbf16>
    %cst_33 = arith.constant dense<0.000000e+00> : vector<8x8xf32>
    %88 = tpu.matmul %86, %87, %cst_33 {dimension_numbers = #tpu.dot_dimension_numbers<[1], [0], [0], [1], [0, 0, 1, 1], [], []>} : vector<8x8xbf16>, vector<8x8xbf16>, vector<8x8xf32> -> vector<8x8xf32>
    %89 = tpu.concatenate %34, %52, %70, %88 in 1 : vector<8x8xf32>, vector<8x8xf32>, vector<8x8xf32>, vector<8x8xf32> -> vector<8x32xf32>
    %90 = arith.truncf %89 : vector<8x32xf32> to vector<8x32xbf16>
    %cst_34 = arith.constant dense<0.000000e+00> : vector<8x32xf32>
    %91 = tpu.matmul %90, %13, %cst_34 {dimension_numbers = #tpu.dot_dimension_numbers<[1], [0], [0], [1], [0, 0, 1, 1], [], []>} : vector<8x32xbf16>, vector<32x32xbf16>, vector<8x32xf32> -> vector<8x32xf32>
    %92 = vector.broadcast %14 : vector<1x32xf32> to vector<8x32xf32>
    %93 = arith.addf %91, %92 : vector<8x32xf32>
    %94 = arith.addf %93, %16 : vector<8x32xf32>
    %c0_35 = arith.constant 0 : index
    %c0_36 = arith.constant 0 : index
    %c0_37 = arith.constant 0 : index
    %95 = vector.load %arg8[%c0_35, %c0_36, %c0_37] : memref<1x8x32xf32, #tpu.memory_space<vmem>>, vector<1x8x32xf32>
    %96 = vector.shape_cast %95 : vector<1x8x32xf32> to vector<8x32xf32>
    %97 = vector.shape_cast %94 : vector<8x32xf32> to vector<1x8x32xf32>
    tpu.vector_store %arg8[%c0_35, %c0_36, %c0_37], %97 {strides = array<i32>} : memref<1x8x32xf32, #tpu.memory_space<vmem>>, vector<1x8x32xf32>,
    return
  }
  func.func @transform_0(%arg0: i32, %arg1: i32) -> (i32, i32, i32) {
    %c0_i32 = arith.constant 0 : i32
    %c0_i32_0 = arith.constant 0 : i32
    return %arg0, %arg1, %c0_i32 : i32, i32, i32
  }
  func.func @transform_1(%arg0: i32, %arg1: i32) -> (i32, i32, i32) {
    %c0_i32 = arith.constant 0 : i32
    %c0_i32_0 = arith.constant 0 : i32
    %c0_i32_1 = arith.constant 0 : i32
    return %arg0, %c0_i32, %c0_i32_0 : i32, i32, i32
  }
  func.func @transform_2(%arg0: i32, %arg1: i32) -> (i32, i32, i32) {
    %c0_i32 = arith.constant 0 : i32
    %c0_i32_0 = arith.constant 0 : i32
    %c0_i32_1 = arith.constant 0 : i32
    return %arg0, %c0_i32, %c0_i32_0 : i32, i32, i32
  }
  func.func @transform_3(%arg0: i32, %arg1: i32) -> (i32, i32) {
    %c0_i32 = arith.constant 0 : i32
    %c0_i32_0 = arith.constant 0 : i32
    %c0_i32_1 = arith.constant 0 : i32
    return %c0_i32, %c0_i32_0 : i32, i32
  }
  func.func @transform_4(%arg0: i32, %arg1: i32) -> (i32, i32) {
    %c0_i32 = arith.constant 0 : i32
    %c0_i32_0 = arith.constant 0 : i32
    %c0_i32_1 = arith.constant 0 : i32
    return %c0_i32, %c0_i32_0 : i32, i32
  }
  func.func @transform_5(%arg0: i32, %arg1: i32) -> (i32, i32, i32) {
    %c0_i32 = arith.constant 0 : i32
    %c0_i32_0 = arith.constant 0 : i32
    return %arg0, %arg1, %c0_i32 : i32, i32, i32
  }
  func.func @transform_6(%arg0: i32, %arg1: i32) -> (i32, i32, i32) {
    %c0_i32 = arith.constant 0 : i32
    %c0_i32_0 = arith.constant 0 : i32
    return %arg0, %arg1, %c0_i32 : i32, i32, i32
  }
}

module attributes {stable_mosaic.version = 11 : i64} {
  func.func @_ffn_kernel(%arg0: i32, %arg1: i32, %arg2: memref<16x32xf32, #tpu.memory_space<vmem>>, %arg3: memref<1x32xf32, #tpu.memory_space<vmem>>, %arg4: memref<1x32xf32, #tpu.memory_space<vmem>>, %arg5: memref<32x64xbf16, #tpu.memory_space<vmem>>, %arg6: memref<1x64xf32, #tpu.memory_space<vmem>>, %arg7: memref<64x32xbf16, #tpu.memory_space<vmem>>, %arg8: memref<1x32xf32, #tpu.memory_space<vmem>>, %arg9: memref<16x32xf32, #tpu.memory_space<vmem>>, %arg10: memref<16x32xf32, #tpu.memory_space<vmem>>, %arg11: memref<16x32xbf16, #tpu.memory_space<vmem>>) attributes {dimension_semantics = [#tpu.dimension_semantics<parallel>, #tpu.dimension_semantics<arbitrary>], iteration_bounds = array<i64: 1, 1>, scalar_prefetch = 0 : i64, scratch_operands = 2 : i64, tpu.core_type = #tpu.core_type<tc>, window_params = [{transform_indices = @transform_0, window_bounds = array<i64: 16, 32>}, {pipeline_mode = #tpu.pipeline_mode<synchronous>, transform_indices = @transform_1, window_bounds = array<i64: 1, 32>}, {pipeline_mode = #tpu.pipeline_mode<synchronous>, transform_indices = @transform_2, window_bounds = array<i64: 1, 32>}, {transform_indices = @transform_3, window_bounds = array<i64: 32, 64>}, {transform_indices = @transform_4, window_bounds = array<i64: 1, 64>}, {transform_indices = @transform_5, window_bounds = array<i64: 64, 32>}, {pipeline_mode = #tpu.pipeline_mode<synchronous>, transform_indices = @transform_6, window_bounds = array<i64: 1, 32>}, {transform_indices = @transform_7, window_bounds = array<i64: 16, 32>}]} {
    %c0_i32 = arith.constant 0 : i32
    %0 = arith.cmpi eq, %arg1, %c0_i32 : i32
    %1 = arith.extui %0 : i1 to i32
    %c0_i32_0 = arith.constant 0 : i32
    %2 = arith.cmpi ne, %1, %c0_i32_0 : i32
    scf.if %2 {
      %c0_16 = arith.constant 0 : index
      %c0_17 = arith.constant 0 : index
      %20 = vector.load %arg2[%c0_16, %c0_17] : memref<16x32xf32, #tpu.memory_space<vmem>>, vector<16x32xf32>
      %c0_18 = arith.constant 0 : index
      %c0_19 = arith.constant 0 : index
      %21 = vector.load %arg3[%c0_18, %c0_19] : memref<1x32xf32, #tpu.memory_space<vmem>>, vector<1x32xf32>
      %c0_20 = arith.constant 0 : index
      %c0_21 = arith.constant 0 : index
      %22 = vector.load %arg4[%c0_20, %c0_21] : memref<1x32xf32, #tpu.memory_space<vmem>>, vector<1x32xf32>
      %cst_22 = arith.constant dense<0.000000e+00> : vector<16xf32>
      %23 = vector.multi_reduction <add>, %20, %cst_22 [1] : vector<16x32xf32> to vector<16xf32>
      %24 = vector.shape_cast %23 : vector<16xf32> to vector<16x1xf32>
      %cst_23 = arith.constant 3.200000e+01 : f32
      %25 = vector.broadcast %cst_23 : f32 to vector<16x1xf32>
      %26 = arith.divf %24, %25 : vector<16x1xf32>
      %27 = vector.broadcast %26 : vector<16x1xf32> to vector<16x32xf32>
      %28 = arith.subf %20, %27 : vector<16x32xf32>
      %29 = arith.mulf %28, %28 : vector<16x32xf32>
      %cst_24 = arith.constant dense<0.000000e+00> : vector<16xf32>
      %30 = vector.multi_reduction <add>, %29, %cst_24 [1] : vector<16x32xf32> to vector<16xf32>
      %31 = vector.shape_cast %30 : vector<16xf32> to vector<16x1xf32>
      %cst_25 = arith.constant 3.200000e+01 : f32
      %32 = vector.broadcast %cst_25 : f32 to vector<16x1xf32>
      %33 = arith.divf %31, %32 : vector<16x1xf32>
      %34 = vector.broadcast %26 : vector<16x1xf32> to vector<16x32xf32>
      %35 = arith.subf %20, %34 : vector<16x32xf32>
      %cst_26 = arith.constant 9.99999974E-6 : f32
      %36 = vector.broadcast %cst_26 : f32 to vector<16x1xf32>
      %37 = arith.addf %33, %36 : vector<16x1xf32>
      %38 = math.rsqrt %37 : vector<16x1xf32>
      %39 = vector.broadcast %38 : vector<16x1xf32> to vector<16x32xf32>
      %40 = arith.mulf %35, %39 : vector<16x32xf32>
      %41 = vector.broadcast %21 : vector<1x32xf32> to vector<16x32xf32>
      %42 = arith.mulf %40, %41 : vector<16x32xf32>
      %43 = vector.broadcast %22 : vector<1x32xf32> to vector<16x32xf32>
      %44 = arith.addf %42, %43 : vector<16x32xf32>
      %45 = arith.truncf %44 : vector<16x32xf32> to vector<16x32xbf16>
      %c0_27 = arith.constant 0 : index
      %c0_28 = arith.constant 0 : index
      %46 = vector.load %arg11[%c0_27, %c0_28] : memref<16x32xbf16, #tpu.memory_space<vmem>>, vector<16x32xbf16>
      tpu.vector_store %arg11[%c0_27, %c0_28], %45 {strides = array<i32>} : memref<16x32xbf16, #tpu.memory_space<vmem>>, vector<16x32xbf16>,
      %cst_29 = arith.constant 0.000000e+00 : f32
      %47 = vector.broadcast %cst_29 : f32 to vector<16x32xf32>
      %c0_30 = arith.constant 0 : index
      %c0_31 = arith.constant 0 : index
      %48 = vector.load %arg10[%c0_30, %c0_31] : memref<16x32xf32, #tpu.memory_space<vmem>>, vector<16x32xf32>
      tpu.vector_store %arg10[%c0_30, %c0_31], %47 {strides = array<i32>} : memref<16x32xf32, #tpu.memory_space<vmem>>, vector<16x32xf32>,
    } else {
    }
    %c0 = arith.constant 0 : index
    %c0_1 = arith.constant 0 : index
    %3 = vector.load %arg11[%c0, %c0_1] : memref<16x32xbf16, #tpu.memory_space<vmem>>, vector<16x32xbf16>
    %c0_2 = arith.constant 0 : index
    %c0_3 = arith.constant 0 : index
    %4 = vector.load %arg5[%c0_2, %c0_3] : memref<32x64xbf16, #tpu.memory_space<vmem>>, vector<32x64xbf16>
    %cst = arith.constant dense<0.000000e+00> : vector<16x64xf32>
    %5 = tpu.matmul %3, %4, %cst {dimension_numbers = #tpu.dot_dimension_numbers<[1], [0], [0], [1], [0, 0, 1, 1], [], []>} : vector<16x32xbf16>, vector<32x64xbf16>, vector<16x64xf32> -> vector<16x64xf32>
    %c0_4 = arith.constant 0 : index
    %c0_5 = arith.constant 0 : index
    %6 = vector.load %arg6[%c0_4, %c0_5] : memref<1x64xf32, #tpu.memory_space<vmem>>, vector<1x64xf32>
    %7 = vector.broadcast %6 : vector<1x64xf32> to vector<16x64xf32>
    %8 = arith.addf %5, %7 : vector<16x64xf32>
    %cst_6 = arith.constant 0.000000e+00 : f32
    %9 = vector.broadcast %cst_6 : f32 to vector<16x64xf32>
    %10 = arith.maximumf %8, %9 : vector<16x64xf32>
    %c0_7 = arith.constant 0 : index
    %c0_8 = arith.constant 0 : index
    %11 = vector.load %arg10[%c0_7, %c0_8] : memref<16x32xf32, #tpu.memory_space<vmem>>, vector<16x32xf32>
    %12 = arith.truncf %10 : vector<16x64xf32> to vector<16x64xbf16>
    %c0_9 = arith.constant 0 : index
    %c0_10 = arith.constant 0 : index
    %13 = vector.load %arg7[%c0_9, %c0_10] : memref<64x32xbf16, #tpu.memory_space<vmem>>, vector<64x32xbf16>
    %cst_11 = arith.constant dense<0.000000e+00> : vector<16x32xf32>
    %14 = tpu.matmul %12, %13, %cst_11 {dimension_numbers = #tpu.dot_dimension_numbers<[1], [0], [0], [1], [0, 0, 1, 1], [], []>} : vector<16x64xbf16>, vector<64x32xbf16>, vector<16x32xf32> -> vector<16x32xf32>
    %15 = arith.addf %11, %14 : vector<16x32xf32>
    %c0_12 = arith.constant 0 : index
    %c0_13 = arith.constant 0 : index
    %16 = vector.load %arg10[%c0_12, %c0_13] : memref<16x32xf32, #tpu.memory_space<vmem>>, vector<16x32xf32>
    tpu.vector_store %arg10[%c0_12, %c0_13], %15 {strides = array<i32>} : memref<16x32xf32, #tpu.memory_space<vmem>>, vector<16x32xf32>,
    %c0_i32_14 = arith.constant 0 : i32
    %17 = arith.cmpi eq, %arg1, %c0_i32_14 : i32
    %18 = arith.extui %17 : i1 to i32
    %c0_i32_15 = arith.constant 0 : i32
    %19 = arith.cmpi ne, %18, %c0_i32_15 : i32
    scf.if %19 {
      %c0_16 = arith.constant 0 : index
      %c0_17 = arith.constant 0 : index
      %20 = vector.load %arg10[%c0_16, %c0_17] : memref<16x32xf32, #tpu.memory_space<vmem>>, vector<16x32xf32>
      %c0_18 = arith.constant 0 : index
      %c0_19 = arith.constant 0 : index
      %21 = vector.load %arg8[%c0_18, %c0_19] : memref<1x32xf32, #tpu.memory_space<vmem>>, vector<1x32xf32>
      %22 = vector.broadcast %21 : vector<1x32xf32> to vector<16x32xf32>
      %23 = arith.addf %20, %22 : vector<16x32xf32>
      %c0_20 = arith.constant 0 : index
      %c0_21 = arith.constant 0 : index
      %24 = vector.load %arg2[%c0_20, %c0_21] : memref<16x32xf32, #tpu.memory_space<vmem>>, vector<16x32xf32>
      %25 = arith.addf %23, %24 : vector<16x32xf32>
      %c0_22 = arith.constant 0 : index
      %c0_23 = arith.constant 0 : index
      %26 = vector.load %arg9[%c0_22, %c0_23] : memref<16x32xf32, #tpu.memory_space<vmem>>, vector<16x32xf32>
      tpu.vector_store %arg9[%c0_22, %c0_23], %25 {strides = array<i32>} : memref<16x32xf32, #tpu.memory_space<vmem>>, vector<16x32xf32>,
    } else {
    }
    return
  }
  func.func @transform_0(%arg0: i32, %arg1: i32) -> (i32, i32) {
    %c0_i32 = arith.constant 0 : i32
    %c0_i32_0 = arith.constant 0 : i32
    return %arg0, %c0_i32 : i32, i32
  }
  func.func @transform_1(%arg0: i32, %arg1: i32) -> (i32, i32) {
    %c0_i32 = arith.constant 0 : i32
    %c0_i32_0 = arith.constant 0 : i32
    %c0_i32_1 = arith.constant 0 : i32
    return %c0_i32, %c0_i32_0 : i32, i32
  }
  func.func @transform_2(%arg0: i32, %arg1: i32) -> (i32, i32) {
    %c0_i32 = arith.constant 0 : i32
    %c0_i32_0 = arith.constant 0 : i32
    %c0_i32_1 = arith.constant 0 : i32
    return %c0_i32, %c0_i32_0 : i32, i32
  }
  func.func @transform_3(%arg0: i32, %arg1: i32) -> (i32, i32) {
    %c0_i32 = arith.constant 0 : i32
    %c0_i32_0 = arith.constant 0 : i32
    return %c0_i32, %arg1 : i32, i32
  }
  func.func @transform_4(%arg0: i32, %arg1: i32) -> (i32, i32) {
    %c0_i32 = arith.constant 0 : i32
    %c0_i32_0 = arith.constant 0 : i32
    return %c0_i32, %arg1 : i32, i32
  }
  func.func @transform_5(%arg0: i32, %arg1: i32) -> (i32, i32) {
    %c0_i32 = arith.constant 0 : i32
    %c0_i32_0 = arith.constant 0 : i32
    return %arg1, %c0_i32 : i32, i32
  }
  func.func @transform_6(%arg0: i32, %arg1: i32) -> (i32, i32) {
    %c0_i32 = arith.constant 0 : i32
    %c0_i32_0 = arith.constant 0 : i32
    %c0_i32_1 = arith.constant 0 : i32
    return %c0_i32, %c0_i32_0 : i32, i32
  }
  func.func @transform_7(%arg0: i32, %arg1: i32) -> (i32, i32) {
    %c0_i32 = arith.constant 0 : i32
    %c0_i32_0 = arith.constant 0 : i32
    return %arg0, %c0_i32 : i32, i32
  }
}

module attributes {stable_mosaic.version = 11 : i64} {
  func.func @_cross_attn_kernel(%arg0: i32, %arg1: i32, %arg2: memref<1x8x32xbf16, #tpu.memory_space<vmem>>, %arg3: memref<1x8x64xbf16, #tpu.memory_space<vmem>>, %arg4: memref<1x1x8xi32, #tpu.memory_space<vmem>>, %arg5: memref<32x32xbf16, #tpu.memory_space<vmem>>, %arg6: memref<1x32xf32, #tpu.memory_space<vmem>>, %arg7: memref<1x8x32xf32, #tpu.memory_space<vmem>>, %arg8: memref<1x8x32xf32, #tpu.memory_space<vmem>>, %arg9: memref<1x8x8xf32, #tpu.memory_space<vmem>>) attributes {dimension_semantics = [#tpu.dimension_semantics<parallel>, #tpu.dimension_semantics<parallel>], iteration_bounds = array<i64: 2, 1>, scalar_prefetch = 0 : i64, scratch_operands = 0 : i64, tpu.core_type = #tpu.core_type<tc>, window_params = [{transform_indices = @transform_0, window_bounds = array<i64: 1, 8, 32>}, {transform_indices = @transform_1, window_bounds = array<i64: 1, 8, 64>}, {transform_indices = @transform_2, window_bounds = array<i64: 1, 1, 8>}, {pipeline_mode = #tpu.pipeline_mode<synchronous>, transform_indices = @transform_3, window_bounds = array<i64: 32, 32>}, {pipeline_mode = #tpu.pipeline_mode<synchronous>, transform_indices = @transform_4, window_bounds = array<i64: 1, 32>}, {transform_indices = @transform_5, window_bounds = array<i64: 1, 8, 32>}, {transform_indices = @transform_6, window_bounds = array<i64: 1, 8, 32>}, {transform_indices = @transform_7, window_bounds = array<i64: 1, 8, 8>}]} {
    %c0 = arith.constant 0 : index
    %c0_0 = arith.constant 0 : index
    %c0_1 = arith.constant 0 : index
    %0 = vector.load %arg2[%c0, %c0_0, %c0_1] : memref<1x8x32xbf16, #tpu.memory_space<vmem>>, vector<1x8x32xbf16>
    %1 = vector.shape_cast %0 : vector<1x8x32xbf16> to vector<8x32xbf16>
    %c0_2 = arith.constant 0 : index
    %c0_3 = arith.constant 0 : index
    %c0_4 = arith.constant 0 : index
    %2 = vector.load %arg3[%c0_2, %c0_3, %c0_4] : memref<1x8x64xbf16, #tpu.memory_space<vmem>>, vector<1x8x32xbf16>
    %3 = vector.shape_cast %2 : vector<1x8x32xbf16> to vector<8x32xbf16>
    %c0_5 = arith.constant 0 : index
    %c0_6 = arith.constant 0 : index
    %c32 = arith.constant 32 : index
    %4 = vector.load %arg3[%c0_5, %c0_6, %c32] : memref<1x8x64xbf16, #tpu.memory_space<vmem>>, vector<1x8x32xbf16>
    %5 = vector.shape_cast %4 : vector<1x8x32xbf16> to vector<8x32xbf16>
    %c0_7 = arith.constant 0 : index
    %c0_8 = arith.constant 0 : index
    %c0_9 = arith.constant 0 : index
    %6 = vector.load %arg4[%c0_7, %c0_8, %c0_9] : memref<1x1x8xi32, #tpu.memory_space<vmem>>, vector<1x1x8xi32>
    %7 = vector.shape_cast %6 : vector<1x1x8xi32> to vector<1x8xi32>
    %c0_i32 = arith.constant 0 : i32
    %8 = vector.broadcast %c0_i32 : i32 to vector<1x8xi32>
    %9 = arith.cmpi sgt, %7, %8 : vector<1x8xi32>
    %cst = arith.constant 0.000000e+00 : f32
    %cst_10 = arith.constant -1.000000e+30 : f32
    %10 = vector.broadcast %cst : f32 to vector<1x8xf32>
    %11 = vector.broadcast %cst_10 : f32 to vector<1x8xf32>
    %12 = arith.select %9, %10, %11 : vector<1x8xi1>, vector<1x8xf32>
    %c0_11 = arith.constant 0 : index
    %c0_12 = arith.constant 0 : index
    %13 = vector.load %arg5[%c0_11, %c0_12] : memref<32x32xbf16, #tpu.memory_space<vmem>>, vector<32x32xbf16>
    %c0_13 = arith.constant 0 : index
    %c0_14 = arith.constant 0 : index
    %14 = vector.load %arg6[%c0_13, %c0_14] : memref<1x32xf32, #tpu.memory_space<vmem>>, vector<1x32xf32>
    %c0_15 = arith.constant 0 : index
    %c0_16 = arith.constant 0 : index
    %c0_17 = arith.constant 0 : index
    %15 = vector.load %arg7[%c0_15, %c0_16, %c0_17] : memref<1x8x32xf32, #tpu.memory_space<vmem>>, vector<1x8x32xf32>
    %16 = vector.shape_cast %15 : vector<1x8x32xf32> to vector<8x32xf32>
    %17 = vector.extract_strided_slice %1 {offsets = [0, 0], sizes = [8, 8], strides = [1, 1]} : vector<8x32xbf16> to vector<8x8xbf16>
    %18 = vector.extract_strided_slice %3 {offsets = [0, 0], sizes = [8, 8], strides = [1, 1]} : vector<8x32xbf16> to vector<8x8xbf16>
    "tpu.trace_start"() <{level = 10 : i32, message = "qd,kd->qk"}> : () -> ()
    %cst_18 = arith.constant dense<0.000000e+00> : vector<8x8xf32>
    %19 = tpu.matmul %17, %18, %cst_18 {dimension_numbers = #tpu.dot_dimension_numbers<[1], [1], [0], [0], [0, 0, 1, 0], [], []>} : vector<8x8xbf16>, vector<8x8xbf16>, vector<8x8xf32> -> vector<8x8xf32>
    "tpu.trace_stop"() : () -> ()
    %20 = vector.broadcast %12 : vector<1x8xf32> to vector<8x8xf32>
    %21 = arith.addf %19, %20 : vector<8x8xf32>
    %cst_19 = arith.constant dense<0xFF800000> : vector<8xf32>
    %22 = vector.multi_reduction <maximumf>, %21, %cst_19 [1] : vector<8x8xf32> to vector<8xf32>
    %23 = vector.shape_cast %22 : vector<8xf32> to vector<8x1xf32>
    %24 = vector.broadcast %23 : vector<8x1xf32> to vector<8x8xf32>
    %25 = arith.subf %21, %24 : vector<8x8xf32>
    %26 = math.exp %25 : vector<8x8xf32>
    %cst_20 = arith.constant dense<0.000000e+00> : vector<8xf32>
    %27 = vector.multi_reduction <add>, %26, %cst_20 [1] : vector<8x8xf32> to vector<8xf32>
    %28 = vector.shape_cast %27 : vector<8xf32> to vector<8x1xf32>
    %29 = vector.broadcast %28 : vector<8x1xf32> to vector<8x8xf32>
    %30 = arith.divf %26, %29 : vector<8x8xf32>
    %31 = arith.truncf %30 : vector<8x8xf32> to vector<8x8xbf16>
    %32 = vector.extract_strided_slice %5 {offsets = [0, 0], sizes = [8, 8], strides = [1, 1]} : vector<8x32xbf16> to vector<8x8xbf16>
    %cst_21 = arith.constant dense<0.000000e+00> : vector<8x8xf32>
    %33 = tpu.matmul %31, %32, %cst_21 {dimension_numbers = #tpu.dot_dimension_numbers<[1], [0], [0], [1], [0, 0, 1, 1], [], []>} : vector<8x8xbf16>, vector<8x8xbf16>, vector<8x8xf32> -> vector<8x8xf32>
    %34 = vector.extract_strided_slice %1 {offsets = [0, 8], sizes = [8, 8], strides = [1, 1]} : vector<8x32xbf16> to vector<8x8xbf16>
    %35 = vector.extract_strided_slice %3 {offsets = [0, 8], sizes = [8, 8], strides = [1, 1]} : vector<8x32xbf16> to vector<8x8xbf16>
    "tpu.trace_start"() <{level = 10 : i32, message = "qd,kd->qk"}> : () -> ()
    %cst_22 = arith.constant dense<0.000000e+00> : vector<8x8xf32>
    %36 = tpu.matmul %34, %35, %cst_22 {dimension_numbers = #tpu.dot_dimension_numbers<[1], [1], [0], [0], [0, 0, 1, 0], [], []>} : vector<8x8xbf16>, vector<8x8xbf16>, vector<8x8xf32> -> vector<8x8xf32>
    "tpu.trace_stop"() : () -> ()
    %37 = vector.broadcast %12 : vector<1x8xf32> to vector<8x8xf32>
    %38 = arith.addf %36, %37 : vector<8x8xf32>
    %cst_23 = arith.constant dense<0xFF800000> : vector<8xf32>
    %39 = vector.multi_reduction <maximumf>, %38, %cst_23 [1] : vector<8x8xf32> to vector<8xf32>
    %40 = vector.shape_cast %39 : vector<8xf32> to vector<8x1xf32>
    %41 = vector.broadcast %40 : vector<8x1xf32> to vector<8x8xf32>
    %42 = arith.subf %38, %41 : vector<8x8xf32>
    %43 = math.exp %42 : vector<8x8xf32>
    %cst_24 = arith.constant dense<0.000000e+00> : vector<8xf32>
    %44 = vector.multi_reduction <add>, %43, %cst_24 [1] : vector<8x8xf32> to vector<8xf32>
    %45 = vector.shape_cast %44 : vector<8xf32> to vector<8x1xf32>
    %46 = vector.broadcast %45 : vector<8x1xf32> to vector<8x8xf32>
    %47 = arith.divf %43, %46 : vector<8x8xf32>
    %48 = arith.addf %30, %47 : vector<8x8xf32>
    %49 = arith.truncf %47 : vector<8x8xf32> to vector<8x8xbf16>
    %50 = vector.extract_strided_slice %5 {offsets = [0, 8], sizes = [8, 8], strides = [1, 1]} : vector<8x32xbf16> to vector<8x8xbf16>
    %cst_25 = arith.constant dense<0.000000e+00> : vector<8x8xf32>
    %51 = tpu.matmul %49, %50, %cst_25 {dimension_numbers = #tpu.dot_dimension_numbers<[1], [0], [0], [1], [0, 0, 1, 1], [], []>} : vector<8x8xbf16>, vector<8x8xbf16>, vector<8x8xf32> -> vector<8x8xf32>
    %52 = vector.extract_strided_slice %1 {offsets = [0, 16], sizes = [8, 8], strides = [1, 1]} : vector<8x32xbf16> to vector<8x8xbf16>
    %53 = vector.extract_strided_slice %3 {offsets = [0, 16], sizes = [8, 8], strides = [1, 1]} : vector<8x32xbf16> to vector<8x8xbf16>
    "tpu.trace_start"() <{level = 10 : i32, message = "qd,kd->qk"}> : () -> ()
    %cst_26 = arith.constant dense<0.000000e+00> : vector<8x8xf32>
    %54 = tpu.matmul %52, %53, %cst_26 {dimension_numbers = #tpu.dot_dimension_numbers<[1], [1], [0], [0], [0, 0, 1, 0], [], []>} : vector<8x8xbf16>, vector<8x8xbf16>, vector<8x8xf32> -> vector<8x8xf32>
    "tpu.trace_stop"() : () -> ()
    %55 = vector.broadcast %12 : vector<1x8xf32> to vector<8x8xf32>
    %56 = arith.addf %54, %55 : vector<8x8xf32>
    %cst_27 = arith.constant dense<0xFF800000> : vector<8xf32>
    %57 = vector.multi_reduction <maximumf>, %56, %cst_27 [1] : vector<8x8xf32> to vector<8xf32>
    %58 = vector.shape_cast %57 : vector<8xf32> to vector<8x1xf32>
    %59 = vector.broadcast %58 : vector<8x1xf32> to vector<8x8xf32>
    %60 = arith.subf %56, %59 : vector<8x8xf32>
    %61 = math.exp %60 : vector<8x8xf32>
    %cst_28 = arith.constant dense<0.000000e+00> : vector<8xf32>
    %62 = vector.multi_reduction <add>, %61, %cst_28 [1] : vector<8x8xf32> to vector<8xf32>
    %63 = vector.shape_cast %62 : vector<8xf32> to vector<8x1xf32>
    %64 = vector.broadcast %63 : vector<8x1xf32> to vector<8x8xf32>
    %65 = arith.divf %61, %64 : vector<8x8xf32>
    %66 = arith.addf %48, %65 : vector<8x8xf32>
    %67 = arith.truncf %65 : vector<8x8xf32> to vector<8x8xbf16>
    %68 = vector.extract_strided_slice %5 {offsets = [0, 16], sizes = [8, 8], strides = [1, 1]} : vector<8x32xbf16> to vector<8x8xbf16>
    %cst_29 = arith.constant dense<0.000000e+00> : vector<8x8xf32>
    %69 = tpu.matmul %67, %68, %cst_29 {dimension_numbers = #tpu.dot_dimension_numbers<[1], [0], [0], [1], [0, 0, 1, 1], [], []>} : vector<8x8xbf16>, vector<8x8xbf16>, vector<8x8xf32> -> vector<8x8xf32>
    %70 = vector.extract_strided_slice %1 {offsets = [0, 24], sizes = [8, 8], strides = [1, 1]} : vector<8x32xbf16> to vector<8x8xbf16>
    %71 = vector.extract_strided_slice %3 {offsets = [0, 24], sizes = [8, 8], strides = [1, 1]} : vector<8x32xbf16> to vector<8x8xbf16>
    "tpu.trace_start"() <{level = 10 : i32, message = "qd,kd->qk"}> : () -> ()
    %cst_30 = arith.constant dense<0.000000e+00> : vector<8x8xf32>
    %72 = tpu.matmul %70, %71, %cst_30 {dimension_numbers = #tpu.dot_dimension_numbers<[1], [1], [0], [0], [0, 0, 1, 0], [], []>} : vector<8x8xbf16>, vector<8x8xbf16>, vector<8x8xf32> -> vector<8x8xf32>
    "tpu.trace_stop"() : () -> ()
    %73 = vector.broadcast %12 : vector<1x8xf32> to vector<8x8xf32>
    %74 = arith.addf %72, %73 : vector<8x8xf32>
    %cst_31 = arith.constant dense<0xFF800000> : vector<8xf32>
    %75 = vector.multi_reduction <maximumf>, %74, %cst_31 [1] : vector<8x8xf32> to vector<8xf32>
    %76 = vector.shape_cast %75 : vector<8xf32> to vector<8x1xf32>
    %77 = vector.broadcast %76 : vector<8x1xf32> to vector<8x8xf32>
    %78 = arith.subf %74, %77 : vector<8x8xf32>
    %79 = math.exp %78 : vector<8x8xf32>
    %cst_32 = arith.constant dense<0.000000e+00> : vector<8xf32>
    %80 = vector.multi_reduction <add>, %79, %cst_32 [1] : vector<8x8xf32> to vector<8xf32>
    %81 = vector.shape_cast %80 : vector<8xf32> to vector<8x1xf32>
    %82 = vector.broadcast %81 : vector<8x1xf32> to vector<8x8xf32>
    %83 = arith.divf %79, %82 : vector<8x8xf32>
    %84 = arith.addf %66, %83 : vector<8x8xf32>
    %85 = arith.truncf %83 : vector<8x8xf32> to vector<8x8xbf16>
    %86 = vector.extract_strided_slice %5 {offsets = [0, 24], sizes = [8, 8], strides = [1, 1]} : vector<8x32xbf16> to vector<8x8xbf16>
    %cst_33 = arith.constant dense<0.000000e+00> : vector<8x8xf32>
    %87 = tpu.matmul %85, %86, %cst_33 {dimension_numbers = #tpu.dot_dimension_numbers<[1], [0], [0], [1], [0, 0, 1, 1], [], []>} : vector<8x8xbf16>, vector<8x8xbf16>, vector<8x8xf32> -> vector<8x8xf32>
    %88 = tpu.concatenate %33, %51, %69, %87 in 1 : vector<8x8xf32>, vector<8x8xf32>, vector<8x8xf32>, vector<8x8xf32> -> vector<8x32xf32>
    %89 = arith.truncf %88 : vector<8x32xf32> to vector<8x32xbf16>
    %cst_34 = arith.constant dense<0.000000e+00> : vector<8x32xf32>
    %90 = tpu.matmul %89, %13, %cst_34 {dimension_numbers = #tpu.dot_dimension_numbers<[1], [0], [0], [1], [0, 0, 1, 1], [], []>} : vector<8x32xbf16>, vector<32x32xbf16>, vector<8x32xf32> -> vector<8x32xf32>
    %91 = vector.broadcast %14 : vector<1x32xf32> to vector<8x32xf32>
    %92 = arith.addf %90, %91 : vector<8x32xf32>
    %93 = arith.addf %92, %16 : vector<8x32xf32>
    %cst_35 = arith.constant 2.500000e-01 : f32
    %94 = vector.broadcast %cst_35 : f32 to vector<8x8xf32>
    %95 = arith.mulf %84, %94 : vector<8x8xf32>
    %c0_36 = arith.constant 0 : index
    %c0_37 = arith.constant 0 : index
    %c0_38 = arith.constant 0 : index
    %96 = vector.load %arg8[%c0_36, %c0_37, %c0_38] : memref<1x8x32xf32, #tpu.memory_space<vmem>>, vector<1x8x32xf32>
    %97 = vector.shape_cast %96 : vector<1x8x32xf32> to vector<8x32xf32>
    %98 = vector.shape_cast %93 : vector<8x32xf32> to vector<1x8x32xf32>
    tpu.vector_store %arg8[%c0_36, %c0_37, %c0_38], %98 {strides = array<i32>} : memref<1x8x32xf32, #tpu.memory_space<vmem>>, vector<1x8x32xf32>,
    %c0_39 = arith.constant 0 : index
    %c0_40 = arith.constant 0 : index
    %c0_41 = arith.constant 0 : index
    %99 = vector.load %arg9[%c0_39, %c0_40, %c0_41] : memref<1x8x8xf32, #tpu.memory_space<vmem>>, vector<1x8x8xf32>
    %100 = vector.shape_cast %99 : vector<1x8x8xf32> to vector<8x8xf32>
    %101 = vector.shape_cast %95 : vector<8x8xf32> to vector<1x8x8xf32>
    tpu.vector_store %arg9[%c0_39, %c0_40, %c0_41], %101 {strides = array<i32>} : memref<1x8x8xf32, #tpu.memory_space<vmem>>, vector<1x8x8xf32>,
    return
  }
  func.func @transform_0(%arg0: i32, %arg1: i32) -> (i32, i32, i32) {
    %c0_i32 = arith.constant 0 : i32
    %c0_i32_0 = arith.constant 0 : i32
    return %arg0, %arg1, %c0_i32 : i32, i32, i32
  }
  func.func @transform_1(%arg0: i32, %arg1: i32) -> (i32, i32, i32) {
    %c0_i32 = arith.constant 0 : i32
    %c0_i32_0 = arith.constant 0 : i32
    %c0_i32_1 = arith.constant 0 : i32
    return %arg0, %c0_i32, %c0_i32_0 : i32, i32, i32
  }
  func.func @transform_2(%arg0: i32, %arg1: i32) -> (i32, i32, i32) {
    %c0_i32 = arith.constant 0 : i32
    %c0_i32_0 = arith.constant 0 : i32
    %c0_i32_1 = arith.constant 0 : i32
    return %arg0, %c0_i32, %c0_i32_0 : i32, i32, i32
  }
  func.func @transform_3(%arg0: i32, %arg1: i32) -> (i32, i32) {
    %c0_i32 = arith.constant 0 : i32
    %c0_i32_0 = arith.constant 0 : i32
    %c0_i32_1 = arith.constant 0 : i32
    return %c0_i32, %c0_i32_0 : i32, i32
  }
  func.func @transform_4(%arg0: i32, %arg1: i32) -> (i32, i32) {
    %c0_i32 = arith.constant 0 : i32
    %c0_i32_0 = arith.constant 0 : i32
    %c0_i32_1 = arith.constant 0 : i32
    return %c0_i32, %c0_i32_0 : i32, i32
  }
  func.func @transform_5(%arg0: i32, %arg1: i32) -> (i32, i32, i32) {
    %c0_i32 = arith.constant 0 : i32
    %c0_i32_0 = arith.constant 0 : i32
    return %arg0, %arg1, %c0_i32 : i32, i32, i32
  }
  func.func @transform_6(%arg0: i32, %arg1: i32) -> (i32, i32, i32) {
    %c0_i32 = arith.constant 0 : i32
    %c0_i32_0 = arith.constant 0 : i32
    return %arg0, %arg1, %c0_i32 : i32, i32, i32
  }
  func.func @transform_7(%arg0: i32, %arg1: i32) -> (i32, i32, i32) {
    %c0_i32 = arith.constant 0 : i32
    %c0_i32_0 = arith.constant 0 : i32
    return %arg0, %arg1, %c0_i32 : i32, i32, i32
  }
}

module attributes {stable_mosaic.version = 11 : i64} {
  func.func @_ffn_kernel(%arg0: i32, %arg1: i32, %arg2: memref<16x32xf32, #tpu.memory_space<vmem>>, %arg3: memref<1x32xf32, #tpu.memory_space<vmem>>, %arg4: memref<1x32xf32, #tpu.memory_space<vmem>>, %arg5: memref<32x64xbf16, #tpu.memory_space<vmem>>, %arg6: memref<1x64xf32, #tpu.memory_space<vmem>>, %arg7: memref<64x32xbf16, #tpu.memory_space<vmem>>, %arg8: memref<1x32xf32, #tpu.memory_space<vmem>>, %arg9: memref<1x32xf32, #tpu.memory_space<vmem>>, %arg10: memref<1x32xf32, #tpu.memory_space<vmem>>, %arg11: memref<16x32xf32, #tpu.memory_space<vmem>>, %arg12: memref<16x32xf32, #tpu.memory_space<vmem>>, %arg13: memref<16x32xbf16, #tpu.memory_space<vmem>>) attributes {dimension_semantics = [#tpu.dimension_semantics<parallel>, #tpu.dimension_semantics<arbitrary>], iteration_bounds = array<i64: 1, 1>, scalar_prefetch = 0 : i64, scratch_operands = 2 : i64, tpu.core_type = #tpu.core_type<tc>, window_params = [{transform_indices = @transform_0, window_bounds = array<i64: 16, 32>}, {pipeline_mode = #tpu.pipeline_mode<synchronous>, transform_indices = @transform_1, window_bounds = array<i64: 1, 32>}, {pipeline_mode = #tpu.pipeline_mode<synchronous>, transform_indices = @transform_2, window_bounds = array<i64: 1, 32>}, {transform_indices = @transform_3, window_bounds = array<i64: 32, 64>}, {transform_indices = @transform_4, window_bounds = array<i64: 1, 64>}, {transform_indices = @transform_5, window_bounds = array<i64: 64, 32>}, {pipeline_mode = #tpu.pipeline_mode<synchronous>, transform_indices = @transform_6, window_bounds = array<i64: 1, 32>}, {pipeline_mode = #tpu.pipeline_mode<synchronous>, transform_indices = @transform_7, window_bounds = array<i64: 1, 32>}, {pipeline_mode = #tpu.pipeline_mode<synchronous>, transform_indices = @transform_8, window_bounds = array<i64: 1, 32>}, {transform_indices = @transform_9, window_bounds = array<i64: 16, 32>}]} {
    %c0_i32 = arith.constant 0 : i32
    %0 = arith.cmpi eq, %arg1, %c0_i32 : i32
    %1 = arith.extui %0 : i1 to i32
    %c0_i32_0 = arith.constant 0 : i32
    %2 = arith.cmpi ne, %1, %c0_i32_0 : i32
    scf.if %2 {
      %c0_16 = arith.constant 0 : index
      %c0_17 = arith.constant 0 : index
      %20 = vector.load %arg2[%c0_16, %c0_17] : memref<16x32xf32, #tpu.memory_space<vmem>>, vector<16x32xf32>
      %c0_18 = arith.constant 0 : index
      %c0_19 = arith.constant 0 : index
      %21 = vector.load %arg3[%c0_18, %c0_19] : memref<1x32xf32, #tpu.memory_space<vmem>>, vector<1x32xf32>
      %c0_20 = arith.constant 0 : index
      %c0_21 = arith.constant 0 : index
      %22 = vector.load %arg4[%c0_20, %c0_21] : memref<1x32xf32, #tpu.memory_space<vmem>>, vector<1x32xf32>
      %cst_22 = arith.constant dense<0.000000e+00> : vector<16xf32>
      %23 = vector.multi_reduction <add>, %20, %cst_22 [1] : vector<16x32xf32> to vector<16xf32>
      %24 = vector.shape_cast %23 : vector<16xf32> to vector<16x1xf32>
      %cst_23 = arith.constant 3.200000e+01 : f32
      %25 = vector.broadcast %cst_23 : f32 to vector<16x1xf32>
      %26 = arith.divf %24, %25 : vector<16x1xf32>
      %27 = vector.broadcast %26 : vector<16x1xf32> to vector<16x32xf32>
      %28 = arith.subf %20, %27 : vector<16x32xf32>
      %29 = arith.mulf %28, %28 : vector<16x32xf32>
      %cst_24 = arith.constant dense<0.000000e+00> : vector<16xf32>
      %30 = vector.multi_reduction <add>, %29, %cst_24 [1] : vector<16x32xf32> to vector<16xf32>
      %31 = vector.shape_cast %30 : vector<16xf32> to vector<16x1xf32>
      %cst_25 = arith.constant 3.200000e+01 : f32
      %32 = vector.broadcast %cst_25 : f32 to vector<16x1xf32>
      %33 = arith.divf %31, %32 : vector<16x1xf32>
      %34 = vector.broadcast %26 : vector<16x1xf32> to vector<16x32xf32>
      %35 = arith.subf %20, %34 : vector<16x32xf32>
      %cst_26 = arith.constant 9.99999974E-6 : f32
      %36 = vector.broadcast %cst_26 : f32 to vector<16x1xf32>
      %37 = arith.addf %33, %36 : vector<16x1xf32>
      %38 = math.rsqrt %37 : vector<16x1xf32>
      %39 = vector.broadcast %38 : vector<16x1xf32> to vector<16x32xf32>
      %40 = arith.mulf %35, %39 : vector<16x32xf32>
      %41 = vector.broadcast %21 : vector<1x32xf32> to vector<16x32xf32>
      %42 = arith.mulf %40, %41 : vector<16x32xf32>
      %43 = vector.broadcast %22 : vector<1x32xf32> to vector<16x32xf32>
      %44 = arith.addf %42, %43 : vector<16x32xf32>
      %45 = arith.truncf %44 : vector<16x32xf32> to vector<16x32xbf16>
      %c0_27 = arith.constant 0 : index
      %c0_28 = arith.constant 0 : index
      %46 = vector.load %arg13[%c0_27, %c0_28] : memref<16x32xbf16, #tpu.memory_space<vmem>>, vector<16x32xbf16>
      tpu.vector_store %arg13[%c0_27, %c0_28], %45 {strides = array<i32>} : memref<16x32xbf16, #tpu.memory_space<vmem>>, vector<16x32xbf16>,
      %cst_29 = arith.constant 0.000000e+00 : f32
      %47 = vector.broadcast %cst_29 : f32 to vector<16x32xf32>
      %c0_30 = arith.constant 0 : index
      %c0_31 = arith.constant 0 : index
      %48 = vector.load %arg12[%c0_30, %c0_31] : memref<16x32xf32, #tpu.memory_space<vmem>>, vector<16x32xf32>
      tpu.vector_store %arg12[%c0_30, %c0_31], %47 {strides = array<i32>} : memref<16x32xf32, #tpu.memory_space<vmem>>, vector<16x32xf32>,
    } else {
    }
    %c0 = arith.constant 0 : index
    %c0_1 = arith.constant 0 : index
    %3 = vector.load %arg13[%c0, %c0_1] : memref<16x32xbf16, #tpu.memory_space<vmem>>, vector<16x32xbf16>
    %c0_2 = arith.constant 0 : index
    %c0_3 = arith.constant 0 : index
    %4 = vector.load %arg5[%c0_2, %c0_3] : memref<32x64xbf16, #tpu.memory_space<vmem>>, vector<32x64xbf16>
    %cst = arith.constant dense<0.000000e+00> : vector<16x64xf32>
    %5 = tpu.matmul %3, %4, %cst {dimension_numbers = #tpu.dot_dimension_numbers<[1], [0], [0], [1], [0, 0, 1, 1], [], []>} : vector<16x32xbf16>, vector<32x64xbf16>, vector<16x64xf32> -> vector<16x64xf32>
    %c0_4 = arith.constant 0 : index
    %c0_5 = arith.constant 0 : index
    %6 = vector.load %arg6[%c0_4, %c0_5] : memref<1x64xf32, #tpu.memory_space<vmem>>, vector<1x64xf32>
    %7 = vector.broadcast %6 : vector<1x64xf32> to vector<16x64xf32>
    %8 = arith.addf %5, %7 : vector<16x64xf32>
    %cst_6 = arith.constant 0.000000e+00 : f32
    %9 = vector.broadcast %cst_6 : f32 to vector<16x64xf32>
    %10 = arith.maximumf %8, %9 : vector<16x64xf32>
    %c0_7 = arith.constant 0 : index
    %c0_8 = arith.constant 0 : index
    %11 = vector.load %arg12[%c0_7, %c0_8] : memref<16x32xf32, #tpu.memory_space<vmem>>, vector<16x32xf32>
    %12 = arith.truncf %10 : vector<16x64xf32> to vector<16x64xbf16>
    %c0_9 = arith.constant 0 : index
    %c0_10 = arith.constant 0 : index
    %13 = vector.load %arg7[%c0_9, %c0_10] : memref<64x32xbf16, #tpu.memory_space<vmem>>, vector<64x32xbf16>
    %cst_11 = arith.constant dense<0.000000e+00> : vector<16x32xf32>
    %14 = tpu.matmul %12, %13, %cst_11 {dimension_numbers = #tpu.dot_dimension_numbers<[1], [0], [0], [1], [0, 0, 1, 1], [], []>} : vector<16x64xbf16>, vector<64x32xbf16>, vector<16x32xf32> -> vector<16x32xf32>
    %15 = arith.addf %11, %14 : vector<16x32xf32>
    %c0_12 = arith.constant 0 : index
    %c0_13 = arith.constant 0 : index
    %16 = vector.load %arg12[%c0_12, %c0_13] : memref<16x32xf32, #tpu.memory_space<vmem>>, vector<16x32xf32>
    tpu.vector_store %arg12[%c0_12, %c0_13], %15 {strides = array<i32>} : memref<16x32xf32, #tpu.memory_space<vmem>>, vector<16x32xf32>,
    %c0_i32_14 = arith.constant 0 : i32
    %17 = arith.cmpi eq, %arg1, %c0_i32_14 : i32
    %18 = arith.extui %17 : i1 to i32
    %c0_i32_15 = arith.constant 0 : i32
    %19 = arith.cmpi ne, %18, %c0_i32_15 : i32
    scf.if %19 {
      %c0_16 = arith.constant 0 : index
      %c0_17 = arith.constant 0 : index
      %20 = vector.load %arg12[%c0_16, %c0_17] : memref<16x32xf32, #tpu.memory_space<vmem>>, vector<16x32xf32>
      %c0_18 = arith.constant 0 : index
      %c0_19 = arith.constant 0 : index
      %21 = vector.load %arg8[%c0_18, %c0_19] : memref<1x32xf32, #tpu.memory_space<vmem>>, vector<1x32xf32>
      %22 = vector.broadcast %21 : vector<1x32xf32> to vector<16x32xf32>
      %23 = arith.addf %20, %22 : vector<16x32xf32>
      %c0_20 = arith.constant 0 : index
      %c0_21 = arith.constant 0 : index
      %24 = vector.load %arg2[%c0_20, %c0_21] : memref<16x32xf32, #tpu.memory_space<vmem>>, vector<16x32xf32>
      %25 = arith.addf %23, %24 : vector<16x32xf32>
      %c0_22 = arith.constant 0 : index
      %c0_23 = arith.constant 0 : index
      %26 = vector.load %arg9[%c0_22, %c0_23] : memref<1x32xf32, #tpu.memory_space<vmem>>, vector<1x32xf32>
      %c0_24 = arith.constant 0 : index
      %c0_25 = arith.constant 0 : index
      %27 = vector.load %arg10[%c0_24, %c0_25] : memref<1x32xf32, #tpu.memory_space<vmem>>, vector<1x32xf32>
      %cst_26 = arith.constant dense<0.000000e+00> : vector<16xf32>
      %28 = vector.multi_reduction <add>, %25, %cst_26 [1] : vector<16x32xf32> to vector<16xf32>
      %29 = vector.shape_cast %28 : vector<16xf32> to vector<16x1xf32>
      %cst_27 = arith.constant 3.200000e+01 : f32
      %30 = vector.broadcast %cst_27 : f32 to vector<16x1xf32>
      %31 = arith.divf %29, %30 : vector<16x1xf32>
      %32 = vector.broadcast %31 : vector<16x1xf32> to vector<16x32xf32>
      %33 = arith.subf %25, %32 : vector<16x32xf32>
      %34 = arith.mulf %33, %33 : vector<16x32xf32>
      %cst_28 = arith.constant dense<0.000000e+00> : vector<16xf32>
      %35 = vector.multi_reduction <add>, %34, %cst_28 [1] : vector<16x32xf32> to vector<16xf32>
      %36 = vector.shape_cast %35 : vector<16xf32> to vector<16x1xf32>
      %cst_29 = arith.constant 3.200000e+01 : f32
      %37 = vector.broadcast %cst_29 : f32 to vector<16x1xf32>
      %38 = arith.divf %36, %37 : vector<16x1xf32>
      %39 = vector.broadcast %31 : vector<16x1xf32> to vector<16x32xf32>
      %40 = arith.subf %25, %39 : vector<16x32xf32>
      %cst_30 = arith.constant 9.99999974E-6 : f32
      %41 = vector.broadcast %cst_30 : f32 to vector<16x1xf32>
      %42 = arith.addf %38, %41 : vector<16x1xf32>
      %43 = math.rsqrt %42 : vector<16x1xf32>
      %44 = vector.broadcast %43 : vector<16x1xf32> to vector<16x32xf32>
      %45 = arith.mulf %40, %44 : vector<16x32xf32>
      %46 = vector.broadcast %26 : vector<1x32xf32> to vector<16x32xf32>
      %47 = arith.mulf %45, %46 : vector<16x32xf32>
      %48 = vector.broadcast %27 : vector<1x32xf32> to vector<16x32xf32>
      %49 = arith.addf %47, %48 : vector<16x32xf32>
      %c0_31 = arith.constant 0 : index
      %c0_32 = arith.constant 0 : index
      %50 = vector.load %arg11[%c0_31, %c0_32] : memref<16x32xf32, #tpu.memory_space<vmem>>, vector<16x32xf32>
      tpu.vector_store %arg11[%c0_31, %c0_32], %49 {strides = array<i32>} : memref<16x32xf32, #tpu.memory_space<vmem>>, vector<16x32xf32>,
    } else {
    }
    return
  }
  func.func @transform_0(%arg0: i32, %arg1: i32) -> (i32, i32) {
    %c0_i32 = arith.constant 0 : i32
    %c0_i32_0 = arith.constant 0 : i32
    return %arg0, %c0_i32 : i32, i32
  }
  func.func @transform_1(%arg0: i32, %arg1: i32) -> (i32, i32) {
    %c0_i32 = arith.constant 0 : i32
    %c0_i32_0 = arith.constant 0 : i32
    %c0_i32_1 = arith.constant 0 : i32
    return %c0_i32, %c0_i32_0 : i32, i32
  }
  func.func @transform_2(%arg0: i32, %arg1: i32) -> (i32, i32) {
    %c0_i32 = arith.constant 0 : i32
    %c0_i32_0 = arith.constant 0 : i32
    %c0_i32_1 = arith.constant 0 : i32
    return %c0_i32, %c0_i32_0 : i32, i32
  }
  func.func @transform_3(%arg0: i32, %arg1: i32) -> (i32, i32) {
    %c0_i32 = arith.constant 0 : i32
    %c0_i32_0 = arith.constant 0 : i32
    return %c0_i32, %arg1 : i32, i32
  }
  func.func @transform_4(%arg0: i32, %arg1: i32) -> (i32, i32) {
    %c0_i32 = arith.constant 0 : i32
    %c0_i32_0 = arith.constant 0 : i32
    return %c0_i32, %arg1 : i32, i32
  }
  func.func @transform_5(%arg0: i32, %arg1: i32) -> (i32, i32) {
    %c0_i32 = arith.constant 0 : i32
    %c0_i32_0 = arith.constant 0 : i32
    return %arg1, %c0_i32 : i32, i32
  }
  func.func @transform_6(%arg0: i32, %arg1: i32) -> (i32, i32) {
    %c0_i32 = arith.constant 0 : i32
    %c0_i32_0 = arith.constant 0 : i32
    %c0_i32_1 = arith.constant 0 : i32
    return %c0_i32, %c0_i32_0 : i32, i32
  }
  func.func @transform_7(%arg0: i32, %arg1: i32) -> (i32, i32) {
    %c0_i32 = arith.constant 0 : i32
    %c0_i32_0 = arith.constant 0 : i32
    %c0_i32_1 = arith.constant 0 : i32
    return %c0_i32, %c0_i32_0 : i32, i32
  }
  func.func @transform_8(%arg0: i32, %arg1: i32) -> (i32, i32) {
    %c0_i32 = arith.constant 0 : i32
    %c0_i32_0 = arith.constant 0 : i32
    %c0_i32_1 = arith.constant 0 : i32
    return %c0_i32, %c0_i32_0 : i32, i32
  }
  func.func @transform_9(%arg0: i32, %arg1: i32) -> (i32, i32) {
    %c0_i32 = arith.constant 0 : i32
    %c0_i32_0 = arith.constant 0 : i32
    return %arg0, %c0_i32 : i32, i32
  }
}

</mosaic_0001>

<llo_original>
// kernel: tpu_custom_call.1
$region0: #{tpu_custom_call.1}
  #allocation0 [shape = 'u32[]', space=smem, size = 0x4, offset = 0x4, fixed_abs, tag = 'smem constant byte address 0x4 - core index']
  #allocation1 [shape = 'u32[72,128]{1,0:T(1,128)}', space=vmem, size = 0x9000, scoped, tag = 'internal scratch']
  %s0 = inlined_call_operand.hbm [shape: f32[8,128], index: 0, kind: input, shape index: {}]
  %s1 = inlined_call_operand.hbm [shape: f32[8,128], index: 1, kind: input, shape index: {}]
  %s2 = inlined_call_operand.hbm [shape: f32[8,128], index: 2, kind: output, shape index: {}]
  %s3 = sld [smem:[#allocation0]]
  $region26: #{tpu_custom_call.1} parent=0
    _
  %s5 = ssub.s32 1, %s3
  %s6 = scalar_select 0, %s5, %s3
  $region1: #{tpu_custom_call.1} parent=0
    #allocation2 [shape = 'u8[4096]{0}', space=vmem, size = 0x1000, scoped, tag = 'input window, operand 0, single buffered']
    #allocation3 [shape = 's32[1]{0}', space=sflag, size = 0x4, scoped, tag = 'scoped memory for tpu_custom_call.1']
    #allocation4 [shape = 's32[1]{0}', space=sflag, size = 0x4, scoped, tag = 'scoped memory for tpu_custom_call.1']
    #allocation5 [shape = 'u8[4096]{0}', space=vmem, size = 0x1000, scoped, tag = 'input window, operand 1, single buffered']
    #allocation6 [shape = 's32[1]{0}', space=sflag, size = 0x4, scoped, tag = 'scoped memory for tpu_custom_call.1']
    #allocation7 [shape = 'u8[4096]{0}', space=vmem, size = 0x1000, scoped, tag = 'output window, operand 0, single buffered']
    %7 = vsyncpa [#allocation3], 0
    %8 = vsyncpa [#allocation6], 0
    %9 = vsyncpa [#allocation4], 0
    // Predicated region
    $region2: #{tpu_custom_call.1} parent=1 // pred_check
      _
    $region3: #{tpu_custom_call.1} parent=1 // pred_check_branch
      %11 = sbr.rel (0) target = $region5
    $region4: #{tpu_custom_call.1} parent=1 // pred_region
      %13 = vsyncadd [#allocation3], 0
      %s15 = sshll.u32 %s0, 4
      %s16 = int_to_ptr.hbm [resolvable:$true] %s15
      %s17 = sshll.u32 [#allocation2], 4
      %s18 = int_to_ptr.vmem [resolvable:$true] %s17
      %20 = dma.hbm_to_vmem [thread:$0]  %s16, 128, %s18, [#allocation3]
    $region5: #{tpu_custom_call.1} parent=1 // pred_fallthru
      _
    // Predicated region
    $region6: #{tpu_custom_call.1} parent=1 // pred_check
      _
    $region7: #{tpu_custom_call.1} parent=1 // pred_check_branch
      %22 = sbr.rel (0) target = $region9
    $region8: #{tpu_custom_call.1} parent=1 // pred_region
      %24 = vsyncadd [#allocation6], 0
      %s26 = sshll.u32 %s1, 4
      %s27 = int_to_ptr.hbm [resolvable:$true] %s26
      %s28 = sshll.u32 [#allocation5], 4
      %s29 = int_to_ptr.vmem [resolvable:$true] %s28
      %31 = dma.hbm_to_vmem [thread:$0]  %s27, 128, %s29, [#allocation6]
    $region9: #{tpu_custom_call.1} parent=1 // pred_fallthru
      _
    // Predicated region
    $region10: #{tpu_custom_call.1} parent=1 // pred_check
      _
    $region11: #{tpu_custom_call.1} parent=1 // pred_check_branch
      %33 = sbr.rel (0) target = $region13
    $region12: #{tpu_custom_call.1} parent=1 // pred_region
      %35 = dma.done [#allocation3], 128
    $region13: #{tpu_custom_call.1} parent=1 // pred_fallthru
      _
    // Predicated region
    $region14: #{tpu_custom_call.1} parent=1 // pred_check
      _
    $region15: #{tpu_custom_call.1} parent=1 // pred_check_branch
      %37 = sbr.rel (0) target = $region17
    $region16: #{tpu_custom_call.1} parent=1 // pred_region
      %39 = dma.done [#allocation6], 128
    $region17: #{tpu_custom_call.1} parent=1 // pred_fallthru
      _
    %v40 = vld [vmem:[#allocation2] sm:$0xff]
    %v41 = vld [vmem:[#allocation5] sm:$0xff]
    %v42 = vadd.f32 %v40, %v41
    %43 = vst [vmem:[#allocation7] sm:$0xff] %v42
    // Predicated region
    $region18: #{tpu_custom_call.1} parent=1 // pred_check
      _
    $region19: #{tpu_custom_call.1} parent=1 // pred_check_branch
      %45 = sbr.rel (0) target = $region21
    $region20: #{tpu_custom_call.1} parent=1 // pred_region
      %47 = vsyncadd [#allocation4], 0
      %s49 = sshll.u32 [#allocation7], 4
      %s50 = int_to_ptr.vmem [resolvable:$true] %s49
      %s51 = sshll.u32 %s2, 4
      %s52 = int_to_ptr.hbm [resolvable:$true] %s51
      %54 = dma.vmem_to_hbm [thread:$0]  %s50, 128, %s52, [#allocation4]
    $region21: #{tpu_custom_call.1} parent=1 // pred_fallthru
      _
    // Predicated region
    $region22: #{tpu_custom_call.1} parent=1 // pred_check
      _
    $region23: #{tpu_custom_call.1} parent=1 // pred_check_branch
      %56 = sbr.rel (0) target = $region25
    $region24: #{tpu_custom_call.1} parent=1 // pred_region
      %58 = dma.done [#allocation4], 128
    $region25: #{tpu_custom_call.1} parent=1 // pred_fallthru
      _
    %59 = vsyncpa [#allocation3], 1
    %60 = vsyncpa [#allocation6], 1
    %61 = vsyncpa [#allocation4], 1

// kernel: transformer_decoder_forward.10
$region0: #{transformer_decoder_forward.10}
  #allocation0 [shape = 'u32[]', space=smem, size = 0x4, offset = 0x4, fixed_abs, tag = 'smem constant byte address 0x4 - core index']
  #allocation1 [shape = 'u32[72,128]{1,0:T(1,128)}', space=vmem, size = 0x9000, scoped, tag = 'internal scratch']
  %s0 = inlined_call_operand.vmem [shape: f32[16,32], index: 0, kind: input, shape index: {}]
  %s1 = inlined_call_operand.vmem [shape: f32[1,32], index: 1, kind: input, shape index: {}]
  %s2 = inlined_call_operand.vmem [shape: f32[1,32], index: 2, kind: input, shape index: {}]
  %s3 = inlined_call_operand.vmem [shape: bf16[32,96], index: 3, kind: input, shape index: {}]
  %s4 = inlined_call_operand.vmem [shape: f32[1,96], index: 4, kind: input, shape index: {}]
  %s5 = inlined_call_operand.vmem [shape: bf16[16,96], index: 5, kind: output, shape index: {}]
  %s6 = sld [smem:[#allocation0]]
  $region30: #{transformer_decoder_forward.10} parent=0
    _
  %s8 = ssub.s32 1, %s6
  %s9 = scalar_select 0, %s8, %s6
  // Predicated region
  $region2: #{transformer_decoder_forward.10} parent=0 // pred_check
    _
  $region3: #{transformer_decoder_forward.10} parent=0 // pred_check_branch
    %11 = sbr.rel (0) target = $region5
  $region4: #{transformer_decoder_forward.10} parent=0 // pred_region
    _
  $region5: #{transformer_decoder_forward.10} parent=0 // pred_fallthru
    _
  // Predicated region
  $region6: #{transformer_decoder_forward.10} parent=0 // pred_check
    _
  $region7: #{transformer_decoder_forward.10} parent=0 // pred_check_branch
    %13 = sbr.rel (0) target = $region9
  $region8: #{transformer_decoder_forward.10} parent=0 // pred_region
    _
  $region9: #{transformer_decoder_forward.10} parent=0 // pred_fallthru
    _
  // Predicated region
  $region10: #{transformer_decoder_forward.10} parent=0 // pred_check
    _
  $region11: #{transformer_decoder_forward.10} parent=0 // pred_check_branch
    %15 = sbr.rel (0) target = $region13
  $region12: #{transformer_decoder_forward.10} parent=0 // pred_region
    _
  $region13: #{transformer_decoder_forward.10} parent=0 // pred_fallthru
    _
  // Predicated region
  $region14: #{transformer_decoder_forward.10} parent=0 // pred_check
    _
  $region15: #{transformer_decoder_forward.10} parent=0 // pred_check_branch
    %17 = sbr.rel (0) target = $region17
  $region16: #{transformer_decoder_forward.10} parent=0 // pred_region
    _
  $region17: #{transformer_decoder_forward.10} parent=0 // pred_fallthru
    _
  // Predicated region
  $region18: #{transformer_decoder_forward.10} parent=0 // pred_check
    _
  $region19: #{transformer_decoder_forward.10} parent=0 // pred_check_branch
    %19 = sbr.rel (0) target = $region21
  $region20: #{transformer_decoder_forward.10} parent=0 // pred_region
    _
  $region21: #{transformer_decoder_forward.10} parent=0 // pred_fallthru
    _
  %v21 = vld [vmem:[%s0] sm:$0xff]
  %v22 = vld [vmem:[%s0 + $0x8] sm:$0xff]
  %v23 = vld [vmem:[%s1] sm:$0x1]
  %v24 = vld [vmem:[%s2] sm:$0x1]
  %vm25 = vcmask 261120
  %v26 = vsel %vm25, %v21, 0.0
  %27 = vadd.xlane.f32.xlu0 %v26
  %v28 = vpop.xlane.xlu0 %27
  %v29 = vsel %vm25, %v22, 0.0
  %30 = vadd.xlane.f32.xlu0 %v29
  %v31 = vpop.xlane.xlu0 %30
  %v32 = vrcp.pop 32.0
  %v33 = vmul.f32 32.0, %v32
  %v34 = vsub.f32 1.0, %v33
  %v35 = vmul.f32 %v32, %v34
  %v36 = vadd.f32 %v32, %v35
  %vm37 = vweird.f32 %v32
  %v38 = vsel %vm37, %v32, %v36
  %v39 = vmul.f32 %v28, %v38
  %v40 = vmul.f32 %v31, %v38
  %v41 = vsub.f32 %v21, %v39
  %v42 = vsub.f32 %v22, %v40
  %v43 = vmul.f32 %v41, %v41
  %v44 = vmul.f32 %v42, %v42
  %v45 = vsel %vm25, %v43, 0.0
  %46 = vadd.xlane.f32.xlu0 %v45
  %v47 = vpop.xlane.xlu0 %46
  %v48 = vsel %vm25, %v44, 0.0
  %49 = vadd.xlane.f32.xlu0 %v48
  %v50 = vpop.xlane.xlu0 %49
  %v51 = vmul.f32 %v47, %v38
  %v52 = vmul.f32 %v50, %v38
  %v53 = vadd.f32 %v51, 1e-05
  %v54 = vadd.f32 %v52, 1e-05
  %v55 = vrsqrt.pop %v53
  %v56 = vmul.f32 %v55, %v53
  %v57 = vmul.f32 %v56, %v55
  %v58 = vmul.f32 0.5, %v57
  %v59 = vsub.f32 1.5, %v58
  %v60 = vmul.f32 %v55, %v59
  %vm61 = vweird.f32 %v53
  %vm62 = vweird.f32 %v55
  %vm63 = vmor %vm61, %vm62
  %v64 = vsel %vm63, %v55, %v60
  %v65 = vrsqrt.pop %v54
  %v66 = vmul.f32 %v65, %v54
  %v67 = vmul.f32 %v66, %v65
  %v68 = vmul.f32 0.5, %v67
  %v69 = vsub.f32 1.5, %v68
  %v70 = vmul.f32 %v65, %v69
  %vm71 = vweird.f32 %v54
  %vm72 = vweird.f32 %v65
  %vm73 = vmor %vm71, %vm72
  %v74 = vsel %vm73, %v65, %v70
  %v75 = vmul.f32 %v41, %v64
  %v76 = vmul.f32 %v42, %v74
  %v78 = vperm.slane %v23, 0
  %v80 = vmul.f32 %v75, %v78
  %v81 = vmul.f32 %v76, %v78
  %v83 = vperm.slane %v24, 0
  %v85 = vadd.f32 %v80, %v83
  %v86 = vadd.f32 %v81, %v83
  %v87 = vpack.c.bf16 %v86, %v85
  %v88 = vld [vmem:[%s3] sm:$0xf]
  %v89 = vld [vmem:[%s3 + $0x4] sm:$0xf]
  %v90 = vld [vmem:[%s3 + $0x8] sm:$0xf]
  %v91 = vld [vmem:[%s3 + $0xc] sm:$0xf]
  %v92 = vld [vmem:[%s4] sm:$0x1]
  %v94 = vperm.slane %v92, 0
  %v100 = vunpack.c.l.b16 %v88
  %v101 = vunpack.c.l.b16 %v89
  %v102 = vunpack.c.l.b16 %v90
  %v103 = vunpack.c.l.b16 %v91
  %v104 = vpack.c.b16 %v101, %v100
  %v105 = vpack.c.b16 %v103, %v102
  %v109 = vsel %vm25, %v87, 0
  %111 = vmatpush.bf16.msra.mxu0 0
  %112 = vmatpush.bf16.msra.mxu0 0
  %113 = vmatpush.bf16.msra.mxu0 0
  %114 = vmatpush.bf16.msra.mxu0 0
  %115 = vmatpush.bf16.msra.mxu0 0
  %116 = vmatpush.bf16.msra.mxu0 0
  %117 = vmatpush.bf16.msra.mxu0 %v105
  %118 = vmatpush.bf16.msra.mxu0 %v104
  %119 = vmatmul.bf16.gmra.mxu0 %v109
  %v120 = vpop.f32.mrf.mxu0
  %v121 = vadd.f32 %v94, %v120
  %v122 = vpop.f32.mrf.mxu0
  %v123 = vadd.f32 %v94, %v122
  %124 = vdwg.mxu0
  %v125 = vpack.c.bf16 %v121, %v121
  %v126 = vpack.c.bf16 %v123, %v123
  %vm127 = vcmask 781312
  %128 = vst.msk [vmem:[%s5] sm:$0xf] %vm127, %v125
  %129 = vst.msk [vmem:[%s5 + $0x4] sm:$0xf] %vm127, %v126
  // Predicated region
  $region22: #{transformer_decoder_forward.10} parent=0 // pred_check
    _
  $region23: #{transformer_decoder_forward.10} parent=0 // pred_check_branch
    %131 = sbr.rel (0) target = $region25
  $region24: #{transformer_decoder_forward.10} parent=0 // pred_region
    _
  $region25: #{transformer_decoder_forward.10} parent=0 // pred_fallthru
    _
  // Predicated region
  $region26: #{transformer_decoder_forward.10} parent=0 // pred_check
    _
  $region27: #{transformer_decoder_forward.10} parent=0 // pred_check_branch
    %133 = sbr.rel (0) target = $region29
  $region28: #{transformer_decoder_forward.10} parent=0 // pred_region
    _
  $region29: #{transformer_decoder_forward.10} parent=0 // pred_fallthru
    _

// kernel: transformer_decoder_forward.12
$region0: #{transformer_decoder_forward.12}
  #allocation0 [shape = 'u32[]', space=smem, size = 0x4, offset = 0x4, fixed_abs, tag = 'smem constant byte address 0x4 - core index']
  #allocation1 [shape = 'u32[72,128]{1,0:T(1,128)}', space=vmem, size = 0x9000, scoped, tag = 'internal scratch']
  %s0 = inlined_call_operand.vmem [shape: bf16[16,32], index: 0, kind: input, shape index: {}]
  %s1 = inlined_call_operand.vmem [shape: bf16[32,64], index: 1, kind: input, shape index: {}]
  %s2 = inlined_call_operand.vmem [shape: f32[1,64], index: 2, kind: input, shape index: {}]
  %s3 = inlined_call_operand.vmem [shape: bf16[16,64], index: 3, kind: output, shape index: {}]
  %s4 = sld [smem:[#allocation0]]
  $region22: #{transformer_decoder_forward.12} parent=0
    _
  %s6 = ssub.s32 1, %s4
  %s7 = scalar_select 0, %s6, %s4
  // Predicated region
  $region2: #{transformer_decoder_forward.12} parent=0 // pred_check
    _
  $region3: #{transformer_decoder_forward.12} parent=0 // pred_check_branch
    %9 = sbr.rel (0) target = $region5
  $region4: #{transformer_decoder_forward.12} parent=0 // pred_region
    _
  $region5: #{transformer_decoder_forward.12} parent=0 // pred_fallthru
    _
  // Predicated region
  $region6: #{transformer_decoder_forward.12} parent=0 // pred_check
    _
  $region7: #{transformer_decoder_forward.12} parent=0 // pred_check_branch
    %11 = sbr.rel (0) target = $region9
  $region8: #{transformer_decoder_forward.12} parent=0 // pred_region
    _
  $region9: #{transformer_decoder_forward.12} parent=0 // pred_fallthru
    _
  // Predicated region
  $region10: #{transformer_decoder_forward.12} parent=0 // pred_check
    _
  $region11: #{transformer_decoder_forward.12} parent=0 // pred_check_branch
    %13 = sbr.rel (0) target = $region13
  $region12: #{transformer_decoder_forward.12} parent=0 // pred_region
    _
  $region13: #{transformer_decoder_forward.12} parent=0 // pred_fallthru
    _
  %v15 = vld [vmem:[%s0] sm:$0xf]
  %v16 = vld [vmem:[%s0 + $0x4] sm:$0xf]
  %v17 = vld [vmem:[%s1] sm:$0xf]
  %v18 = vld [vmem:[%s1 + $0x4] sm:$0xf]
  %v19 = vld [vmem:[%s1 + $0x8] sm:$0xf]
  %v20 = vld [vmem:[%s1 + $0xc] sm:$0xf]
  %v21 = vld [vmem:[%s2] sm:$0x1]
  %v23 = vperm.slane %v21, 0
  %v27 = vunpack.c.l.b16 %v15
  %v28 = vunpack.c.l.b16 %v16
  %v29 = vpack.c.b16 %v28, %v27
  %v34 = vunpack.c.l.b16 %v17
  %v35 = vunpack.c.l.b16 %v18
  %v36 = vunpack.c.l.b16 %v19
  %v37 = vunpack.c.l.b16 %v20
  %v38 = vpack.c.b16 %v35, %v34
  %v39 = vpack.c.b16 %v37, %v36
  %vm42 = vcmask 261120
  %v44 = vsel %vm42, %v29, 0
  %46 = vmatpush.bf16.msra.mxu0 0
  %47 = vmatpush.bf16.msra.mxu0 0
  %48 = vmatpush.bf16.msra.mxu0 0
  %49 = vmatpush.bf16.msra.mxu0 0
  %50 = vmatpush.bf16.msra.mxu0 0
  %51 = vmatpush.bf16.msra.mxu0 0
  %52 = vmatpush.bf16.msra.mxu0 %v39
  %53 = vmatpush.bf16.msra.mxu0 %v38
  %54 = vmatmul.bf16.gmra.mxu0 %v44
  %v55 = vpop.f32.mrf.mxu0
  %v56 = vadd.f32 %v23, %v55
  %v57 = vpop.f32.mrf.mxu0
  %v58 = vadd.f32 %v23, %v57
  %59 = vdwg.mxu0
  %v60 = vpack.c.bf16 %v56, %v56
  %v61 = vpack.c.bf16 %v58, %v58
  %vm62 = vcmask 519168
  %63 = vst.msk [vmem:[%s3] sm:$0xf] %vm62, %v60
  %64 = vst.msk [vmem:[%s3 + $0x4] sm:$0xf] %vm62, %v61
  // Predicated region
  $region14: #{transformer_decoder_forward.12} parent=0 // pred_check
    _
  $region15: #{transformer_decoder_forward.12} parent=0 // pred_check_branch
    %66 = sbr.rel (0) target = $region17
  $region16: #{transformer_decoder_forward.12} parent=0 // pred_region
    _
  $region17: #{transformer_decoder_forward.12} parent=0 // pred_fallthru
    _
  // Predicated region
  $region18: #{transformer_decoder_forward.12} parent=0 // pred_check
    _
  $region19: #{transformer_decoder_forward.12} parent=0 // pred_check_branch
    %68 = sbr.rel (0) target = $region21
  $region20: #{transformer_decoder_forward.12} parent=0 // pred_region
    _
  $region21: #{transformer_decoder_forward.12} parent=0 // pred_fallthru
    _

// kernel: transformer_decoder_forward.11
$region0: #{transformer_decoder_forward.11}
  #allocation0 [shape = 'u32[]', space=smem, size = 0x4, offset = 0x4, fixed_abs, tag = 'smem constant byte address 0x4 - core index']
  #allocation1 [shape = 'u32[72,128]{1,0:T(1,128)}', space=vmem, size = 0x9000, scoped, tag = 'internal scratch']
  %s0 = inlined_call_operand.vmem [shape: bf16[2,8,96], index: 0, kind: input, shape index: {}]
  %s1 = inlined_call_operand.vmem [shape: s32[2,1,8], index: 1, kind: input, shape index: {}]
  %s2 = inlined_call_operand.vmem [shape: bf16[32,32], index: 2, kind: input, shape index: {}]
  %s3 = inlined_call_operand.vmem [shape: f32[1,32], index: 3, kind: input, shape index: {}]
  %s4 = inlined_call_operand.vmem [shape: f32[2,8,32], index: 4, kind: input, shape index: {}]
  %s5 = inlined_call_operand.vmem [shape: f32[1,32], index: 5, kind: input, shape index: {}]
  %s6 = inlined_call_operand.vmem [shape: f32[1,32], index: 6, kind: input, shape index: {}]
  %s7 = inlined_call_operand.vmem [shape: bf16[32,32], index: 7, kind: input, shape index: {}]
  %s8 = inlined_call_operand.vmem [shape: f32[1,32], index: 8, kind: input, shape index: {}]
  %s9 = inlined_call_operand.vmem [shape: f32[2,8,32], index: 9, kind: output, shape index: {0}]
  %s10 = inlined_call_operand.vmem [shape: bf16[2,8,32], index: 10, kind: output, shape index: {1}]
  %11 = xla_tuple %s9, %s10
  %s12 = sld [smem:[#allocation0]]
  $region77: #{transformer_decoder_forward.11} parent=0
    _
  %s14 = ssub.s32 1, %s12
  %s15 = scalar_select 0, %s14, %s12
  loop: start=0, step=1, limit=4
  $region2: #{transformer_decoder_forward.11} parent=0 // loop_pre_header
    _
  $region3: #{transformer_decoder_forward.11} parent=0 // loop_header
    %s17 = sphi 0, %s21
    %p18 = scmp.ge.s32.totalorder %s17, 4
    %s24 = sphi 0, %s36
    %s25 = sphi 0, %s32
    %s26 = sphi 0, %s24
    %s27 = sphi 0, %s25
    %s28 = sphi 0, %s26
    %s29 = sphi 0, %s27
    %s39 = sphi 0, %s41
    %s42 = sphi 0, %s39
    %s43 = sphi 0, %s42
    %s59 = sphi 0, %s43
    %s65 = sphi 0, %s67
    %s68 = sphi 0, %s65
    %s69 = sphi 0, %s68
    %s85 = sphi 0, %s69
    %s89 = sphi 0, %s89
    %s91 = sphi 0, %s89
    %s92 = sphi 0, %s91
    %s106 = sphi 0, %s92
    %s110 = sphi 0, %s110
    %s112 = sphi 0, %s110
    %s113 = sphi 0, %s112
    %s127 = sphi 0, %s113
    %s135 = sphi 0, %s137
    %s138 = sphi 0, %s135
    %s139 = sphi 0, %s138
    %s155 = sphi 0, %s139
    %s159 = sphi 0, %s159
    %s161 = sphi 0, %s159
    %s162 = sphi 0, %s161
    %s176 = sphi 0, %s162
    %s180 = sphi 0, %s180
    %s182 = sphi 0, %s180
    %s183 = sphi 0, %s182
    %s197 = sphi 0, %s183
    %s201 = sphi 0, %s201
    %s203 = sphi 0, %s201
    %s204 = sphi 0, %s203
    %s218 = sphi 0, %s204
    %s222 = sphi 0, %s222
    %s224 = sphi 0, %s222
    %s225 = sphi 0, %s224
    %s239 = sphi 0, %s225
    %s247 = sphi 0, %s249
    %s250 = sphi 0, %s247
    %s251 = sphi 0, %s250
    %s267 = sphi 0, %s251
    %s275 = sphi 0, %s277
    %s278 = sphi 0, %s275
    %s279 = sphi 0, %s278
    %s295 = sphi 0, %s279
  $region4: #{transformer_decoder_forward.11} parent=0 // loop_header_branch
    %20 = sbr.rel (%p18) target = $region8
  $region5: #{transformer_decoder_forward.11} parent=0 // loop_body
    %s22 = ssub.s32 %s17, 1
    %s23 = ssub.s32 %s17, 2
    %s30 = sadd.s32 1, %s25
    %p31 = scmp.ge.s32.totalorder %s30, 1
    %s32 = scalar_select %p31, 0, %s30
    %s33 = sadd.s32 1, %s24
    %s34 = scalar_select %p31, %s33, %s24
    %p35 = scmp.ge.s32.totalorder %s34, 2
    %s36 = scalar_select %p35, 0, %s34
    %s37 = ssub.s32 %s24, %s36
    %p38 = scmp.eq.s32.totalorder %s37, 0
    %s40 = sadd.s32 %s39, 1
    %s41 = scalar_select %p38, %s39, %s40
    %p44 = pneg %p38
    %p45 = scmp.eq.s32.totalorder %s17, 1
    %p46 = por %p44, %p45
    %p47 = scmp.ne.s32.totalorder %s39, %s42
    %p48 = scmp.eq.s32.totalorder %s17, 0
    %p49 = por %p47, %p48
    %p50 = scmp.ne.s32.totalorder %s39, %s42
    %p51 = scmp.eq.s32.totalorder %s22, 1
    %p52 = por %p50, %p51
    %p53 = scmp.ne.s32.totalorder %s42, %s43
    %p54 = scmp.eq.s32.totalorder %s22, 0
    %p55 = por %p53, %p54
    %p56 = scmp.ne.s32.totalorder %s42, %s43
    %p57 = scmp.eq.s32.totalorder %s23, 1
    %p58 = por %p56, %p57
    %p60 = scmp.ne.s32.totalorder %s43, %s59
    %p61 = scmp.eq.s32.totalorder %s23, 0
    %p62 = por %p60, %p61
    %s63 = ssub.s32 %s24, %s36
    %p64 = scmp.eq.s32.totalorder %s63, 0
    %s66 = sadd.s32 %s65, 1
    %s67 = scalar_select %p64, %s65, %s66
    %p70 = pneg %p64
    %p71 = scmp.eq.s32.totalorder %s17, 1
    %p72 = por %p70, %p71
    %p73 = scmp.ne.s32.totalorder %s65, %s68
    %p74 = scmp.eq.s32.totalorder %s17, 0
    %p75 = por %p73, %p74
    %p76 = scmp.ne.s32.totalorder %s65, %s68
    %p77 = scmp.eq.s32.totalorder %s22, 1
    %p78 = por %p76, %p77
    %p79 = scmp.ne.s32.totalorder %s68, %s69
    %p80 = scmp.eq.s32.totalorder %s22, 0
    %p81 = por %p79, %p80
    %p82 = scmp.ne.s32.totalorder %s68, %s69
    %p83 = scmp.eq.s32.totalorder %s23, 1
    %p84 = por %p82, %p83
    %p86 = scmp.ne.s32.totalorder %s69, %s85
    %p87 = scmp.eq.s32.totalorder %s23, 0
    %p88 = por %p86, %p87
    %s90 = sadd.s32 %s89, 1
    %p93 = scmp.eq.s32.totalorder %s17, 1
    %p94 = scmp.ne.s32.totalorder %s89, %s91
    %p95 = scmp.eq.s32.totalorder %s17, 0
    %p96 = por %p94, %p95
    %p97 = scmp.ne.s32.totalorder %s89, %s91
    %p98 = scmp.eq.s32.totalorder %s22, 1
    %p99 = por %p97, %p98
    %p100 = scmp.ne.s32.totalorder %s91, %s92
    %p101 = scmp.eq.s32.totalorder %s22, 0
    %p102 = por %p100, %p101
    %p103 = scmp.ne.s32.totalorder %s91, %s92
    %p104 = scmp.eq.s32.totalorder %s23, 1
    %p105 = por %p103, %p104
    %p107 = scmp.ne.s32.totalorder %s92, %s106
    %p108 = scmp.eq.s32.totalorder %s23, 0
    %p109 = por %p107, %p108
    %s111 = sadd.s32 %s110, 1
    %p114 = scmp.eq.s32.totalorder %s17, 1
    %p115 = scmp.ne.s32.totalorder %s110, %s112
    %p116 = scmp.eq.s32.totalorder %s17, 0
    %p117 = por %p115, %p116
    %p118 = scmp.ne.s32.totalorder %s110, %s112
    %p119 = scmp.eq.s32.totalorder %s22, 1
    %p120 = por %p118, %p119
    %p121 = scmp.ne.s32.totalorder %s112, %s113
    %p122 = scmp.eq.s32.totalorder %s22, 0
    %p123 = por %p121, %p122
    %p124 = scmp.ne.s32.totalorder %s112, %s113
    %p125 = scmp.eq.s32.totalorder %s23, 1
    %p126 = por %p124, %p125
    %p128 = scmp.ne.s32.totalorder %s113, %s127
    %p129 = scmp.eq.s32.totalorder %s23, 0
    %p130 = por %p128, %p129
    %s131 = ssub.s32 %s24, %s36
    %s132 = ssub.s32 %s25, %s32
    %s133 = sor.u32 %s131, %s132
    %p134 = scmp.eq.s32.totalorder %s133, 0
    %s136 = sadd.s32 %s135, 1
    %s137 = scalar_select %p134, %s135, %s136
    %p140 = pneg %p134
    %p141 = scmp.eq.s32.totalorder %s17, 1
    %p142 = por %p140, %p141
    %p143 = scmp.ne.s32.totalorder %s135, %s138
    %p144 = scmp.eq.s32.totalorder %s17, 0
    %p145 = por %p143, %p144
    %p146 = scmp.ne.s32.totalorder %s135, %s138
    %p147 = scmp.eq.s32.totalorder %s22, 1
    %p148 = por %p146, %p147
    %p149 = scmp.ne.s32.totalorder %s138, %s139
    %p150 = scmp.eq.s32.totalorder %s22, 0
    %p151 = por %p149, %p150
    %p152 = scmp.ne.s32.totalorder %s138, %s139
    %p153 = scmp.eq.s32.totalorder %s23, 1
    %p154 = por %p152, %p153
    %p156 = scmp.ne.s32.totalorder %s139, %s155
    %p157 = scmp.eq.s32.totalorder %s23, 0
    %p158 = por %p156, %p157
    %s160 = sadd.s32 %s159, 1
    %p163 = scmp.eq.s32.totalorder %s17, 1
    %p164 = scmp.ne.s32.totalorder %s159, %s161
    %p165 = scmp.eq.s32.totalorder %s17, 0
    %p166 = por %p164, %p165
    %p167 = scmp.ne.s32.totalorder %s159, %s161
    %p168 = scmp.eq.s32.totalorder %s22, 1
    %p169 = por %p167, %p168
    %p170 = scmp.ne.s32.totalorder %s161, %s162
    %p171 = scmp.eq.s32.totalorder %s22, 0
    %p172 = por %p170, %p171
    %p173 = scmp.ne.s32.totalorder %s161, %s162
    %p174 = scmp.eq.s32.totalorder %s23, 1
    %p175 = por %p173, %p174
    %p177 = scmp.ne.s32.totalorder %s162, %s176
    %p178 = scmp.eq.s32.totalorder %s23, 0
    %p179 = por %p177, %p178
    %s181 = sadd.s32 %s180, 1
    %p184 = scmp.eq.s32.totalorder %s17, 1
    %p185 = scmp.ne.s32.totalorder %s180, %s182
    %p186 = scmp.eq.s32.totalorder %s17, 0
    %p187 = por %p185, %p186
    %p188 = scmp.ne.s32.totalorder %s180, %s182
    %p189 = scmp.eq.s32.totalorder %s22, 1
    %p190 = por %p188, %p189
    %p191 = scmp.ne.s32.totalorder %s182, %s183
    %p192 = scmp.eq.s32.totalorder %s22, 0
    %p193 = por %p191, %p192
    %p194 = scmp.ne.s32.totalorder %s182, %s183
    %p195 = scmp.eq.s32.totalorder %s23, 1
    %p196 = por %p194, %p195
    %p198 = scmp.ne.s32.totalorder %s183, %s197
    %p199 = scmp.eq.s32.totalorder %s23, 0
    %p200 = por %p198, %p199
    %s202 = sadd.s32 %s201, 1
    %p205 = scmp.eq.s32.totalorder %s17, 1
    %p206 = scmp.ne.s32.totalorder %s201, %s203
    %p207 = scmp.eq.s32.totalorder %s17, 0
    %p208 = por %p206, %p207
    %p209 = scmp.ne.s32.totalorder %s201, %s203
    %p210 = scmp.eq.s32.totalorder %s22, 1
    %p211 = por %p209, %p210
    %p212 = scmp.ne.s32.totalorder %s203, %s204
    %p213 = scmp.eq.s32.totalorder %s22, 0
    %p214 = por %p212, %p213
    %p215 = scmp.ne.s32.totalorder %s203, %s204
    %p216 = scmp.eq.s32.totalorder %s23, 1
    %p217 = por %p215, %p216
    %p219 = scmp.ne.s32.totalorder %s204, %s218
    %p220 = scmp.eq.s32.totalorder %s23, 0
    %p221 = por %p219, %p220
    %s223 = sadd.s32 %s222, 1
    %p226 = scmp.eq.s32.totalorder %s17, 1
    %p227 = scmp.ne.s32.totalorder %s222, %s224
    %p228 = scmp.eq.s32.totalorder %s17, 0
    %p229 = por %p227, %p228
    %p230 = scmp.ne.s32.totalorder %s222, %s224
    %p231 = scmp.eq.s32.totalorder %s22, 1
    %p232 = por %p230, %p231
    %p233 = scmp.ne.s32.totalorder %s224, %s225
    %p234 = scmp.eq.s32.totalorder %s22, 0
    %p235 = por %p233, %p234
    %p236 = scmp.ne.s32.totalorder %s224, %s225
    %p237 = scmp.eq.s32.totalorder %s23, 1
    %p238 = por %p236, %p237
    %p240 = scmp.ne.s32.totalorder %s225, %s239
    %p241 = scmp.eq.s32.totalorder %s23, 0
    %p242 = por %p240, %p241
    %s243 = ssub.s32 %s24, %s36
    %s244 = ssub.s32 %s25, %s32
    %s245 = sor.u32 %s243, %s244
    %p246 = scmp.eq.s32.totalorder %s245, 0
    %s248 = sadd.s32 %s247, 1
    %s249 = scalar_select %p246, %s247, %s248
    %p252 = pneg %p246
    %p253 = scmp.eq.s32.totalorder %s17, 1
    %p254 = por %p252, %p253
    %p255 = scmp.ne.s32.totalorder %s247, %s250
    %p256 = scmp.eq.s32.totalorder %s17, 0
    %p257 = por %p255, %p256
    %p258 = scmp.ne.s32.totalorder %s247, %s250
    %p259 = scmp.eq.s32.totalorder %s22, 1
    %p260 = por %p258, %p259
    %p261 = scmp.ne.s32.totalorder %s250, %s251
    %p262 = scmp.eq.s32.totalorder %s22, 0
    %p263 = por %p261, %p262
    %p264 = scmp.ne.s32.totalorder %s250, %s251
    %p265 = scmp.eq.s32.totalorder %s23, 1
    %p266 = por %p264, %p265
    %p268 = scmp.ne.s32.totalorder %s251, %s267
    %p269 = scmp.eq.s32.totalorder %s23, 0
    %p270 = por %p268, %p269
    %s271 = ssub.s32 %s24, %s36
    %s272 = ssub.s32 %s25, %s32
    %s273 = sor.u32 %s271, %s272
    %p274 = scmp.eq.s32.totalorder %s273, 0
    %s276 = sadd.s32 %s275, 1
    %s277 = scalar_select %p274, %s275, %s276
    %p280 = pneg %p274
    %p281 = scmp.eq.s32.totalorder %s17, 1
    %p282 = por %p280, %p281
    %p283 = scmp.ne.s32.totalorder %s275, %s278
    %p284 = scmp.eq.s32.totalorder %s17, 0
    %p285 = por %p283, %p284
    %p286 = scmp.ne.s32.totalorder %s275, %s278
    %p287 = scmp.eq.s32.totalorder %s22, 1
    %p288 = por %p286, %p287
    %p289 = scmp.ne.s32.totalorder %s278, %s279
    %p290 = scmp.eq.s32.totalorder %s22, 0
    %p291 = por %p289, %p290
    %p292 = scmp.ne.s32.totalorder %s278, %s279
    %p293 = scmp.eq.s32.totalorder %s23, 1
    %p294 = por %p292, %p293
    %p296 = scmp.ne.s32.totalorder %s279, %s295
    %p297 = scmp.eq.s32.totalorder %s23, 0
    %p298 = por %p296, %p297
    %p299 = scmp.le.s32.totalorder 1, %s17
    %p300 = scmp.lt.s32.totalorder %s17, 3
    %p301 = pnand %p299, %p300
    %p302 = pneg %p301
    // Predicated region
    $region9: #{transformer_decoder_forward.11} parent=5 // pred_check
      _
    $region10: #{transformer_decoder_forward.11} parent=5 // pred_check_branch
      %304 = sbr.rel (%p301) target = $region12
    $region11: #{transformer_decoder_forward.11} parent=5 // pred_region
      %s305 = ssub.s32 %s17, 1
      // Predicated region
      $region13: #{transformer_decoder_forward.11} parent=11 // pred_check
        %p306 = pneg %p102
      $region14: #{transformer_decoder_forward.11} parent=11 // pred_check_branch
        %308 = sbr.rel (%p306) target = $region16
      $region15: #{transformer_decoder_forward.11} parent=11 // pred_region
        _
      $region16: #{transformer_decoder_forward.11} parent=11 // pred_fallthru
        _
      // Predicated region
      $region17: #{transformer_decoder_forward.11} parent=11 // pred_check
        %p309 = pneg %p123
      $region18: #{transformer_decoder_forward.11} parent=11 // pred_check_branch
        %311 = sbr.rel (%p309) target = $region20
      $region19: #{transformer_decoder_forward.11} parent=11 // pred_region
        _
      $region20: #{transformer_decoder_forward.11} parent=11 // pred_fallthru
        _
      // Predicated region
      $region21: #{transformer_decoder_forward.11} parent=11 // pred_check
        %p312 = pneg %p172
      $region22: #{transformer_decoder_forward.11} parent=11 // pred_check_branch
        %314 = sbr.rel (%p312) target = $region24
      $region23: #{transformer_decoder_forward.11} parent=11 // pred_region
        _
      $region24: #{transformer_decoder_forward.11} parent=11 // pred_fallthru
        _
      // Predicated region
      $region25: #{transformer_decoder_forward.11} parent=11 // pred_check
        %p315 = pneg %p193
      $region26: #{transformer_decoder_forward.11} parent=11 // pred_check_branch
        %317 = sbr.rel (%p315) target = $region28
      $region27: #{transformer_decoder_forward.11} parent=11 // pred_region
        _
      $region28: #{transformer_decoder_forward.11} parent=11 // pred_fallthru
        _
      // Predicated region
      $region29: #{transformer_decoder_forward.11} parent=11 // pred_check
        %p318 = pneg %p214
      $region30: #{transformer_decoder_forward.11} parent=11 // pred_check_branch
        %320 = sbr.rel (%p318) target = $region32
      $region31: #{transformer_decoder_forward.11} parent=11 // pred_region
        _
      $region32: #{transformer_decoder_forward.11} parent=11 // pred_fallthru
        _
      // Predicated region
      $region33: #{transformer_decoder_forward.11} parent=11 // pred_check
        %p321 = pneg %p235
      $region34: #{transformer_decoder_forward.11} parent=11 // pred_check_branch
        %323 = sbr.rel (%p321) target = $region36
      $region35: #{transformer_decoder_forward.11} parent=11 // pred_region
        _
      $region36: #{transformer_decoder_forward.11} parent=11 // pred_fallthru
        _
    $region12: #{transformer_decoder_forward.11} parent=5 // pred_fallthru
      _
    %p324 = scmp.lt.s32.totalorder %s17, 2
    // Predicated region
    $region37: #{transformer_decoder_forward.11} parent=5 // pred_check
      %p325 = pneg %p324
    $region38: #{transformer_decoder_forward.11} parent=5 // pred_check_branch
      %327 = sbr.rel (%p325) target = $region40
    $region39: #{transformer_decoder_forward.11} parent=5 // pred_region
      // Predicated region
      $region41: #{transformer_decoder_forward.11} parent=39 // pred_check
        %p328 = pneg %p49
      $region42: #{transformer_decoder_forward.11} parent=39 // pred_check_branch
        %330 = sbr.rel (%p328) target = $region44
      $region43: #{transformer_decoder_forward.11} parent=39 // pred_region
        %p331 = scmp.lt.s32.totalorder %s24, 1
        %s332 = scalar_select %p331, %s24, 1
        %s333 = smul.addr %s332, 4
        %s334 = scalar_lea.vmem %s0, %s333
      $region44: #{transformer_decoder_forward.11} parent=39 // pred_fallthru
        _
      // Predicated region
      $region45: #{transformer_decoder_forward.11} parent=39 // pred_check
        %p335 = pneg %p75
      $region46: #{transformer_decoder_forward.11} parent=39 // pred_check_branch
        %337 = sbr.rel (%p335) target = $region48
      $region47: #{transformer_decoder_forward.11} parent=39 // pred_region
        %p338 = scmp.lt.s32.totalorder %s24, 1
        %s339 = scalar_select %p338, %s24, 1
        %s340 = scalar_lea.vmem %s1, %s339
      $region48: #{transformer_decoder_forward.11} parent=39 // pred_fallthru
        _
      // Predicated region
      $region49: #{transformer_decoder_forward.11} parent=39 // pred_check
        %p341 = pneg %p145
      $region50: #{transformer_decoder_forward.11} parent=39 // pred_check_branch
        %343 = sbr.rel (%p341) target = $region52
      $region51: #{transformer_decoder_forward.11} parent=39 // pred_region
        %p344 = scmp.lt.s32.totalorder %s24, 1
        %s345 = scalar_select %p344, %s24, 1
        %p346 = scmp.lt.s32.totalorder %s25, 0
        %s347 = scalar_select %p346, %s25, 0
        %s348 = sadd.s32 %s347, %s345
        %s349 = smul.addr %s348, 8
        %s350 = scalar_lea.vmem %s4, %s349
      $region52: #{transformer_decoder_forward.11} parent=39 // pred_fallthru
        _
    $region40: #{transformer_decoder_forward.11} parent=5 // pred_fallthru
      _
    %p351 = scmp.le.s32.totalorder 1, %s17
    %p352 = scmp.lt.s32.totalorder %s17, 3
    %p353 = pnand %p351, %p352
    %p354 = pneg %p353
    // Predicated region
    $region53: #{transformer_decoder_forward.11} parent=5 // pred_check
      _
    $region54: #{transformer_decoder_forward.11} parent=5 // pred_check_branch
      %356 = sbr.rel (%p353) target = $region56
    $region55: #{transformer_decoder_forward.11} parent=5 // pred_region
      %s357 = ssub.s32 %s17, 1
      %p358 = scmp.lt.s32.totalorder %s26, 1
      %s359 = scalar_select %p358, %s26, 1
      %s360 = smul.addr %s359, 4
      %s361 = scalar_lea.vmem %s0, %s360
      %p362 = pneg %p55
      %p363 = pneg %p52
      %p364 = scmp.lt.s32.totalorder %s26, 1
      %s365 = scalar_select %p364, %s26, 1
      %s366 = scalar_lea.vmem %s1, %s365
      %p367 = pneg %p81
      %p368 = pneg %p78
      %p369 = pneg %p102
      %p370 = pneg %p99
      %p371 = pneg %p123
      %p372 = pneg %p120
      %p373 = scmp.lt.s32.totalorder %s26, 1
      %s374 = scalar_select %p373, %s26, 1
      %p375 = scmp.lt.s32.totalorder %s27, 0
      %s376 = scalar_select %p375, %s27, 0
      %s377 = sadd.s32 %s376, %s374
      %s378 = smul.addr %s377, 8
      %s379 = scalar_lea.vmem %s4, %s378
      %p380 = pneg %p151
      %p381 = pneg %p148
      %p382 = pneg %p172
      %p383 = pneg %p169
      %p384 = pneg %p193
      %p385 = pneg %p190
      %p386 = pneg %p214
      %p387 = pneg %p211
      %p388 = pneg %p235
      %p389 = pneg %p232
      %p390 = pneg %p263
      %p391 = pneg %p260
      %p392 = scmp.lt.s32.totalorder %s26, 1
      %s393 = scalar_select %p392, %s26, 1
      %p394 = scmp.lt.s32.totalorder %s27, 0
      %s395 = scalar_select %p394, %s27, 0
      %s396 = sadd.s32 %s395, %s393
      %s397 = smul.addr %s396, 8
      %s398 = scalar_lea.vmem %s9, %s397
      %p399 = pneg %p291
      %p400 = pneg %p288
      %p401 = scmp.lt.s32.totalorder %s26, 1
      %s402 = scalar_select %p401, %s26, 1
      %p403 = scmp.lt.s32.totalorder %s27, 0
      %s404 = scalar_select %p403, %s27, 0
      %s405 = sadd.s32 %s404, %s402
      %s406 = smul.addr %s405, 4
      %s407 = scalar_lea.vmem %s10, %s406
      %p408 = scmp.lt.s32.totalorder %s26, 1
      %s409 = scalar_select %p408, %s26, 1
      %s410 = smul.addr %s409, 4
      %s411 = scalar_lea.vmem %s0, %s410
      %p412 = scmp.lt.s32.totalorder %s26, 1
      %s413 = scalar_select %p412, %s26, 1
      %s414 = scalar_lea.vmem %s1, %s413
      %p415 = scmp.lt.s32.totalorder %s26, 1
      %s416 = scalar_select %p415, %s26, 1
      %p417 = scmp.lt.s32.totalorder %s27, 0
      %s418 = scalar_select %p417, %s27, 0
      %s419 = sadd.s32 %s418, %s416
      %s420 = smul.addr %s419, 8
      %s421 = scalar_lea.vmem %s4, %s420
      %p422 = scmp.lt.s32.totalorder %s26, 1
      %s423 = scalar_select %p422, %s26, 1
      %p424 = scmp.lt.s32.totalorder %s27, 0
      %s425 = scalar_select %p424, %s27, 0
      %s426 = sadd.s32 %s425, %s423
      %s427 = smul.addr %s426, 8
      %s428 = scalar_lea.vmem %s9, %s427
      %p429 = scmp.lt.s32.totalorder %s26, 1
      %s430 = scalar_select %p429, %s26, 1
      %p431 = scmp.lt.s32.totalorder %s27, 0
      %s432 = scalar_select %p431, %s27, 0
      %s433 = sadd.s32 %s432, %s430
      %s434 = smul.addr %s433, 4
      %s435 = scalar_lea.vmem %s10, %s434
      %s437 = smul.u32 %s27, 8
      %s438 = sshra.s32 %s437, 3
      %s439 = sand.u32 %s437, 7
      %s440 = smul.addr %s438, 4
      %s441 = scalar_lea.vmem %s411, %s440
      %v442 = vld [vmem:[%s441] sm:$0xf]
      %v443 = vld [vmem:[%s411] sm:$0xf]
      %v444 = vld [vmem:[%s414] sm:$0x1]
      %vm445 = vcmp.gt.s32.totalorder %v444, 0
      %v446 = vlaneseq
      %v447 = vshrl.u32 %v446, 7
      %v448 = vstv %s437
      %v449 = vadd.s32 %v448, %v447
      %v450 = vlaneseq
      %v451 = vand.u32 %v450, 127
      %vm452 = vcmp.ge.s32.totalorder %v449, %v451
      %v453 = vsel %vm445, 1, 0
      %v454 = vperm.slane %v453, 0
      %vm455 = vcmp.eq.s32.totalorder %v454, 1
      %vm456 = vmand %vm452, %vm455
      %v457 = vsel %vm456, 0.0, -1e+30
      %v458 = vld [vmem:[%s2] sm:$0xf]
      %v459 = vld [vmem:[%s2 + $0x4] sm:$0xf]
      %v460 = vld [vmem:[%s2 + $0x8] sm:$0xf]
      %v461 = vld [vmem:[%s2 + $0xc] sm:$0xf]
      %v462 = vld [vmem:[%s3] sm:$0x1]
      %v463 = vld [vmem:[%s421] sm:$0xff]
      %v465 = vunpack.c.l.b16 %v443
      %v466 = vpack.c.b16 %v465, %v465
      %467 = vrot.lane.b32.xlu0 %v466, 96
      %v468 = vpop.permute.xlu0 %467
      %vm469 = vcmask 64512
      %v471 = vsel %vm469, %v442, 0
      %v474 = vsel %vm469, %v468, 0
      %476 = vmatpush.bf16.xpose.msra.mxu0 0
      %477 = vmatpush.bf16.xpose.msra.mxu0 0
      %478 = vmatpush.bf16.xpose.msra.mxu0 0
      %479 = vmatpush.bf16.xpose.msra.mxu0 0
      %480 = vmatpush.bf16.xpose.msra.mxu0 0
      %481 = vmatpush.bf16.xpose.msra.mxu0 0
      %482 = vmatpush.bf16.xpose.msra.mxu0 0
      %483 = vmatpush.bf16.xpose.msra.mxu0 %v474
      %484 = vmatmul.bf16.gmra.mxu0 %v471
      %v485 = vpop.f32.mrf.mxu0
      %v486 = vadd.f32 %v457, %v485
      %v487 = vpop.f32.mrf.mxu0
      %488 = vdwg.mxu0
      %v489 = vsel %vm469, %v486, -inf
      %490 = vmax.xlane.f32.xlu0 %v489
      %v491 = vpop.xlane.xlu0 %490
      %v492 = vsub.f32 %v486, %v491
      %v493 = vmul.f32 %v492, 1.442695
      %v494 = vpow.pop %v493
      %v495 = vsel %vm469, %v494, 0.0
      %496 = vadd.xlane.f32.xlu0 %v495
      %v497 = vpop.xlane.xlu0 %496
      %v498 = vrcp.pop %v497
      %v499 = vmul.f32 %v494, %v498
      %v500 = vpack.c.bf16 %v499, %v499
      %501 = vrot.lane.b32.xlu0 %v466, 64
      %v502 = vpop.permute.xlu0 %501
      %v504 = vsel %vm469, %v500, 0
      %vm506 = vcmask 1043456
      %v508 = vsel %vm506, %v502, 0
      %510 = vmatpush.bf16.msra.mxu0 0
      %511 = vmatpush.bf16.msra.mxu0 0
      %512 = vmatpush.bf16.msra.mxu0 0
      %513 = vmatpush.bf16.msra.mxu0 0
      %514 = vmatpush.bf16.msra.mxu0 0
      %515 = vmatpush.bf16.msra.mxu0 0
      %516 = vmatpush.bf16.msra.mxu0 0
      %517 = vmatpush.bf16.msra.mxu0 %v508
      %518 = vmatmul.bf16.gmra.mxu0 %v504
      %v519 = vpop.f32.mrf.mxu0
      %v520 = vadd.f32 0.0, %v519
      %v521 = vpop.f32.mrf.mxu0
      %522 = vdwg.mxu0
      %v524 = vunpack.c.l.b16 %v442
      %v525 = vpack.c.b16 %v524, %v524
      %526 = vrot.lane.b32.xlu0 %v525, 120
      %v527 = vpop.permute.xlu0 %526
      %528 = vrot.lane.b32.xlu0 %v466, 88
      %v529 = vpop.permute.xlu0 %528
      %v531 = vsel %vm469, %v527, 0
      %v534 = vsel %vm469, %v529, 0
      %536 = vmatpush.bf16.xpose.msra.mxu0 0
      %537 = vmatpush.bf16.xpose.msra.mxu0 0
      %538 = vmatpush.bf16.xpose.msra.mxu0 0
      %539 = vmatpush.bf16.xpose.msra.mxu0 0
      %540 = vmatpush.bf16.xpose.msra.mxu0 0
      %541 = vmatpush.bf16.xpose.msra.mxu0 0
      %542 = vmatpush.bf16.xpose.msra.mxu0 0
      %543 = vmatpush.bf16.xpose.msra.mxu0 %v534
      %544 = vmatmul.bf16.gmra.mxu0 %v531
      %v545 = vpop.f32.mrf.mxu0
      %v546 = vadd.f32 %v457, %v545
      %v547 = vpop.f32.mrf.mxu0
      %548 = vdwg.mxu0
      %v549 = vsel %vm469, %v546, -inf
      %550 = vmax.xlane.f32.xlu0 %v549
      %v551 = vpop.xlane.xlu0 %550
      %v552 = vsub.f32 %v546, %v551
      %v553 = vmul.f32 %v552, 1.442695
      %v554 = vpow.pop %v553
      %v555 = vsel %vm469, %v554, 0.0
      %556 = vadd.xlane.f32.xlu0 %v555
      %v557 = vpop.xlane.xlu0 %556
      %v558 = vrcp.pop %v557
      %v559 = vmul.f32 %v554, %v558
      %v560 = vpack.c.bf16 %v559, %v559
      %561 = vrot.lane.b32.xlu0 %v466, 56
      %v562 = vpop.permute.xlu0 %561
      %v564 = vsel %vm469, %v560, 0
      %v567 = vsel %vm506, %v562, 0
      %569 = vmatpush.bf16.msra.mxu0 0
      %570 = vmatpush.bf16.msra.mxu0 0
      %571 = vmatpush.bf16.msra.mxu0 0
      %572 = vmatpush.bf16.msra.mxu0 0
      %573 = vmatpush.bf16.msra.mxu0 0
      %574 = vmatpush.bf16.msra.mxu0 0
      %575 = vmatpush.bf16.msra.mxu0 0
      %576 = vmatpush.bf16.msra.mxu0 %v567
      %577 = vmatmul.bf16.gmra.mxu0 %v564
      %v578 = vpop.f32.mrf.mxu0
      %v579 = vadd.f32 0.0, %v578
      %v580 = vpop.f32.mrf.mxu0
      %581 = vdwg.mxu0
      %582 = vrot.lane.b32.xlu0 %v525, 112
      %v583 = vpop.permute.xlu0 %582
      %584 = vrot.lane.b32.xlu0 %v466, 80
      %v585 = vpop.permute.xlu0 %584
      %v587 = vsel %vm469, %v583, 0
      %v590 = vsel %vm469, %v585, 0
      %592 = vmatpush.bf16.xpose.msra.mxu0 0
      %593 = vmatpush.bf16.xpose.msra.mxu0 0
      %594 = vmatpush.bf16.xpose.msra.mxu0 0
      %595 = vmatpush.bf16.xpose.msra.mxu0 0
      %596 = vmatpush.bf16.xpose.msra.mxu0 0
      %597 = vmatpush.bf16.xpose.msra.mxu0 0
      %598 = vmatpush.bf16.xpose.msra.mxu0 0
      %599 = vmatpush.bf16.xpose.msra.mxu0 %v590
      %600 = vmatmul.bf16.gmra.mxu0 %v587
      %v601 = vpop.f32.mrf.mxu0
      %v602 = vadd.f32 %v457, %v601
      %v603 = vpop.f32.mrf.mxu0
      %604 = vdwg.mxu0
      %v605 = vsel %vm469, %v602, -inf
      %606 = vmax.xlane.f32.xlu0 %v605
      %v607 = vpop.xlane.xlu0 %606
      %v608 = vsub.f32 %v602, %v607
      %v609 = vmul.f32 %v608, 1.442695
      %v610 = vpow.pop %v609
      %v611 = vsel %vm469, %v610, 0.0
      %612 = vadd.xlane.f32.xlu0 %v611
      %v613 = vpop.xlane.xlu0 %612
      %v614 = vrcp.pop %v613
      %v615 = vmul.f32 %v610, %v614
      %v616 = vpack.c.bf16 %v615, %v615
      %617 = vrot.lane.b32.xlu0 %v466, 48
      %v618 = vpop.permute.xlu0 %617
      %v620 = vsel %vm469, %v616, 0
      %v623 = vsel %vm506, %v618, 0
      %625 = vmatpush.bf16.msra.mxu0 0
      %626 = vmatpush.bf16.msra.mxu0 0
      %627 = vmatpush.bf16.msra.mxu0 0
      %628 = vmatpush.bf16.msra.mxu0 0
      %629 = vmatpush.bf16.msra.mxu0 0
      %630 = vmatpush.bf16.msra.mxu0 0
      %631 = vmatpush.bf16.msra.mxu0 0
      %632 = vmatpush.bf16.msra.mxu0 %v623
      %633 = vmatmul.bf16.gmra.mxu0 %v620
      %v634 = vpop.f32.mrf.mxu0
      %v635 = vadd.f32 0.0, %v634
      %v636 = vpop.f32.mrf.mxu0
      %637 = vdwg.mxu0
      %638 = vrot.lane.b32.xlu0 %v525, 104
      %v639 = vpop.permute.xlu0 %638
      %640 = vrot.lane.b32.xlu0 %v466, 72
      %v641 = vpop.permute.xlu0 %640
      %v643 = vsel %vm469, %v639, 0
      %v646 = vsel %vm469, %v641, 0
      %648 = vmatpush.bf16.xpose.msra.mxu0 0
      %649 = vmatpush.bf16.xpose.msra.mxu0 0
      %650 = vmatpush.bf16.xpose.msra.mxu0 0
      %651 = vmatpush.bf16.xpose.msra.mxu0 0
      %652 = vmatpush.bf16.xpose.msra.mxu0 0
      %653 = vmatpush.bf16.xpose.msra.mxu0 0
      %654 = vmatpush.bf16.xpose.msra.mxu0 0
      %655 = vmatpush.bf16.xpose.msra.mxu0 %v646
      %656 = vmatmul.bf16.gmra.mxu0 %v643
      %v657 = vpop.f32.mrf.mxu0
      %v658 = vadd.f32 %v457, %v657
      %v659 = vpop.f32.mrf.mxu0
      %660 = vdwg.mxu0
      %v661 = vsel %vm469, %v658, -inf
      %662 = vmax.xlane.f32.xlu0 %v661
      %v663 = vpop.xlane.xlu0 %662
      %v664 = vsub.f32 %v658, %v663
      %v665 = vmul.f32 %v664, 1.442695
      %v666 = vpow.pop %v665
      %v667 = vsel %vm469, %v666, 0.0
      %668 = vadd.xlane.f32.xlu0 %v667
      %v669 = vpop.xlane.xlu0 %668
      %v670 = vrcp.pop %v669
      %v671 = vmul.f32 %v666, %v670
      %v672 = vpack.c.bf16 %v671, %v671
      %673 = vrot.lane.b32.xlu0 %v466, 40
      %v674 = vpop.permute.xlu0 %673
      %v676 = vsel %vm469, %v672, 0
      %v679 = vsel %vm506, %v674, 0
      %681 = vmatpush.bf16.msra.mxu0 0
      %682 = vmatpush.bf16.msra.mxu0 0
      %683 = vmatpush.bf16.msra.mxu0 0
      %684 = vmatpush.bf16.msra.mxu0 0
      %685 = vmatpush.bf16.msra.mxu0 0
      %686 = vmatpush.bf16.msra.mxu0 0
      %687 = vmatpush.bf16.msra.mxu0 0
      %688 = vmatpush.bf16.msra.mxu0 %v679
      %689 = vmatmul.bf16.gmra.mxu0 %v676
      %v690 = vpop.f32.mrf.mxu0
      %v691 = vadd.f32 0.0, %v690
      %v692 = vpop.f32.mrf.mxu0
      %693 = vdwg.mxu0
      %695 = vrot.lane.b32.xlu0 %v579, 8
      %v696 = vpop.permute.xlu0 %695
      %699 = vrot.lane.b32.xlu0 %v635, 16
      %v700 = vpop.permute.xlu0 %699
      %703 = vrot.lane.b32.xlu0 %v691, 24
      %v704 = vpop.permute.xlu0 %703
      %v706 = vsel %vm469, %v520, %v696
      %vm707 = vcmask 130048
      %v708 = vsel %vm707, %v706, %v700
      %vm709 = vcmask 195584
      %v710 = vsel %vm709, %v708, %v704
      %v711 = vpack.c.bf16 %v710, %v710
      %v713 = vperm.slane %v462, 0
      %v719 = vunpack.c.l.b16 %v458
      %v720 = vunpack.c.l.b16 %v459
      %v721 = vunpack.c.l.b16 %v460
      %v722 = vunpack.c.l.b16 %v461
      %v723 = vpack.c.b16 %v720, %v719
      %v724 = vpack.c.b16 %v722, %v721
      %vm727 = vcmask 261120
      %v729 = vsel %vm727, %v711, 0
      %731 = vmatpush.bf16.msra.mxu0 0
      %732 = vmatpush.bf16.msra.mxu0 0
      %733 = vmatpush.bf16.msra.mxu0 0
      %734 = vmatpush.bf16.msra.mxu0 0
      %735 = vmatpush.bf16.msra.mxu0 0
      %736 = vmatpush.bf16.msra.mxu0 0
      %737 = vmatpush.bf16.msra.mxu0 %v724
      %738 = vmatpush.bf16.msra.mxu0 %v723
      %739 = vmatmul.bf16.gmra.mxu0 %v729
      %v740 = vpop.f32.mrf.mxu0
      %v741 = vadd.f32 %v713, %v740
      %v742 = vpop.f32.mrf.mxu0
      %743 = vdwg.mxu0
      %v744 = vadd.f32 %v741, %v463
      %745 = vst.msk [vmem:[%s428] sm:$0xff] %vm727, %v744
      %v746 = vld [vmem:[%s5] sm:$0x1]
      %v747 = vld [vmem:[%s6] sm:$0x1]
      %v748 = vsel %vm727, %v744, 0.0
      %749 = vadd.xlane.f32.xlu0 %v748
      %v750 = vpop.xlane.xlu0 %749
      %v751 = vrcp.pop 32.0
      %v752 = vmul.f32 32.0, %v751
      %v753 = vsub.f32 1.0, %v752
      %v754 = vmul.f32 %v751, %v753
      %v755 = vadd.f32 %v751, %v754
      %vm756 = vweird.f32 %v751
      %v757 = vsel %vm756, %v751, %v755
      %v758 = vmul.f32 %v750, %v757
      %v759 = vsub.f32 %v744, %v758
      %v760 = vmul.f32 %v759, %v759
      %v761 = vsel %vm727, %v760, 0.0
      %762 = vadd.xlane.f32.xlu0 %v761
      %v763 = vpop.xlane.xlu0 %762
      %v764 = vmul.f32 %v763, %v757
      %v765 = vadd.f32 %v764, 1e-05
      %v766 = vrsqrt.pop %v765
      %v767 = vmul.f32 %v766, %v765
      %v768 = vmul.f32 %v767, %v766
      %v769 = vmul.f32 0.5, %v768
      %v770 = vsub.f32 1.5, %v769
      %v771 = vmul.f32 %v766, %v770
      %vm772 = vweird.f32 %v765
      %vm773 = vweird.f32 %v766
      %vm774 = vmor %vm772, %vm773
      %v775 = vsel %vm774, %v766, %v771
      %v776 = vmul.f32 %v759, %v775
      %v778 = vperm.slane %v746, 0
      %v780 = vmul.f32 %v776, %v778
      %v782 = vperm.slane %v747, 0
      %v784 = vadd.f32 %v780, %v782
      %v785 = vpack.c.bf16 %v784, %v784
      %v786 = vld [vmem:[%s7] sm:$0xf]
      %v787 = vld [vmem:[%s7 + $0x4] sm:$0xf]
      %v788 = vld [vmem:[%s7 + $0x8] sm:$0xf]
      %v789 = vld [vmem:[%s7 + $0xc] sm:$0xf]
      %v790 = vld [vmem:[%s8] sm:$0x1]
      %v792 = vperm.slane %v790, 0
      %v798 = vunpack.c.l.b16 %v786
      %v799 = vunpack.c.l.b16 %v787
      %v800 = vunpack.c.l.b16 %v788
      %v801 = vunpack.c.l.b16 %v789
      %v802 = vpack.c.b16 %v799, %v798
      %v803 = vpack.c.b16 %v801, %v800
      %v807 = vsel %vm727, %v785, 0
      %809 = vmatpush.bf16.msra.mxu0 0
      %810 = vmatpush.bf16.msra.mxu0 0
      %811 = vmatpush.bf16.msra.mxu0 0
      %812 = vmatpush.bf16.msra.mxu0 0
      %813 = vmatpush.bf16.msra.mxu0 0
      %814 = vmatpush.bf16.msra.mxu0 0
      %815 = vmatpush.bf16.msra.mxu0 %v803
      %816 = vmatpush.bf16.msra.mxu0 %v802
      %817 = vmatmul.bf16.gmra.mxu0 %v807
      %v818 = vpop.f32.mrf.mxu0
      %v819 = vadd.f32 %v792, %v818
      %v820 = vpop.f32.mrf.mxu0
      %821 = vdwg.mxu0
      %v822 = vpack.c.bf16 %v819, %v819
      %vm823 = vcmask 257024
      %824 = vst.msk [vmem:[%s435] sm:$0xf] %vm823, %v822
      %p825 = scmp.lt.s32.totalorder %s26, 1
      %s826 = scalar_select %p825, %s26, 1
      %p827 = scmp.lt.s32.totalorder %s27, 0
      %s828 = scalar_select %p827, %s27, 0
      %s829 = sadd.s32 %s828, %s826
      %s830 = smul.addr %s829, 8
      %s831 = scalar_lea.vmem %s9, %s830
      %p832 = scmp.lt.s32.totalorder %s26, 1
      %s833 = scalar_select %p832, %s26, 1
      %p834 = scmp.lt.s32.totalorder %s27, 0
      %s835 = scalar_select %p834, %s27, 0
      %s836 = sadd.s32 %s835, %s833
      %s837 = smul.addr %s836, 4
      %s838 = scalar_lea.vmem %s10, %s837
      // Predicated region
      $region57: #{transformer_decoder_forward.11} parent=55 // pred_check
        %p839 = pneg %p260
      $region58: #{transformer_decoder_forward.11} parent=55 // pred_check_branch
        %841 = sbr.rel (%p839) target = $region60
      $region59: #{transformer_decoder_forward.11} parent=55 // pred_region
        _
      $region60: #{transformer_decoder_forward.11} parent=55 // pred_fallthru
        _
      // Predicated region
      $region61: #{transformer_decoder_forward.11} parent=55 // pred_check
        %p842 = pneg %p288
      $region62: #{transformer_decoder_forward.11} parent=55 // pred_check_branch
        %844 = sbr.rel (%p842) target = $region64
      $region63: #{transformer_decoder_forward.11} parent=55 // pred_region
        _
      $region64: #{transformer_decoder_forward.11} parent=55 // pred_fallthru
        _
    $region56: #{transformer_decoder_forward.11} parent=5 // pred_fallthru
      _
    %p845 = scmp.le.s32.totalorder 2, %s17
    // Predicated region
    $region65: #{transformer_decoder_forward.11} parent=5 // pred_check
      %p846 = pneg %p845
    $region66: #{transformer_decoder_forward.11} parent=5 // pred_check_branch
      %848 = sbr.rel (%p846) target = $region68
    $region67: #{transformer_decoder_forward.11} parent=5 // pred_region
      %s849 = ssub.s32 %s17, 2
      // Predicated region
      $region69: #{transformer_decoder_forward.11} parent=67 // pred_check
        %p850 = pneg %p266
      $region70: #{transformer_decoder_forward.11} parent=67 // pred_check_branch
        %852 = sbr.rel (%p850) target = $region72
      $region71: #{transformer_decoder_forward.11} parent=67 // pred_region
        %p853 = scmp.lt.s32.totalorder %s28, 1
        %s854 = scalar_select %p853, %s28, 1
        %p855 = scmp.lt.s32.totalorder %s29, 0
        %s856 = scalar_select %p855, %s29, 0
        %s857 = sadd.s32 %s856, %s854
        %s858 = smul.addr %s857, 8
        %s859 = scalar_lea.vmem %s9, %s858
      $region72: #{transformer_decoder_forward.11} parent=67 // pred_fallthru
        _
      // Predicated region
      $region73: #{transformer_decoder_forward.11} parent=67 // pred_check
        %p860 = pneg %p294
      $region74: #{transformer_decoder_forward.11} parent=67 // pred_check_branch
        %862 = sbr.rel (%p860) target = $region76
      $region75: #{transformer_decoder_forward.11} parent=67 // pred_region
        %p863 = scmp.lt.s32.totalorder %s28, 1
        %s864 = scalar_select %p863, %s28, 1
        %p865 = scmp.lt.s32.totalorder %s29, 0
        %s866 = scalar_select %p865, %s29, 0
        %s867 = sadd.s32 %s866, %s864
        %s868 = smul.addr %s867, 4
        %s869 = scalar_lea.vmem %s10, %s868
      $region76: #{transformer_decoder_forward.11} parent=67 // pred_fallthru
        _
    $region68: #{transformer_decoder_forward.11} parent=5 // pred_fallthru
      _
  $region6: #{transformer_decoder_forward.11} parent=0 // loop_footer
    %s21 = sadd.s32 1, %s17
  $region7: #{transformer_decoder_forward.11} parent=0 // loop_footer_branch
    %16 = sbr.rel target = $region3
  $region8: #{transformer_decoder_forward.11} parent=0 // loop_exit
    _

// kernel: transformer_decoder_forward.13
$region0: #{transformer_decoder_forward.13}
  #allocation0 [shape = 'u32[]', space=smem, size = 0x4, offset = 0x4, fixed_abs, tag = 'smem constant byte address 0x4 - core index']
  #allocation1 [shape = 'u32[72,128]{1,0:T(1,128)}', space=vmem, size = 0x9000, scoped, tag = 'internal scratch']
  %s0 = inlined_call_operand.vmem [shape: bf16[2,8,32], index: 0, kind: input, shape index: {}]
  %s1 = inlined_call_operand.vmem [shape: bf16[2,8,64], index: 1, kind: input, shape index: {}]
  %s2 = inlined_call_operand.vmem [shape: s32[2,1,8], index: 2, kind: input, shape index: {}]
  %s3 = inlined_call_operand.vmem [shape: bf16[32,32], index: 3, kind: input, shape index: {}]
  %s4 = inlined_call_operand.vmem [shape: f32[1,32], index: 4, kind: input, shape index: {}]
  %s5 = inlined_call_operand.vmem [shape: f32[2,8,32], index: 5, kind: input, shape index: {}]
  %s6 = inlined_call_operand.vmem [shape: f32[2,8,32], index: 6, kind: output, shape index: {}]
  %s7 = sld [smem:[#allocation0]]
  $region57: #{transformer_decoder_forward.13} parent=0
    _
  %s9 = ssub.s32 1, %s7
  %s10 = scalar_select 0, %s9, %s7
  loop: start=0, step=1, limit=4
  $region2: #{transformer_decoder_forward.13} parent=0 // loop_pre_header
    _
  $region3: #{transformer_decoder_forward.13} parent=0 // loop_header
    %s12 = sphi 0, %s16
    %p13 = scmp.ge.s32.totalorder %s12, 4
    %s19 = sphi 0, %s31
    %s20 = sphi 0, %s27
    %s21 = sphi 0, %s19
    %s22 = sphi 0, %s20
    %s23 = sphi 0, %s21
    %s24 = sphi 0, %s22
    %s36 = sphi 0, %s38
    %s39 = sphi 0, %s36
    %s40 = sphi 0, %s39
    %s56 = sphi 0, %s40
    %s62 = sphi 0, %s64
    %s65 = sphi 0, %s62
    %s66 = sphi 0, %s65
    %s82 = sphi 0, %s66
    %s88 = sphi 0, %s90
    %s91 = sphi 0, %s88
    %s92 = sphi 0, %s91
    %s108 = sphi 0, %s92
    %s112 = sphi 0, %s112
    %s114 = sphi 0, %s112
    %s115 = sphi 0, %s114
    %s129 = sphi 0, %s115
    %s133 = sphi 0, %s133
    %s135 = sphi 0, %s133
    %s136 = sphi 0, %s135
    %s150 = sphi 0, %s136
    %s158 = sphi 0, %s160
    %s161 = sphi 0, %s158
    %s162 = sphi 0, %s161
    %s178 = sphi 0, %s162
    %s186 = sphi 0, %s188
    %s189 = sphi 0, %s186
    %s190 = sphi 0, %s189
    %s206 = sphi 0, %s190
  $region4: #{transformer_decoder_forward.13} parent=0 // loop_header_branch
    %15 = sbr.rel (%p13) target = $region8
  $region5: #{transformer_decoder_forward.13} parent=0 // loop_body
    %s17 = ssub.s32 %s12, 1
    %s18 = ssub.s32 %s12, 2
    %s25 = sadd.s32 1, %s20
    %p26 = scmp.ge.s32.totalorder %s25, 1
    %s27 = scalar_select %p26, 0, %s25
    %s28 = sadd.s32 1, %s19
    %s29 = scalar_select %p26, %s28, %s19
    %p30 = scmp.ge.s32.totalorder %s29, 2
    %s31 = scalar_select %p30, 0, %s29
    %s32 = ssub.s32 %s19, %s31
    %s33 = ssub.s32 %s20, %s27
    %s34 = sor.u32 %s32, %s33
    %p35 = scmp.eq.s32.totalorder %s34, 0
    %s37 = sadd.s32 %s36, 1
    %s38 = scalar_select %p35, %s36, %s37
    %p41 = pneg %p35
    %p42 = scmp.eq.s32.totalorder %s12, 1
    %p43 = por %p41, %p42
    %p44 = scmp.ne.s32.totalorder %s36, %s39
    %p45 = scmp.eq.s32.totalorder %s12, 0
    %p46 = por %p44, %p45
    %p47 = scmp.ne.s32.totalorder %s36, %s39
    %p48 = scmp.eq.s32.totalorder %s17, 1
    %p49 = por %p47, %p48
    %p50 = scmp.ne.s32.totalorder %s39, %s40
    %p51 = scmp.eq.s32.totalorder %s17, 0
    %p52 = por %p50, %p51
    %p53 = scmp.ne.s32.totalorder %s39, %s40
    %p54 = scmp.eq.s32.totalorder %s18, 1
    %p55 = por %p53, %p54
    %p57 = scmp.ne.s32.totalorder %s40, %s56
    %p58 = scmp.eq.s32.totalorder %s18, 0
    %p59 = por %p57, %p58
    %s60 = ssub.s32 %s19, %s31
    %p61 = scmp.eq.s32.totalorder %s60, 0
    %s63 = sadd.s32 %s62, 1
    %s64 = scalar_select %p61, %s62, %s63
    %p67 = pneg %p61
    %p68 = scmp.eq.s32.totalorder %s12, 1
    %p69 = por %p67, %p68
    %p70 = scmp.ne.s32.totalorder %s62, %s65
    %p71 = scmp.eq.s32.totalorder %s12, 0
    %p72 = por %p70, %p71
    %p73 = scmp.ne.s32.totalorder %s62, %s65
    %p74 = scmp.eq.s32.totalorder %s17, 1
    %p75 = por %p73, %p74
    %p76 = scmp.ne.s32.totalorder %s65, %s66
    %p77 = scmp.eq.s32.totalorder %s17, 0
    %p78 = por %p76, %p77
    %p79 = scmp.ne.s32.totalorder %s65, %s66
    %p80 = scmp.eq.s32.totalorder %s18, 1
    %p81 = por %p79, %p80
    %p83 = scmp.ne.s32.totalorder %s66, %s82
    %p84 = scmp.eq.s32.totalorder %s18, 0
    %p85 = por %p83, %p84
    %s86 = ssub.s32 %s19, %s31
    %p87 = scmp.eq.s32.totalorder %s86, 0
    %s89 = sadd.s32 %s88, 1
    %s90 = scalar_select %p87, %s88, %s89
    %p93 = pneg %p87
    %p94 = scmp.eq.s32.totalorder %s12, 1
    %p95 = por %p93, %p94
    %p96 = scmp.ne.s32.totalorder %s88, %s91
    %p97 = scmp.eq.s32.totalorder %s12, 0
    %p98 = por %p96, %p97
    %p99 = scmp.ne.s32.totalorder %s88, %s91
    %p100 = scmp.eq.s32.totalorder %s17, 1
    %p101 = por %p99, %p100
    %p102 = scmp.ne.s32.totalorder %s91, %s92
    %p103 = scmp.eq.s32.totalorder %s17, 0
    %p104 = por %p102, %p103
    %p105 = scmp.ne.s32.totalorder %s91, %s92
    %p106 = scmp.eq.s32.totalorder %s18, 1
    %p107 = por %p105, %p106
    %p109 = scmp.ne.s32.totalorder %s92, %s108
    %p110 = scmp.eq.s32.totalorder %s18, 0
    %p111 = por %p109, %p110
    %s113 = sadd.s32 %s112, 1
    %p116 = scmp.eq.s32.totalorder %s12, 1
    %p117 = scmp.ne.s32.totalorder %s112, %s114
    %p118 = scmp.eq.s32.totalorder %s12, 0
    %p119 = por %p117, %p118
    %p120 = scmp.ne.s32.totalorder %s112, %s114
    %p121 = scmp.eq.s32.totalorder %s17, 1
    %p122 = por %p120, %p121
    %p123 = scmp.ne.s32.totalorder %s114, %s115
    %p124 = scmp.eq.s32.totalorder %s17, 0
    %p125 = por %p123, %p124
    %p126 = scmp.ne.s32.totalorder %s114, %s115
    %p127 = scmp.eq.s32.totalorder %s18, 1
    %p128 = por %p126, %p127
    %p130 = scmp.ne.s32.totalorder %s115, %s129
    %p131 = scmp.eq.s32.totalorder %s18, 0
    %p132 = por %p130, %p131
    %s134 = sadd.s32 %s133, 1
    %p137 = scmp.eq.s32.totalorder %s12, 1
    %p138 = scmp.ne.s32.totalorder %s133, %s135
    %p139 = scmp.eq.s32.totalorder %s12, 0
    %p140 = por %p138, %p139
    %p141 = scmp.ne.s32.totalorder %s133, %s135
    %p142 = scmp.eq.s32.totalorder %s17, 1
    %p143 = por %p141, %p142
    %p144 = scmp.ne.s32.totalorder %s135, %s136
    %p145 = scmp.eq.s32.totalorder %s17, 0
    %p146 = por %p144, %p145
    %p147 = scmp.ne.s32.totalorder %s135, %s136
    %p148 = scmp.eq.s32.totalorder %s18, 1
    %p149 = por %p147, %p148
    %p151 = scmp.ne.s32.totalorder %s136, %s150
    %p152 = scmp.eq.s32.totalorder %s18, 0
    %p153 = por %p151, %p152
    %s154 = ssub.s32 %s19, %s31
    %s155 = ssub.s32 %s20, %s27
    %s156 = sor.u32 %s154, %s155
    %p157 = scmp.eq.s32.totalorder %s156, 0
    %s159 = sadd.s32 %s158, 1
    %s160 = scalar_select %p157, %s158, %s159
    %p163 = pneg %p157
    %p164 = scmp.eq.s32.totalorder %s12, 1
    %p165 = por %p163, %p164
    %p166 = scmp.ne.s32.totalorder %s158, %s161
    %p167 = scmp.eq.s32.totalorder %s12, 0
    %p168 = por %p166, %p167
    %p169 = scmp.ne.s32.totalorder %s158, %s161
    %p170 = scmp.eq.s32.totalorder %s17, 1
    %p171 = por %p169, %p170
    %p172 = scmp.ne.s32.totalorder %s161, %s162
    %p173 = scmp.eq.s32.totalorder %s17, 0
    %p174 = por %p172, %p173
    %p175 = scmp.ne.s32.totalorder %s161, %s162
    %p176 = scmp.eq.s32.totalorder %s18, 1
    %p177 = por %p175, %p176
    %p179 = scmp.ne.s32.totalorder %s162, %s178
    %p180 = scmp.eq.s32.totalorder %s18, 0
    %p181 = por %p179, %p180
    %s182 = ssub.s32 %s19, %s31
    %s183 = ssub.s32 %s20, %s27
    %s184 = sor.u32 %s182, %s183
    %p185 = scmp.eq.s32.totalorder %s184, 0
    %s187 = sadd.s32 %s186, 1
    %s188 = scalar_select %p185, %s186, %s187
    %p191 = pneg %p185
    %p192 = scmp.eq.s32.totalorder %s12, 1
    %p193 = por %p191, %p192
    %p194 = scmp.ne.s32.totalorder %s186, %s189
    %p195 = scmp.eq.s32.totalorder %s12, 0
    %p196 = por %p194, %p195
    %p197 = scmp.ne.s32.totalorder %s186, %s189
    %p198 = scmp.eq.s32.totalorder %s17, 1
    %p199 = por %p197, %p198
    %p200 = scmp.ne.s32.totalorder %s189, %s190
    %p201 = scmp.eq.s32.totalorder %s17, 0
    %p202 = por %p200, %p201
    %p203 = scmp.ne.s32.totalorder %s189, %s190
    %p204 = scmp.eq.s32.totalorder %s18, 1
    %p205 = por %p203, %p204
    %p207 = scmp.ne.s32.totalorder %s190, %s206
    %p208 = scmp.eq.s32.totalorder %s18, 0
    %p209 = por %p207, %p208
    %p210 = scmp.le.s32.totalorder 1, %s12
    %p211 = scmp.lt.s32.totalorder %s12, 3
    %p212 = pnand %p210, %p211
    %p213 = pneg %p212
    // Predicated region
    $region9: #{transformer_decoder_forward.13} parent=5 // pred_check
      _
    $region10: #{transformer_decoder_forward.13} parent=5 // pred_check_branch
      %215 = sbr.rel (%p212) target = $region12
    $region11: #{transformer_decoder_forward.13} parent=5 // pred_region
      %s216 = ssub.s32 %s12, 1
      // Predicated region
      $region13: #{transformer_decoder_forward.13} parent=11 // pred_check
        %p217 = pneg %p125
      $region14: #{transformer_decoder_forward.13} parent=11 // pred_check_branch
        %219 = sbr.rel (%p217) target = $region16
      $region15: #{transformer_decoder_forward.13} parent=11 // pred_region
        _
      $region16: #{transformer_decoder_forward.13} parent=11 // pred_fallthru
        _
      // Predicated region
      $region17: #{transformer_decoder_forward.13} parent=11 // pred_check
        %p220 = pneg %p146
      $region18: #{transformer_decoder_forward.13} parent=11 // pred_check_branch
        %222 = sbr.rel (%p220) target = $region20
      $region19: #{transformer_decoder_forward.13} parent=11 // pred_region
        _
      $region20: #{transformer_decoder_forward.13} parent=11 // pred_fallthru
        _
    $region12: #{transformer_decoder_forward.13} parent=5 // pred_fallthru
      _
    %p223 = scmp.lt.s32.totalorder %s12, 2
    // Predicated region
    $region21: #{transformer_decoder_forward.13} parent=5 // pred_check
      %p224 = pneg %p223
    $region22: #{transformer_decoder_forward.13} parent=5 // pred_check_branch
      %226 = sbr.rel (%p224) target = $region24
    $region23: #{transformer_decoder_forward.13} parent=5 // pred_region
      // Predicated region
      $region25: #{transformer_decoder_forward.13} parent=23 // pred_check
        %p227 = pneg %p46
      $region26: #{transformer_decoder_forward.13} parent=23 // pred_check_branch
        %229 = sbr.rel (%p227) target = $region28
      $region27: #{transformer_decoder_forward.13} parent=23 // pred_region
        %p230 = scmp.lt.s32.totalorder %s19, 1
        %s231 = scalar_select %p230, %s19, 1
        %p232 = scmp.lt.s32.totalorder %s20, 0
        %s233 = scalar_select %p232, %s20, 0
        %s234 = sadd.s32 %s233, %s231
        %s235 = smul.addr %s234, 4
        %s236 = scalar_lea.vmem %s0, %s235
      $region28: #{transformer_decoder_forward.13} parent=23 // pred_fallthru
        _
      // Predicated region
      $region29: #{transformer_decoder_forward.13} parent=23 // pred_check
        %p237 = pneg %p72
      $region30: #{transformer_decoder_forward.13} parent=23 // pred_check_branch
        %239 = sbr.rel (%p237) target = $region32
      $region31: #{transformer_decoder_forward.13} parent=23 // pred_region
        %p240 = scmp.lt.s32.totalorder %s19, 1
        %s241 = scalar_select %p240, %s19, 1
        %s242 = smul.addr %s241, 4
        %s243 = scalar_lea.vmem %s1, %s242
      $region32: #{transformer_decoder_forward.13} parent=23 // pred_fallthru
        _
      // Predicated region
      $region33: #{transformer_decoder_forward.13} parent=23 // pred_check
        %p244 = pneg %p98
      $region34: #{transformer_decoder_forward.13} parent=23 // pred_check_branch
        %246 = sbr.rel (%p244) target = $region36
      $region35: #{transformer_decoder_forward.13} parent=23 // pred_region
        %p247 = scmp.lt.s32.totalorder %s19, 1
        %s248 = scalar_select %p247, %s19, 1
        %s249 = scalar_lea.vmem %s2, %s248
      $region36: #{transformer_decoder_forward.13} parent=23 // pred_fallthru
        _
      // Predicated region
      $region37: #{transformer_decoder_forward.13} parent=23 // pred_check
        %p250 = pneg %p168
      $region38: #{transformer_decoder_forward.13} parent=23 // pred_check_branch
        %252 = sbr.rel (%p250) target = $region40
      $region39: #{transformer_decoder_forward.13} parent=23 // pred_region
        %p253 = scmp.lt.s32.totalorder %s19, 1
        %s254 = scalar_select %p253, %s19, 1
        %p255 = scmp.lt.s32.totalorder %s20, 0
        %s256 = scalar_select %p255, %s20, 0
        %s257 = sadd.s32 %s256, %s254
        %s258 = smul.addr %s257, 8
        %s259 = scalar_lea.vmem %s5, %s258
      $region40: #{transformer_decoder_forward.13} parent=23 // pred_fallthru
        _
    $region24: #{transformer_decoder_forward.13} parent=5 // pred_fallthru
      _
    %p260 = scmp.le.s32.totalorder 1, %s12
    %p261 = scmp.lt.s32.totalorder %s12, 3
    %p262 = pnand %p260, %p261
    %p263 = pneg %p262
    // Predicated region
    $region41: #{transformer_decoder_forward.13} parent=5 // pred_check
      _
    $region42: #{transformer_decoder_forward.13} parent=5 // pred_check_branch
      %265 = sbr.rel (%p262) target = $region44
    $region43: #{transformer_decoder_forward.13} parent=5 // pred_region
      %s266 = ssub.s32 %s12, 1
      %p267 = scmp.lt.s32.totalorder %s21, 1
      %s268 = scalar_select %p267, %s21, 1
      %p269 = scmp.lt.s32.totalorder %s22, 0
      %s270 = scalar_select %p269, %s22, 0
      %s271 = sadd.s32 %s270, %s268
      %s272 = smul.addr %s271, 4
      %s273 = scalar_lea.vmem %s0, %s272
      %p274 = pneg %p52
      %p275 = pneg %p49
      %p276 = scmp.lt.s32.totalorder %s21, 1
      %s277 = scalar_select %p276, %s21, 1
      %s278 = smul.addr %s277, 4
      %s279 = scalar_lea.vmem %s1, %s278
      %p280 = pneg %p78
      %p281 = pneg %p75
      %p282 = scmp.lt.s32.totalorder %s21, 1
      %s283 = scalar_select %p282, %s21, 1
      %s284 = scalar_lea.vmem %s2, %s283
      %p285 = pneg %p104
      %p286 = pneg %p101
      %p287 = pneg %p125
      %p288 = pneg %p122
      %p289 = pneg %p146
      %p290 = pneg %p143
      %p291 = scmp.lt.s32.totalorder %s21, 1
      %s292 = scalar_select %p291, %s21, 1
      %p293 = scmp.lt.s32.totalorder %s22, 0
      %s294 = scalar_select %p293, %s22, 0
      %s295 = sadd.s32 %s294, %s292
      %s296 = smul.addr %s295, 8
      %s297 = scalar_lea.vmem %s5, %s296
      %p298 = pneg %p174
      %p299 = pneg %p171
      %p300 = pneg %p202
      %p301 = pneg %p199
      %p302 = scmp.lt.s32.totalorder %s21, 1
      %s303 = scalar_select %p302, %s21, 1
      %p304 = scmp.lt.s32.totalorder %s22, 0
      %s305 = scalar_select %p304, %s22, 0
      %s306 = sadd.s32 %s305, %s303
      %s307 = smul.addr %s306, 8
      %s308 = scalar_lea.vmem %s6, %s307
      %p309 = scmp.lt.s32.totalorder %s21, 1
      %s310 = scalar_select %p309, %s21, 1
      %p311 = scmp.lt.s32.totalorder %s22, 0
      %s312 = scalar_select %p311, %s22, 0
      %s313 = sadd.s32 %s312, %s310
      %s314 = smul.addr %s313, 4
      %s315 = scalar_lea.vmem %s0, %s314
      %p316 = scmp.lt.s32.totalorder %s21, 1
      %s317 = scalar_select %p316, %s21, 1
      %s318 = smul.addr %s317, 4
      %s319 = scalar_lea.vmem %s1, %s318
      %p320 = scmp.lt.s32.totalorder %s21, 1
      %s321 = scalar_select %p320, %s21, 1
      %s322 = scalar_lea.vmem %s2, %s321
      %p323 = scmp.lt.s32.totalorder %s21, 1
      %s324 = scalar_select %p323, %s21, 1
      %p325 = scmp.lt.s32.totalorder %s22, 0
      %s326 = scalar_select %p325, %s22, 0
      %s327 = sadd.s32 %s326, %s324
      %s328 = smul.addr %s327, 8
      %s329 = scalar_lea.vmem %s5, %s328
      %p330 = scmp.lt.s32.totalorder %s21, 1
      %s331 = scalar_select %p330, %s21, 1
      %p332 = scmp.lt.s32.totalorder %s22, 0
      %s333 = scalar_select %p332, %s22, 0
      %s334 = sadd.s32 %s333, %s331
      %s335 = smul.addr %s334, 8
      %s336 = scalar_lea.vmem %s6, %s335
      %v338 = vld [vmem:[%s315] sm:$0xf]
      %v339 = vld [vmem:[%s319] sm:$0xf]
      %v340 = vld [vmem:[%s322] sm:$0x1]
      %vm341 = vcmp.gt.s32.totalorder %v340, 0
      %v342 = vsel %vm341, 0.0, -1e+30
      %v343 = vld [vmem:[%s3] sm:$0xf]
      %v344 = vld [vmem:[%s3 + $0x4] sm:$0xf]
      %v345 = vld [vmem:[%s3 + $0x8] sm:$0xf]
      %v346 = vld [vmem:[%s3 + $0xc] sm:$0xf]
      %v347 = vld [vmem:[%s4] sm:$0x1]
      %v348 = vld [vmem:[%s329] sm:$0xff]
      %v350 = vperm.slane %v342, 0
      %vm352 = vcmask 64512
      %v354 = vsel %vm352, %v338, 0
      %v357 = vsel %vm352, %v339, 0
      %359 = vmatpush.bf16.xpose.msra.mxu0 0
      %360 = vmatpush.bf16.xpose.msra.mxu0 0
      %361 = vmatpush.bf16.xpose.msra.mxu0 0
      %362 = vmatpush.bf16.xpose.msra.mxu0 0
      %363 = vmatpush.bf16.xpose.msra.mxu0 0
      %364 = vmatpush.bf16.xpose.msra.mxu0 0
      %365 = vmatpush.bf16.xpose.msra.mxu0 0
      %366 = vmatpush.bf16.xpose.msra.mxu0 %v357
      %367 = vmatmul.bf16.gmra.mxu0 %v354
      %v368 = vpop.f32.mrf.mxu0
      %v369 = vadd.f32 %v350, %v368
      %v370 = vpop.f32.mrf.mxu0
      %371 = vdwg.mxu0
      %v372 = vsel %vm352, %v369, -inf
      %373 = vmax.xlane.f32.xlu0 %v372
      %v374 = vpop.xlane.xlu0 %373
      %v375 = vsub.f32 %v369, %v374
      %v376 = vmul.f32 %v375, 1.442695
      %v377 = vpow.pop %v376
      %v378 = vsel %vm352, %v377, 0.0
      %379 = vadd.xlane.f32.xlu0 %v378
      %v380 = vpop.xlane.xlu0 %379
      %v381 = vrcp.pop %v380
      %v382 = vmul.f32 %v377, %v381
      %v383 = vpack.c.bf16 %v382, %v382
      %v385 = vunpack.c.l.b16 %v339
      %v386 = vpack.c.b16 %v385, %v385
      %387 = vrot.lane.b32.xlu0 %v386, 96
      %v388 = vpop.permute.xlu0 %387
      %v390 = vsel %vm352, %v383, 0
      %vm392 = vcmask 1043456
      %v394 = vsel %vm392, %v388, 0
      %396 = vmatpush.bf16.msra.mxu0 0
      %397 = vmatpush.bf16.msra.mxu0 0
      %398 = vmatpush.bf16.msra.mxu0 0
      %399 = vmatpush.bf16.msra.mxu0 0
      %400 = vmatpush.bf16.msra.mxu0 0
      %401 = vmatpush.bf16.msra.mxu0 0
      %402 = vmatpush.bf16.msra.mxu0 0
      %403 = vmatpush.bf16.msra.mxu0 %v394
      %404 = vmatmul.bf16.gmra.mxu0 %v390
      %v405 = vpop.f32.mrf.mxu0
      %v406 = vadd.f32 0.0, %v405
      %v407 = vpop.f32.mrf.mxu0
      %408 = vdwg.mxu0
      %v410 = vunpack.c.l.b16 %v338
      %v411 = vpack.c.b16 %v410, %v410
      %412 = vrot.lane.b32.xlu0 %v411, 120
      %v413 = vpop.permute.xlu0 %412
      %414 = vrot.lane.b32.xlu0 %v386, 120
      %v415 = vpop.permute.xlu0 %414
      %v417 = vsel %vm352, %v413, 0
      %v420 = vsel %vm352, %v415, 0
      %422 = vmatpush.bf16.xpose.msra.mxu0 0
      %423 = vmatpush.bf16.xpose.msra.mxu0 0
      %424 = vmatpush.bf16.xpose.msra.mxu0 0
      %425 = vmatpush.bf16.xpose.msra.mxu0 0
      %426 = vmatpush.bf16.xpose.msra.mxu0 0
      %427 = vmatpush.bf16.xpose.msra.mxu0 0
      %428 = vmatpush.bf16.xpose.msra.mxu0 0
      %429 = vmatpush.bf16.xpose.msra.mxu0 %v420
      %430 = vmatmul.bf16.gmra.mxu0 %v417
      %v431 = vpop.f32.mrf.mxu0
      %v432 = vadd.f32 %v350, %v431
      %v433 = vpop.f32.mrf.mxu0
      %434 = vdwg.mxu0
      %v435 = vsel %vm352, %v432, -inf
      %436 = vmax.xlane.f32.xlu0 %v435
      %v437 = vpop.xlane.xlu0 %436
      %v438 = vsub.f32 %v432, %v437
      %v439 = vmul.f32 %v438, 1.442695
      %v440 = vpow.pop %v439
      %v441 = vsel %vm352, %v440, 0.0
      %442 = vadd.xlane.f32.xlu0 %v441
      %v443 = vpop.xlane.xlu0 %442
      %v444 = vrcp.pop %v443
      %v445 = vmul.f32 %v440, %v444
      %v446 = vpack.c.bf16 %v445, %v445
      %447 = vrot.lane.b32.xlu0 %v386, 88
      %v448 = vpop.permute.xlu0 %447
      %v450 = vsel %vm352, %v446, 0
      %v453 = vsel %vm392, %v448, 0
      %455 = vmatpush.bf16.msra.mxu0 0
      %456 = vmatpush.bf16.msra.mxu0 0
      %457 = vmatpush.bf16.msra.mxu0 0
      %458 = vmatpush.bf16.msra.mxu0 0
      %459 = vmatpush.bf16.msra.mxu0 0
      %460 = vmatpush.bf16.msra.mxu0 0
      %461 = vmatpush.bf16.msra.mxu0 0
      %462 = vmatpush.bf16.msra.mxu0 %v453
      %463 = vmatmul.bf16.gmra.mxu0 %v450
      %v464 = vpop.f32.mrf.mxu0
      %v465 = vadd.f32 0.0, %v464
      %v466 = vpop.f32.mrf.mxu0
      %467 = vdwg.mxu0
      %468 = vrot.lane.b32.xlu0 %v411, 112
      %v469 = vpop.permute.xlu0 %468
      %470 = vrot.lane.b32.xlu0 %v386, 112
      %v471 = vpop.permute.xlu0 %470
      %v473 = vsel %vm352, %v469, 0
      %v476 = vsel %vm352, %v471, 0
      %478 = vmatpush.bf16.xpose.msra.mxu0 0
      %479 = vmatpush.bf16.xpose.msra.mxu0 0
      %480 = vmatpush.bf16.xpose.msra.mxu0 0
      %481 = vmatpush.bf16.xpose.msra.mxu0 0
      %482 = vmatpush.bf16.xpose.msra.mxu0 0
      %483 = vmatpush.bf16.xpose.msra.mxu0 0
      %484 = vmatpush.bf16.xpose.msra.mxu0 0
      %485 = vmatpush.bf16.xpose.msra.mxu0 %v476
      %486 = vmatmul.bf16.gmra.mxu0 %v473
      %v487 = vpop.f32.mrf.mxu0
      %v488 = vadd.f32 %v350, %v487
      %v489 = vpop.f32.mrf.mxu0
      %490 = vdwg.mxu0
      %v491 = vsel %vm352, %v488, -inf
      %492 = vmax.xlane.f32.xlu0 %v491
      %v493 = vpop.xlane.xlu0 %492
      %v494 = vsub.f32 %v488, %v493
      %v495 = vmul.f32 %v494, 1.442695
      %v496 = vpow.pop %v495
      %v497 = vsel %vm352, %v496, 0.0
      %498 = vadd.xlane.f32.xlu0 %v497
      %v499 = vpop.xlane.xlu0 %498
      %v500 = vrcp.pop %v499
      %v501 = vmul.f32 %v496, %v500
      %v502 = vpack.c.bf16 %v501, %v501
      %503 = vrot.lane.b32.xlu0 %v386, 80
      %v504 = vpop.permute.xlu0 %503
      %v506 = vsel %vm352, %v502, 0
      %v509 = vsel %vm392, %v504, 0
      %511 = vmatpush.bf16.msra.mxu0 0
      %512 = vmatpush.bf16.msra.mxu0 0
      %513 = vmatpush.bf16.msra.mxu0 0
      %514 = vmatpush.bf16.msra.mxu0 0
      %515 = vmatpush.bf16.msra.mxu0 0
      %516 = vmatpush.bf16.msra.mxu0 0
      %517 = vmatpush.bf16.msra.mxu0 0
      %518 = vmatpush.bf16.msra.mxu0 %v509
      %519 = vmatmul.bf16.gmra.mxu0 %v506
      %v520 = vpop.f32.mrf.mxu0
      %v521 = vadd.f32 0.0, %v520
      %v522 = vpop.f32.mrf.mxu0
      %523 = vdwg.mxu0
      %524 = vrot.lane.b32.xlu0 %v411, 104
      %v525 = vpop.permute.xlu0 %524
      %526 = vrot.lane.b32.xlu0 %v386, 104
      %v527 = vpop.permute.xlu0 %526
      %v529 = vsel %vm352, %v525, 0
      %v532 = vsel %vm352, %v527, 0
      %534 = vmatpush.bf16.xpose.msra.mxu0 0
      %535 = vmatpush.bf16.xpose.msra.mxu0 0
      %536 = vmatpush.bf16.xpose.msra.mxu0 0
      %537 = vmatpush.bf16.xpose.msra.mxu0 0
      %538 = vmatpush.bf16.xpose.msra.mxu0 0
      %539 = vmatpush.bf16.xpose.msra.mxu0 0
      %540 = vmatpush.bf16.xpose.msra.mxu0 0
      %541 = vmatpush.bf16.xpose.msra.mxu0 %v532
      %542 = vmatmul.bf16.gmra.mxu0 %v529
      %v543 = vpop.f32.mrf.mxu0
      %v544 = vadd.f32 %v350, %v543
      %v545 = vpop.f32.mrf.mxu0
      %546 = vdwg.mxu0
      %v547 = vsel %vm352, %v544, -inf
      %548 = vmax.xlane.f32.xlu0 %v547
      %v549 = vpop.xlane.xlu0 %548
      %v550 = vsub.f32 %v544, %v549
      %v551 = vmul.f32 %v550, 1.442695
      %v552 = vpow.pop %v551
      %v553 = vsel %vm352, %v552, 0.0
      %554 = vadd.xlane.f32.xlu0 %v553
      %v555 = vpop.xlane.xlu0 %554
      %v556 = vrcp.pop %v555
      %v557 = vmul.f32 %v552, %v556
      %v558 = vpack.c.bf16 %v557, %v557
      %559 = vrot.lane.b32.xlu0 %v386, 72
      %v560 = vpop.permute.xlu0 %559
      %v562 = vsel %vm352, %v558, 0
      %v565 = vsel %vm392, %v560, 0
      %567 = vmatpush.bf16.msra.mxu0 0
      %568 = vmatpush.bf16.msra.mxu0 0
      %569 = vmatpush.bf16.msra.mxu0 0
      %570 = vmatpush.bf16.msra.mxu0 0
      %571 = vmatpush.bf16.msra.mxu0 0
      %572 = vmatpush.bf16.msra.mxu0 0
      %573 = vmatpush.bf16.msra.mxu0 0
      %574 = vmatpush.bf16.msra.mxu0 %v565
      %575 = vmatmul.bf16.gmra.mxu0 %v562
      %v576 = vpop.f32.mrf.mxu0
      %v577 = vadd.f32 0.0, %v576
      %v578 = vpop.f32.mrf.mxu0
      %579 = vdwg.mxu0
      %581 = vrot.lane.b32.xlu0 %v465, 8
      %v582 = vpop.permute.xlu0 %581
      %585 = vrot.lane.b32.xlu0 %v521, 16
      %v586 = vpop.permute.xlu0 %585
      %589 = vrot.lane.b32.xlu0 %v577, 24
      %v590 = vpop.permute.xlu0 %589
      %v592 = vsel %vm352, %v406, %v582
      %vm593 = vcmask 130048
      %v594 = vsel %vm593, %v592, %v586
      %vm595 = vcmask 195584
      %v596 = vsel %vm595, %v594, %v590
      %v597 = vpack.c.bf16 %v596, %v596
      %v599 = vperm.slane %v347, 0
      %v605 = vunpack.c.l.b16 %v343
      %v606 = vunpack.c.l.b16 %v344
      %v607 = vunpack.c.l.b16 %v345
      %v608 = vunpack.c.l.b16 %v346
      %v609 = vpack.c.b16 %v606, %v605
      %v610 = vpack.c.b16 %v608, %v607
      %vm613 = vcmask 261120
      %v615 = vsel %vm613, %v597, 0
      %617 = vmatpush.bf16.msra.mxu0 0
      %618 = vmatpush.bf16.msra.mxu0 0
      %619 = vmatpush.bf16.msra.mxu0 0
      %620 = vmatpush.bf16.msra.mxu0 0
      %621 = vmatpush.bf16.msra.mxu0 0
      %622 = vmatpush.bf16.msra.mxu0 0
      %623 = vmatpush.bf16.msra.mxu0 %v610
      %624 = vmatpush.bf16.msra.mxu0 %v609
      %625 = vmatmul.bf16.gmra.mxu0 %v615
      %v626 = vpop.f32.mrf.mxu0
      %v627 = vadd.f32 %v599, %v626
      %v628 = vpop.f32.mrf.mxu0
      %629 = vdwg.mxu0
      %v630 = vadd.f32 %v627, %v348
      %631 = vst.msk [vmem:[%s336] sm:$0xff] %vm613, %v630
      %p632 = scmp.lt.s32.totalorder %s21, 1
      %s633 = scalar_select %p632, %s21, 1
      %p634 = scmp.lt.s32.totalorder %s22, 0
      %s635 = scalar_select %p634, %s22, 0
      %s636 = sadd.s32 %s635, %s633
      %s637 = smul.addr %s636, 8
      %s638 = scalar_lea.vmem %s6, %s637
      // Predicated region
      $region45: #{transformer_decoder_forward.13} parent=43 // pred_check
        %p639 = pneg %p199
      $region46: #{transformer_decoder_forward.13} parent=43 // pred_check_branch
        %641 = sbr.rel (%p639) target = $region48
      $region47: #{transformer_decoder_forward.13} parent=43 // pred_region
        _
      $region48: #{transformer_decoder_forward.13} parent=43 // pred_fallthru
        _
    $region44: #{transformer_decoder_forward.13} parent=5 // pred_fallthru
      _
    %p642 = scmp.le.s32.totalorder 2, %s12
    // Predicated region
    $region49: #{transformer_decoder_forward.13} parent=5 // pred_check
      %p643 = pneg %p642
    $region50: #{transformer_decoder_forward.13} parent=5 // pred_check_branch
      %645 = sbr.rel (%p643) target = $region52
    $region51: #{transformer_decoder_forward.13} parent=5 // pred_region
      %s646 = ssub.s32 %s12, 2
      // Predicated region
      $region53: #{transformer_decoder_forward.13} parent=51 // pred_check
        %p647 = pneg %p205
      $region54: #{transformer_decoder_forward.13} parent=51 // pred_check_branch
        %649 = sbr.rel (%p647) target = $region56
      $region55: #{transformer_decoder_forward.13} parent=51 // pred_region
        %p650 = scmp.lt.s32.totalorder %s23, 1
        %s651 = scalar_select %p650, %s23, 1
        %p652 = scmp.lt.s32.totalorder %s24, 0
        %s653 = scalar_select %p652, %s24, 0
        %s654 = sadd.s32 %s653, %s651
        %s655 = smul.addr %s654, 8
        %s656 = scalar_lea.vmem %s6, %s655
      $region56: #{transformer_decoder_forward.13} parent=51 // pred_fallthru
        _
    $region52: #{transformer_decoder_forward.13} parent=5 // pred_fallthru
      _
  $region6: #{transformer_decoder_forward.13} parent=0 // loop_footer
    %s16 = sadd.s32 1, %s12
  $region7: #{transformer_decoder_forward.13} parent=0 // loop_footer_branch
    %11 = sbr.rel target = $region3
  $region8: #{transformer_decoder_forward.13} parent=0 // loop_exit
    _

// kernel: transformer_decoder_forward.14
$region0: #{transformer_decoder_forward.14}
  #allocation0 [shape = 'u32[]', space=smem, size = 0x4, offset = 0x4, fixed_abs, tag = 'smem constant byte address 0x4 - core index']
  #allocation1 [shape = 'u32[72,128]{1,0:T(1,128)}', space=vmem, size = 0x9000, scoped, tag = 'internal scratch']
  #allocation2 [shape = 'f32[16,32]{1,0:T(8,128)}', space=vmem, size = 0x2000, scoped, tag = 'scratch operand']
  #allocation3 [shape = 'bf16[16,32]{1,0:T(8,128)(2,1)}', space=vmem, size = 0x1000, scoped, tag = 'scratch operand']
  %s0 = inlined_call_operand.vmem [shape: f32[16,32], index: 0, kind: input, shape index: {}]
  %s1 = inlined_call_operand.vmem [shape: f32[1,32], index: 1, kind: input, shape index: {}]
  %s2 = inlined_call_operand.vmem [shape: f32[1,32], index: 2, kind: input, shape index: {}]
  %s3 = inlined_call_operand.vmem [shape: bf16[32,64], index: 3, kind: input, shape index: {}]
  %s4 = inlined_call_operand.vmem [shape: f32[1,64], index: 4, kind: input, shape index: {}]
  %s5 = inlined_call_operand.vmem [shape: bf16[64,32], index: 5, kind: input, shape index: {}]
  %s6 = inlined_call_operand.vmem [shape: f32[1,32], index: 6, kind: input, shape index: {}]
  %s7 = inlined_call_operand.vmem [shape: f32[16,32], index: 7, kind: output, shape index: {}]
  %s8 = sld [smem:[#allocation0]]
  $region46: #{transformer_decoder_forward.14} parent=0
    _
  %s10 = ssub.s32 1, %s8
  %s11 = scalar_select 0, %s10, %s8
  // Predicated region
  $region2: #{transformer_decoder_forward.14} parent=0 // pred_check
    _
  $region3: #{transformer_decoder_forward.14} parent=0 // pred_check_branch
    %13 = sbr.rel (0) target = $region5
  $region4: #{transformer_decoder_forward.14} parent=0 // pred_region
    _
  $region5: #{transformer_decoder_forward.14} parent=0 // pred_fallthru
    _
  // Predicated region
  $region6: #{transformer_decoder_forward.14} parent=0 // pred_check
    _
  $region7: #{transformer_decoder_forward.14} parent=0 // pred_check_branch
    %15 = sbr.rel (0) target = $region9
  $region8: #{transformer_decoder_forward.14} parent=0 // pred_region
    _
  $region9: #{transformer_decoder_forward.14} parent=0 // pred_fallthru
    _
  // Predicated region
  $region10: #{transformer_decoder_forward.14} parent=0 // pred_check
    _
  $region11: #{transformer_decoder_forward.14} parent=0 // pred_check_branch
    %17 = sbr.rel (0) target = $region13
  $region12: #{transformer_decoder_forward.14} parent=0 // pred_region
    _
  $region13: #{transformer_decoder_forward.14} parent=0 // pred_fallthru
    _
  // Predicated region
  $region14: #{transformer_decoder_forward.14} parent=0 // pred_check
    _
  $region15: #{transformer_decoder_forward.14} parent=0 // pred_check_branch
    %19 = sbr.rel (0) target = $region17
  $region16: #{transformer_decoder_forward.14} parent=0 // pred_region
    _
  $region17: #{transformer_decoder_forward.14} parent=0 // pred_fallthru
    _
  // Predicated region
  $region18: #{transformer_decoder_forward.14} parent=0 // pred_check
    _
  $region19: #{transformer_decoder_forward.14} parent=0 // pred_check_branch
    %21 = sbr.rel (0) target = $region21
  $region20: #{transformer_decoder_forward.14} parent=0 // pred_region
    _
  $region21: #{transformer_decoder_forward.14} parent=0 // pred_fallthru
    _
  // Predicated region
  $region22: #{transformer_decoder_forward.14} parent=0 // pred_check
    _
  $region23: #{transformer_decoder_forward.14} parent=0 // pred_check_branch
    %23 = sbr.rel (0) target = $region25
  $region24: #{transformer_decoder_forward.14} parent=0 // pred_region
    _
  $region25: #{transformer_decoder_forward.14} parent=0 // pred_fallthru
    _
  // Predicated region
  $region26: #{transformer_decoder_forward.14} parent=0 // pred_check
    _
  $region27: #{transformer_decoder_forward.14} parent=0 // pred_check_branch
    %25 = sbr.rel (0) target = $region29
  $region28: #{transformer_decoder_forward.14} parent=0 // pred_region
    _
  $region29: #{transformer_decoder_forward.14} parent=0 // pred_fallthru
    _
  %p27 = scmp.eq.s32.totalorder 0, 0
  // Predicated region
  $region30: #{transformer_decoder_forward.14} parent=0 // pred_check
    %p28 = pneg %p27
  $region31: #{transformer_decoder_forward.14} parent=0 // pred_check_branch
    %30 = sbr.rel (%p28) target = $region33
  $region32: #{transformer_decoder_forward.14} parent=0 // pred_region
    %v31 = vld [vmem:[%s0] sm:$0xff]
    %v32 = vld [vmem:[%s0 + $0x8] sm:$0xff]
    %v33 = vld [vmem:[%s1] sm:$0x1]
    %v34 = vld [vmem:[%s2] sm:$0x1]
    %vm35 = vcmask 261120
    %v36 = vsel %vm35, %v31, 0.0
    %37 = vadd.xlane.f32.xlu0 %v36
    %v38 = vpop.xlane.xlu0 %37
    %v39 = vsel %vm35, %v32, 0.0
    %40 = vadd.xlane.f32.xlu0 %v39
    %v41 = vpop.xlane.xlu0 %40
    %v42 = vrcp.pop 32.0
    %v43 = vmul.f32 32.0, %v42
    %v44 = vsub.f32 1.0, %v43
    %v45 = vmul.f32 %v42, %v44
    %v46 = vadd.f32 %v42, %v45
    %vm47 = vweird.f32 %v42
    %v48 = vsel %vm47, %v42, %v46
    %v49 = vmul.f32 %v38, %v48
    %v50 = vmul.f32 %v41, %v48
    %v51 = vsub.f32 %v31, %v49
    %v52 = vsub.f32 %v32, %v50
    %v53 = vmul.f32 %v51, %v51
    %v54 = vmul.f32 %v52, %v52
    %v55 = vsel %vm35, %v53, 0.0
    %56 = vadd.xlane.f32.xlu0 %v55
    %v57 = vpop.xlane.xlu0 %56
    %v58 = vsel %vm35, %v54, 0.0
    %59 = vadd.xlane.f32.xlu0 %v58
    %v60 = vpop.xlane.xlu0 %59
    %v61 = vmul.f32 %v57, %v48
    %v62 = vmul.f32 %v60, %v48
    %v63 = vadd.f32 %v61, 1e-05
    %v64 = vadd.f32 %v62, 1e-05
    %v65 = vrsqrt.pop %v63
    %v66 = vmul.f32 %v65, %v63
    %v67 = vmul.f32 %v66, %v65
    %v68 = vmul.f32 0.5, %v67
    %v69 = vsub.f32 1.5, %v68
    %v70 = vmul.f32 %v65, %v69
    %vm71 = vweird.f32 %v63
    %vm72 = vweird.f32 %v65
    %vm73 = vmor %vm71, %vm72
    %v74 = vsel %vm73, %v65, %v70
    %v75 = vrsqrt.pop %v64
    %v76 = vmul.f32 %v75, %v64
    %v77 = vmul.f32 %v76, %v75
    %v78 = vmul.f32 0.5, %v77
    %v79 = vsub.f32 1.5, %v78
    %v80 = vmul.f32 %v75, %v79
    %vm81 = vweird.f32 %v64
    %vm82 = vweird.f32 %v75
    %vm83 = vmor %vm81, %vm82
    %v84 = vsel %vm83, %v75, %v80
    %v85 = vmul.f32 %v51, %v74
    %v86 = vmul.f32 %v52, %v84
    %v88 = vperm.slane %v33, 0
    %v90 = vmul.f32 %v85, %v88
    %v91 = vmul.f32 %v86, %v88
    %v93 = vperm.slane %v34, 0
    %v95 = vadd.f32 %v90, %v93
    %v96 = vadd.f32 %v91, %v93
    %v97 = vpack.c.bf16 %v95, %v95
    %v98 = vpack.c.bf16 %v96, %v96
    %vm99 = vcmask 257024
    %100 = vst.msk [vmem:[#allocation3] sm:$0xf] %vm99, %v97
    %101 = vst.msk [vmem:[#allocation3 + $0x4] sm:$0xf] %vm99, %v98
    %102 = vst.msk [vmem:[#allocation2] sm:$0xff] %vm35, 0.0
    %103 = vst.msk [vmem:[#allocation2 + $0x8] sm:$0xff] %vm35, 0.0
  $region33: #{transformer_decoder_forward.14} parent=0 // pred_fallthru
    _
  %v104 = vld [vmem:[#allocation3] sm:$0xf]
  %v105 = vld [vmem:[#allocation3 + $0x4] sm:$0xf]
  %v106 = vld [vmem:[%s3] sm:$0xf]
  %v107 = vld [vmem:[%s3 + $0x4] sm:$0xf]
  %v108 = vld [vmem:[%s3 + $0x8] sm:$0xf]
  %v109 = vld [vmem:[%s3 + $0xc] sm:$0xf]
  %v110 = vld [vmem:[%s4] sm:$0x1]
  %v112 = vperm.slane %v110, 0
  %v116 = vunpack.c.l.b16 %v104
  %v117 = vunpack.c.l.b16 %v105
  %v118 = vpack.c.b16 %v117, %v116
  %v123 = vunpack.c.l.b16 %v106
  %v124 = vunpack.c.l.b16 %v107
  %v125 = vunpack.c.l.b16 %v108
  %v126 = vunpack.c.l.b16 %v109
  %v127 = vpack.c.b16 %v124, %v123
  %v128 = vpack.c.b16 %v126, %v125
  %vm131 = vcmask 261120
  %v133 = vsel %vm131, %v118, 0
  %135 = vmatpush.bf16.msra.mxu0 0
  %136 = vmatpush.bf16.msra.mxu0 0
  %137 = vmatpush.bf16.msra.mxu0 0
  %138 = vmatpush.bf16.msra.mxu0 0
  %139 = vmatpush.bf16.msra.mxu0 0
  %140 = vmatpush.bf16.msra.mxu0 0
  %141 = vmatpush.bf16.msra.mxu0 %v128
  %142 = vmatpush.bf16.msra.mxu0 %v127
  %143 = vmatmul.bf16.gmra.mxu0 %v133
  %v144 = vpop.f32.mrf.mxu0
  %v145 = vadd.f32 %v112, %v144
  %v146 = vpop.f32.mrf.mxu0
  %v147 = vadd.f32 %v112, %v146
  %148 = vdwg.mxu0
  %v149 = vmax.f32 %v145, 0.0
  %v150 = vmax.f32 %v147, 0.0
  %v151 = vld [vmem:[#allocation2] sm:$0xff]
  %v152 = vld [vmem:[#allocation2 + $0x8] sm:$0xff]
  %v153 = vpack.c.bf16 %v150, %v149
  %v154 = vld [vmem:[%s5] sm:$0xf]
  %v155 = vld [vmem:[%s5 + $0x4] sm:$0xf]
  %v156 = vld [vmem:[%s5 + $0x8] sm:$0xf]
  %v157 = vld [vmem:[%s5 + $0xc] sm:$0xf]
  %v158 = vld [vmem:[%s5 + $0x10] sm:$0xf]
  %v159 = vld [vmem:[%s5 + $0x14] sm:$0xf]
  %v160 = vld [vmem:[%s5 + $0x18] sm:$0xf]
  %v161 = vld [vmem:[%s5 + $0x1c] sm:$0xf]
  %v170 = vunpack.c.l.b16 %v154
  %v171 = vunpack.c.l.b16 %v155
  %v172 = vunpack.c.l.b16 %v156
  %v173 = vunpack.c.l.b16 %v157
  %v174 = vunpack.c.l.b16 %v158
  %v175 = vunpack.c.l.b16 %v159
  %v176 = vunpack.c.l.b16 %v160
  %v177 = vunpack.c.l.b16 %v161
  %v178 = vpack.c.b16 %v171, %v170
  %v179 = vpack.c.b16 %v173, %v172
  %v180 = vpack.c.b16 %v175, %v174
  %v181 = vpack.c.b16 %v177, %v176
  %vm186 = vcmask 523264
  %v188 = vsel %vm186, %v153, 0
  %190 = vmatpush.bf16.msra.mxu0 0
  %191 = vmatpush.bf16.msra.mxu0 0
  %192 = vmatpush.bf16.msra.mxu0 0
  %193 = vmatpush.bf16.msra.mxu0 0
  %194 = vmatpush.bf16.msra.mxu0 %v181
  %195 = vmatpush.bf16.msra.mxu0 %v180
  %196 = vmatpush.bf16.msra.mxu0 %v179
  %197 = vmatpush.bf16.msra.mxu0 %v178
  %198 = vmatmul.bf16.gmra.mxu0 %v188
  %v199 = vpop.f32.mrf.mxu0
  %v200 = vadd.f32 0.0, %v199
  %v201 = vpop.f32.mrf.mxu0
  %v202 = vadd.f32 0.0, %v201
  %203 = vdwg.mxu0
  %v204 = vadd.f32 %v151, %v200
  %v205 = vadd.f32 %v152, %v202
  %206 = vst.msk [vmem:[#allocation2] sm:$0xff] %vm131, %v204
  %207 = vst.msk [vmem:[#allocation2 + $0x8] sm:$0xff] %vm131, %v205
  // Predicated region
  $region34: #{transformer_decoder_forward.14} parent=0 // pred_check
    %p208 = pneg %p27
  $region35: #{transformer_decoder_forward.14} parent=0 // pred_check_branch
    %210 = sbr.rel (%p208) target = $region37
  $region36: #{transformer_decoder_forward.14} parent=0 // pred_region
    %v211 = vld [vmem:[#allocation2] sm:$0xff]
    %v212 = vld [vmem:[#allocation2 + $0x8] sm:$0xff]
    %v213 = vld [vmem:[%s6] sm:$0x1]
    %v215 = vperm.slane %v213, 0
    %v217 = vadd.f32 %v211, %v215
    %v218 = vadd.f32 %v212, %v215
    %v219 = vld [vmem:[%s0] sm:$0xff]
    %v220 = vld [vmem:[%s0 + $0x8] sm:$0xff]
    %v221 = vadd.f32 %v217, %v219
    %v222 = vadd.f32 %v218, %v220
    %223 = vst.msk [vmem:[%s7] sm:$0xff] %vm131, %v221
    %224 = vst.msk [vmem:[%s7 + $0x8] sm:$0xff] %vm131, %v222
  $region37: #{transformer_decoder_forward.14} parent=0 // pred_fallthru
    _
  // Predicated region
  $region38: #{transformer_decoder_forward.14} parent=0 // pred_check
    _
  $region39: #{transformer_decoder_forward.14} parent=0 // pred_check_branch
    %226 = sbr.rel (0) target = $region41
  $region40: #{transformer_decoder_forward.14} parent=0 // pred_region
    _
  $region41: #{transformer_decoder_forward.14} parent=0 // pred_fallthru
    _
  // Predicated region
  $region42: #{transformer_decoder_forward.14} parent=0 // pred_check
    _
  $region43: #{transformer_decoder_forward.14} parent=0 // pred_check_branch
    %228 = sbr.rel (0) target = $region45
  $region44: #{transformer_decoder_forward.14} parent=0 // pred_region
    _
  $region45: #{transformer_decoder_forward.14} parent=0 // pred_fallthru
    _

// kernel: transformer_decoder_forward.18
$region0: #{transformer_decoder_forward.18}
  #allocation0 [shape = 'u32[]', space=smem, size = 0x4, offset = 0x4, fixed_abs, tag = 'smem constant byte address 0x4 - core index']
  #allocation1 [shape = 'u32[72,128]{1,0:T(1,128)}', space=vmem, size = 0x9000, scoped, tag = 'internal scratch']
  %s0 = inlined_call_operand.vmem [shape: bf16[2,8,32], index: 0, kind: input, shape index: {}]
  %s1 = inlined_call_operand.vmem [shape: bf16[2,8,64], index: 1, kind: input, shape index: {}]
  %s2 = inlined_call_operand.vmem [shape: s32[2,1,8], index: 2, kind: input, shape index: {}]
  %s3 = inlined_call_operand.vmem [shape: bf16[32,32], index: 3, kind: input, shape index: {}]
  %s4 = inlined_call_operand.vmem [shape: f32[1,32], index: 4, kind: input, shape index: {}]
  %s5 = inlined_call_operand.vmem [shape: f32[2,8,32], index: 5, kind: input, shape index: {}]
  %s6 = inlined_call_operand.vmem [shape: f32[2,8,32], index: 6, kind: output, shape index: {0}]
  %s7 = inlined_call_operand.hbm [shape: f32[2,8,8], index: 7, kind: output, shape index: {1}]
  %8 = xla_tuple %s6, %s7
  %s9 = sld [smem:[#allocation0]]
  $region65: #{transformer_decoder_forward.18} parent=0
    _
  %s11 = ssub.s32 1, %s9
  %s12 = scalar_select 0, %s11, %s9
  $region1: #{transformer_decoder_forward.18} parent=0
    #allocation2 [shape = 'u8[8192]{0}', space=vmem, size = 0x2000, scoped, tag = 'output window, operand 1']
    #allocation3 [shape = 's32[2]{0}', space=sflag, size = 0x8, scoped, tag = 'scoped memory for transformer_decoder_forward.18']
    %13 = vsyncpa [#allocation3], 0
    %s14 = scalar_lea.sflag [#allocation3], 1
    %15 = vsyncpa %s14, 0
    loop: start=0, step=1, limit=4
    $region2: #{transformer_decoder_forward.18} parent=1 // loop_pre_header
      _
    $region3: #{transformer_decoder_forward.18} parent=1 // loop_header
      %s17 = sphi 0, %s21
      %p18 = scmp.ge.s32.totalorder %s17, 4
      %s24 = sphi 0, %s36
      %s25 = sphi 0, %s32
      %s26 = sphi 0, %s24
      %s27 = sphi 0, %s25
      %s28 = sphi 0, %s26
      %s29 = sphi 0, %s27
      %s41 = sphi 0, %s43
      %s44 = sphi 0, %s41
      %s45 = sphi 0, %s44
      %s61 = sphi 0, %s45
      %s67 = sphi 0, %s69
      %s70 = sphi 0, %s67
      %s71 = sphi 0, %s70
      %s87 = sphi 0, %s71
      %s93 = sphi 0, %s95
      %s96 = sphi 0, %s93
      %s97 = sphi 0, %s96
      %s113 = sphi 0, %s97
      %s117 = sphi 0, %s117
      %s119 = sphi 0, %s117
      %s120 = sphi 0, %s119
      %s134 = sphi 0, %s120
      %s138 = sphi 0, %s138
      %s140 = sphi 0, %s138
      %s141 = sphi 0, %s140
      %s155 = sphi 0, %s141
      %s163 = sphi 0, %s165
      %s166 = sphi 0, %s163
      %s167 = sphi 0, %s166
      %s183 = sphi 0, %s167
      %s191 = sphi 0, %s193
      %s194 = sphi 0, %s191
      %s195 = sphi 0, %s194
      %s211 = sphi 0, %s195
      %s219 = sphi 0, %s221
      %s222 = sphi 0, %s219
      %s223 = sphi 0, %s222
      %s239 = sphi 0, %s223
    $region4: #{transformer_decoder_forward.18} parent=1 // loop_header_branch
      %20 = sbr.rel (%p18) target = $region8
    $region5: #{transformer_decoder_forward.18} parent=1 // loop_body
      %s22 = ssub.s32 %s17, 1
      %s23 = ssub.s32 %s17, 2
      %s30 = sadd.s32 1, %s25
      %p31 = scmp.ge.s32.totalorder %s30, 1
      %s32 = scalar_select %p31, 0, %s30
      %s33 = sadd.s32 1, %s24
      %s34 = scalar_select %p31, %s33, %s24
      %p35 = scmp.ge.s32.totalorder %s34, 2
      %s36 = scalar_select %p35, 0, %s34
      %s37 = ssub.s32 %s24, %s36
      %s38 = ssub.s32 %s25, %s32
      %s39 = sor.u32 %s37, %s38
      %p40 = scmp.eq.s32.totalorder %s39, 0
      %s42 = sadd.s32 %s41, 1
      %s43 = scalar_select %p40, %s41, %s42
      %p46 = pneg %p40
      %p47 = scmp.eq.s32.totalorder %s17, 1
      %p48 = por %p46, %p47
      %p49 = scmp.ne.s32.totalorder %s41, %s44
      %p50 = scmp.eq.s32.totalorder %s17, 0
      %p51 = por %p49, %p50
      %p52 = scmp.ne.s32.totalorder %s41, %s44
      %p53 = scmp.eq.s32.totalorder %s22, 1
      %p54 = por %p52, %p53
      %p55 = scmp.ne.s32.totalorder %s44, %s45
      %p56 = scmp.eq.s32.totalorder %s22, 0
      %p57 = por %p55, %p56
      %p58 = scmp.ne.s32.totalorder %s44, %s45
      %p59 = scmp.eq.s32.totalorder %s23, 1
      %p60 = por %p58, %p59
      %p62 = scmp.ne.s32.totalorder %s45, %s61
      %p63 = scmp.eq.s32.totalorder %s23, 0
      %p64 = por %p62, %p63
      %s65 = ssub.s32 %s24, %s36
      %p66 = scmp.eq.s32.totalorder %s65, 0
      %s68 = sadd.s32 %s67, 1
      %s69 = scalar_select %p66, %s67, %s68
      %p72 = pneg %p66
      %p73 = scmp.eq.s32.totalorder %s17, 1
      %p74 = por %p72, %p73
      %p75 = scmp.ne.s32.totalorder %s67, %s70
      %p76 = scmp.eq.s32.totalorder %s17, 0
      %p77 = por %p75, %p76
      %p78 = scmp.ne.s32.totalorder %s67, %s70
      %p79 = scmp.eq.s32.totalorder %s22, 1
      %p80 = por %p78, %p79
      %p81 = scmp.ne.s32.totalorder %s70, %s71
      %p82 = scmp.eq.s32.totalorder %s22, 0
      %p83 = por %p81, %p82
      %p84 = scmp.ne.s32.totalorder %s70, %s71
      %p85 = scmp.eq.s32.totalorder %s23, 1
      %p86 = por %p84, %p85
      %p88 = scmp.ne.s32.totalorder %s71, %s87
      %p89 = scmp.eq.s32.totalorder %s23, 0
      %p90 = por %p88, %p89
      %s91 = ssub.s32 %s24, %s36
      %p92 = scmp.eq.s32.totalorder %s91, 0
      %s94 = sadd.s32 %s93, 1
      %s95 = scalar_select %p92, %s93, %s94
      %p98 = pneg %p92
      %p99 = scmp.eq.s32.totalorder %s17, 1
      %p100 = por %p98, %p99
      %p101 = scmp.ne.s32.totalorder %s93, %s96
      %p102 = scmp.eq.s32.totalorder %s17, 0
      %p103 = por %p101, %p102
      %p104 = scmp.ne.s32.totalorder %s93, %s96
      %p105 = scmp.eq.s32.totalorder %s22, 1
      %p106 = por %p104, %p105
      %p107 = scmp.ne.s32.totalorder %s96, %s97
      %p108 = scmp.eq.s32.totalorder %s22, 0
      %p109 = por %p107, %p108
      %p110 = scmp.ne.s32.totalorder %s96, %s97
      %p111 = scmp.eq.s32.totalorder %s23, 1
      %p112 = por %p110, %p111
      %p114 = scmp.ne.s32.totalorder %s97, %s113
      %p115 = scmp.eq.s32.totalorder %s23, 0
      %p116 = por %p114, %p115
      %s118 = sadd.s32 %s117, 1
      %p121 = scmp.eq.s32.totalorder %s17, 1
      %p122 = scmp.ne.s32.totalorder %s117, %s119
      %p123 = scmp.eq.s32.totalorder %s17, 0
      %p124 = por %p122, %p123
      %p125 = scmp.ne.s32.totalorder %s117, %s119
      %p126 = scmp.eq.s32.totalorder %s22, 1
      %p127 = por %p125, %p126
      %p128 = scmp.ne.s32.totalorder %s119, %s120
      %p129 = scmp.eq.s32.totalorder %s22, 0
      %p130 = por %p128, %p129
      %p131 = scmp.ne.s32.totalorder %s119, %s120
      %p132 = scmp.eq.s32.totalorder %s23, 1
      %p133 = por %p131, %p132
      %p135 = scmp.ne.s32.totalorder %s120, %s134
      %p136 = scmp.eq.s32.totalorder %s23, 0
      %p137 = por %p135, %p136
      %s139 = sadd.s32 %s138, 1
      %p142 = scmp.eq.s32.totalorder %s17, 1
      %p143 = scmp.ne.s32.totalorder %s138, %s140
      %p144 = scmp.eq.s32.totalorder %s17, 0
      %p145 = por %p143, %p144
      %p146 = scmp.ne.s32.totalorder %s138, %s140
      %p147 = scmp.eq.s32.totalorder %s22, 1
      %p148 = por %p146, %p147
      %p149 = scmp.ne.s32.totalorder %s140, %s141
      %p150 = scmp.eq.s32.totalorder %s22, 0
      %p151 = por %p149, %p150
      %p152 = scmp.ne.s32.totalorder %s140, %s141
      %p153 = scmp.eq.s32.totalorder %s23, 1
      %p154 = por %p152, %p153
      %p156 = scmp.ne.s32.totalorder %s141, %s155
      %p157 = scmp.eq.s32.totalorder %s23, 0
      %p158 = por %p156, %p157
      %s159 = ssub.s32 %s24, %s36
      %s160 = ssub.s32 %s25, %s32
      %s161 = sor.u32 %s159, %s160
      %p162 = scmp.eq.s32.totalorder %s161, 0
      %s164 = sadd.s32 %s163, 1
      %s165 = scalar_select %p162, %s163, %s164
      %p168 = pneg %p162
      %p169 = scmp.eq.s32.totalorder %s17, 1
      %p170 = por %p168, %p169
      %p171 = scmp.ne.s32.totalorder %s163, %s166
      %p172 = scmp.eq.s32.totalorder %s17, 0
      %p173 = por %p171, %p172
      %p174 = scmp.ne.s32.totalorder %s163, %s166
      %p175 = scmp.eq.s32.totalorder %s22, 1
      %p176 = por %p174, %p175
      %p177 = scmp.ne.s32.totalorder %s166, %s167
      %p178 = scmp.eq.s32.totalorder %s22, 0
      %p179 = por %p177, %p178
      %p180 = scmp.ne.s32.totalorder %s166, %s167
      %p181 = scmp.eq.s32.totalorder %s23, 1
      %p182 = por %p180, %p181
      %p184 = scmp.ne.s32.totalorder %s167, %s183
      %p185 = scmp.eq.s32.totalorder %s23, 0
      %p186 = por %p184, %p185
      %s187 = ssub.s32 %s24, %s36
      %s188 = ssub.s32 %s25, %s32
      %s189 = sor.u32 %s187, %s188
      %p190 = scmp.eq.s32.totalorder %s189, 0
      %s192 = sadd.s32 %s191, 1
      %s193 = scalar_select %p190, %s191, %s192
      %p196 = pneg %p190
      %p197 = scmp.eq.s32.totalorder %s17, 1
      %p198 = por %p196, %p197
      %p199 = scmp.ne.s32.totalorder %s191, %s194
      %p200 = scmp.eq.s32.totalorder %s17, 0
      %p201 = por %p199, %p200
      %p202 = scmp.ne.s32.totalorder %s191, %s194
      %p203 = scmp.eq.s32.totalorder %s22, 1
      %p204 = por %p202, %p203
      %p205 = scmp.ne.s32.totalorder %s194, %s195
      %p206 = scmp.eq.s32.totalorder %s22, 0
      %p207 = por %p205, %p206
      %p208 = scmp.ne.s32.totalorder %s194, %s195
      %p209 = scmp.eq.s32.totalorder %s23, 1
      %p210 = por %p208, %p209
      %p212 = scmp.ne.s32.totalorder %s195, %s211
      %p213 = scmp.eq.s32.totalorder %s23, 0
      %p214 = por %p212, %p213
      %s215 = ssub.s32 %s24, %s36
      %s216 = ssub.s32 %s25, %s32
      %s217 = sor.u32 %s215, %s216
      %p218 = scmp.eq.s32.totalorder %s217, 0
      %s220 = sadd.s32 %s219, 1
      %s221 = scalar_select %p218, %s219, %s220
      %p224 = pneg %p218
      %p225 = scmp.eq.s32.totalorder %s17, 1
      %p226 = por %p224, %p225
      %p227 = scmp.ne.s32.totalorder %s219, %s222
      %p228 = scmp.eq.s32.totalorder %s17, 0
      %p229 = por %p227, %p228
      %p230 = scmp.ne.s32.totalorder %s219, %s222
      %p231 = scmp.eq.s32.totalorder %s22, 1
      %p232 = por %p230, %p231
      %p233 = scmp.ne.s32.totalorder %s222, %s223
      %p234 = scmp.eq.s32.totalorder %s22, 0
      %p235 = por %p233, %p234
      %p236 = scmp.ne.s32.totalorder %s222, %s223
      %p237 = scmp.eq.s32.totalorder %s23, 1
      %p238 = por %p236, %p237
      %p240 = scmp.ne.s32.totalorder %s223, %s239
      %p241 = scmp.eq.s32.totalorder %s23, 0
      %p242 = por %p240, %p241
      %p243 = scmp.le.s32.totalorder 1, %s17
      %p244 = scmp.lt.s32.totalorder %s17, 3
      %p245 = pnand %p243, %p244
      %p246 = pneg %p245
      // Predicated region
      $region9: #{transformer_decoder_forward.18} parent=5 // pred_check
        _
      $region10: #{transformer_decoder_forward.18} parent=5 // pred_check_branch
        %248 = sbr.rel (%p245) target = $region12
      $region11: #{transformer_decoder_forward.18} parent=5 // pred_region
        %s249 = ssub.s32 %s17, 1
        // Predicated region
        $region13: #{transformer_decoder_forward.18} parent=11 // pred_check
          %p250 = pneg %p130
        $region14: #{transformer_decoder_forward.18} parent=11 // pred_check_branch
          %252 = sbr.rel (%p250) target = $region16
        $region15: #{transformer_decoder_forward.18} parent=11 // pred_region
          _
        $region16: #{transformer_decoder_forward.18} parent=11 // pred_fallthru
          _
        // Predicated region
        $region17: #{transformer_decoder_forward.18} parent=11 // pred_check
          %p253 = pneg %p151
        $region18: #{transformer_decoder_forward.18} parent=11 // pred_check_branch
          %255 = sbr.rel (%p253) target = $region20
        $region19: #{transformer_decoder_forward.18} parent=11 // pred_region
          _
        $region20: #{transformer_decoder_forward.18} parent=11 // pred_fallthru
          _
      $region12: #{transformer_decoder_forward.18} parent=5 // pred_fallthru
        _
      %p256 = scmp.lt.s32.totalorder %s17, 2
      // Predicated region
      $region21: #{transformer_decoder_forward.18} parent=5 // pred_check
        %p257 = pneg %p256
      $region22: #{transformer_decoder_forward.18} parent=5 // pred_check_branch
        %259 = sbr.rel (%p257) target = $region24
      $region23: #{transformer_decoder_forward.18} parent=5 // pred_region
        // Predicated region
        $region25: #{transformer_decoder_forward.18} parent=23 // pred_check
          %p260 = pneg %p51
        $region26: #{transformer_decoder_forward.18} parent=23 // pred_check_branch
          %262 = sbr.rel (%p260) target = $region28
        $region27: #{transformer_decoder_forward.18} parent=23 // pred_region
          %p263 = scmp.lt.s32.totalorder %s24, 1
          %s264 = scalar_select %p263, %s24, 1
          %p265 = scmp.lt.s32.totalorder %s25, 0
          %s266 = scalar_select %p265, %s25, 0
          %s267 = sadd.s32 %s266, %s264
          %s268 = smul.addr %s267, 4
          %s269 = scalar_lea.vmem %s0, %s268
        $region28: #{transformer_decoder_forward.18} parent=23 // pred_fallthru
          _
        // Predicated region
        $region29: #{transformer_decoder_forward.18} parent=23 // pred_check
          %p270 = pneg %p77
        $region30: #{transformer_decoder_forward.18} parent=23 // pred_check_branch
          %272 = sbr.rel (%p270) target = $region32
        $region31: #{transformer_decoder_forward.18} parent=23 // pred_region
          %p273 = scmp.lt.s32.totalorder %s24, 1
          %s274 = scalar_select %p273, %s24, 1
          %s275 = smul.addr %s274, 4
          %s276 = scalar_lea.vmem %s1, %s275
        $region32: #{transformer_decoder_forward.18} parent=23 // pred_fallthru
          _
        // Predicated region
        $region33: #{transformer_decoder_forward.18} parent=23 // pred_check
          %p277 = pneg %p103
        $region34: #{transformer_decoder_forward.18} parent=23 // pred_check_branch
          %279 = sbr.rel (%p277) target = $region36
        $region35: #{transformer_decoder_forward.18} parent=23 // pred_region
          %p280 = scmp.lt.s32.totalorder %s24, 1
          %s281 = scalar_select %p280, %s24, 1
          %s282 = scalar_lea.vmem %s2, %s281
        $region36: #{transformer_decoder_forward.18} parent=23 // pred_fallthru
          _
        // Predicated region
        $region37: #{transformer_decoder_forward.18} parent=23 // pred_check
          %p283 = pneg %p173
        $region38: #{transformer_decoder_forward.18} parent=23 // pred_check_branch
          %285 = sbr.rel (%p283) target = $region40
        $region39: #{transformer_decoder_forward.18} parent=23 // pred_region
          %p286 = scmp.lt.s32.totalorder %s24, 1
          %s287 = scalar_select %p286, %s24, 1
          %p288 = scmp.lt.s32.totalorder %s25, 0
          %s289 = scalar_select %p288, %s25, 0
          %s290 = sadd.s32 %s289, %s287
          %s291 = smul.addr %s290, 8
          %s292 = scalar_lea.vmem %s5, %s291
        $region40: #{transformer_decoder_forward.18} parent=23 // pred_fallthru
          _
      $region24: #{transformer_decoder_forward.18} parent=5 // pred_fallthru
        _
      %p293 = scmp.le.s32.totalorder 1, %s17
      %p294 = scmp.lt.s32.totalorder %s17, 3
      %p295 = pnand %p293, %p294
      %p296 = pneg %p295
      // Predicated region
      $region41: #{transformer_decoder_forward.18} parent=5 // pred_check
        _
      $region42: #{transformer_decoder_forward.18} parent=5 // pred_check_branch
        %298 = sbr.rel (%p295) target = $region44
      $region43: #{transformer_decoder_forward.18} parent=5 // pred_region
        %s299 = ssub.s32 %s17, 1
        %p300 = scmp.lt.s32.totalorder %s26, 1
        %s301 = scalar_select %p300, %s26, 1
        %p302 = scmp.lt.s32.totalorder %s27, 0
        %s303 = scalar_select %p302, %s27, 0
        %s304 = sadd.s32 %s303, %s301
        %s305 = smul.addr %s304, 4
        %s306 = scalar_lea.vmem %s0, %s305
        %p307 = pneg %p57
        %p308 = pneg %p54
        %p309 = scmp.lt.s32.totalorder %s26, 1
        %s310 = scalar_select %p309, %s26, 1
        %s311 = smul.addr %s310, 4
        %s312 = scalar_lea.vmem %s1, %s311
        %p313 = pneg %p83
        %p314 = pneg %p80
        %p315 = scmp.lt.s32.totalorder %s26, 1
        %s316 = scalar_select %p315, %s26, 1
        %s317 = scalar_lea.vmem %s2, %s316
        %p318 = pneg %p109
        %p319 = pneg %p106
        %p320 = pneg %p130
        %p321 = pneg %p127
        %p322 = pneg %p151
        %p323 = pneg %p148
        %p324 = scmp.lt.s32.totalorder %s26, 1
        %s325 = scalar_select %p324, %s26, 1
        %p326 = scmp.lt.s32.totalorder %s27, 0
        %s327 = scalar_select %p326, %s27, 0
        %s328 = sadd.s32 %s327, %s325
        %s329 = smul.addr %s328, 8
        %s330 = scalar_lea.vmem %s5, %s329
        %p331 = pneg %p179
        %p332 = pneg %p176
        %p333 = pneg %p207
        %p334 = pneg %p204
        %p335 = scmp.lt.s32.totalorder %s26, 1
        %s336 = scalar_select %p335, %s26, 1
        %p337 = scmp.lt.s32.totalorder %s27, 0
        %s338 = scalar_select %p337, %s27, 0
        %s339 = sadd.s32 %s338, %s336
        %s340 = smul.addr %s339, 8
        %s341 = scalar_lea.vmem %s6, %s340
        %p342 = pneg %p235
        %p343 = pneg %p232
        %s344 = sand.u32 %s222, 1
        %s345 = scalar_lea.sflag [#allocation3], %s344
        %s346 = sand.u32 %s222, 1
        %s347 = smul.addr %s346, 8
        %s348 = scalar_lea.vmem [#allocation2], %s347
        %p349 = scmp.lt.s32.totalorder %s26, 1
        %s350 = scalar_select %p349, %s26, 1
        %p351 = scmp.lt.s32.totalorder %s27, 0
        %s352 = scalar_select %p351, %s27, 0
        %s353 = sadd.s32 %s352, %s350
        %s354 = smul.addr %s353, 4
        %s355 = scalar_lea.vmem %s0, %s354
        %p356 = scmp.lt.s32.totalorder %s26, 1
        %s357 = scalar_select %p356, %s26, 1
        %s358 = smul.addr %s357, 4
        %s359 = scalar_lea.vmem %s1, %s358
        %p360 = scmp.lt.s32.totalorder %s26, 1
        %s361 = scalar_select %p360, %s26, 1
        %s362 = scalar_lea.vmem %s2, %s361
        %p363 = scmp.lt.s32.totalorder %s26, 1
        %s364 = scalar_select %p363, %s26, 1
        %p365 = scmp.lt.s32.totalorder %s27, 0
        %s366 = scalar_select %p365, %s27, 0
        %s367 = sadd.s32 %s366, %s364
        %s368 = smul.addr %s367, 8
        %s369 = scalar_lea.vmem %s5, %s368
        %p370 = scmp.lt.s32.totalorder %s26, 1
        %s371 = scalar_select %p370, %s26, 1
        %p372 = scmp.lt.s32.totalorder %s27, 0
        %s373 = scalar_select %p372, %s27, 0
        %s374 = sadd.s32 %s373, %s371
        %s375 = smul.addr %s374, 8
        %s376 = scalar_lea.vmem %s6, %s375
        %v378 = vld [vmem:[%s355] sm:$0xf]
        %v379 = vld [vmem:[%s359] sm:$0xf]
        %v380 = vld [vmem:[%s362] sm:$0x1]
        %vm381 = vcmp.gt.s32.totalorder %v380, 0
        %v382 = vsel %vm381, 0.0, -1e+30
        %v383 = vld [vmem:[%s3] sm:$0xf]
        %v384 = vld [vmem:[%s3 + $0x4] sm:$0xf]
        %v385 = vld [vmem:[%s3 + $0x8] sm:$0xf]
        %v386 = vld [vmem:[%s3 + $0xc] sm:$0xf]
        %v387 = vld [vmem:[%s4] sm:$0x1]
        %v388 = vld [vmem:[%s369] sm:$0xff]
        %v390 = vperm.slane %v382, 0
        %vm392 = vcmask 64512
        %v394 = vsel %vm392, %v378, 0
        %v397 = vsel %vm392, %v379, 0
        %399 = vmatpush.bf16.xpose.msra.mxu0 0
        %400 = vmatpush.bf16.xpose.msra.mxu0 0
        %401 = vmatpush.bf16.xpose.msra.mxu0 0
        %402 = vmatpush.bf16.xpose.msra.mxu0 0
        %403 = vmatpush.bf16.xpose.msra.mxu0 0
        %404 = vmatpush.bf16.xpose.msra.mxu0 0
        %405 = vmatpush.bf16.xpose.msra.mxu0 0
        %406 = vmatpush.bf16.xpose.msra.mxu0 %v397
        %407 = vmatmul.bf16.gmra.mxu0 %v394
        %v408 = vpop.f32.mrf.mxu0
        %v409 = vadd.f32 %v390, %v408
        %v410 = vpop.f32.mrf.mxu0
        %411 = vdwg.mxu0
        %v412 = vsel %vm392, %v409, -inf
        %413 = vmax.xlane.f32.xlu0 %v412
        %v414 = vpop.xlane.xlu0 %413
        %v415 = vsub.f32 %v409, %v414
        %v416 = vmul.f32 %v415, 1.442695
        %v417 = vpow.pop %v416
        %v418 = vsel %vm392, %v417, 0.0
        %419 = vadd.xlane.f32.xlu0 %v418
        %v420 = vpop.xlane.xlu0 %419
        %v421 = vrcp.pop %v420
        %v422 = vmul.f32 %v420, %v421
        %v423 = vsub.f32 1.0, %v422
        %v424 = vmul.f32 %v421, %v423
        %v425 = vadd.f32 %v421, %v424
        %vm426 = vweird.f32 %v420
        %vm427 = vweird.f32 %v421
        %vm428 = vmor %vm426, %vm427
        %v429 = vsel %vm428, %v421, %v425
        %v430 = vand.u32 2147483647, %v420
        %vm431 = vcmp.eq.f32.partialorder %v430, 8.507059e+37
        %v432 = vand.u32 %v420, 2147483648
        %v433 = vor.u32 1.1754944e-38, %v432
        %v434 = vsel %vm431, %v433, %v429
        %v435 = vmul.f32 %v417, %v434
        %v436 = vpack.c.bf16 %v435, %v435
        %v438 = vunpack.c.l.b16 %v379
        %v439 = vpack.c.b16 %v438, %v438
        %440 = vrot.lane.b32.xlu0 %v439, 96
        %v441 = vpop.permute.xlu0 %440
        %v443 = vsel %vm392, %v436, 0
        %vm445 = vcmask 1043456
        %v447 = vsel %vm445, %v441, 0
        %449 = vmatpush.bf16.msra.mxu0 0
        %450 = vmatpush.bf16.msra.mxu0 0
        %451 = vmatpush.bf16.msra.mxu0 0
        %452 = vmatpush.bf16.msra.mxu0 0
        %453 = vmatpush.bf16.msra.mxu0 0
        %454 = vmatpush.bf16.msra.mxu0 0
        %455 = vmatpush.bf16.msra.mxu0 0
        %456 = vmatpush.bf16.msra.mxu0 %v447
        %457 = vmatmul.bf16.gmra.mxu0 %v443
        %v458 = vpop.f32.mrf.mxu0
        %v459 = vadd.f32 0.0, %v458
        %v460 = vpop.f32.mrf.mxu0
        %461 = vdwg.mxu0
        %v463 = vunpack.c.l.b16 %v378
        %v464 = vpack.c.b16 %v463, %v463
        %465 = vrot.lane.b32.xlu0 %v464, 120
        %v466 = vpop.permute.xlu0 %465
        %467 = vrot.lane.b32.xlu0 %v439, 120
        %v468 = vpop.permute.xlu0 %467
        %v470 = vsel %vm392, %v466, 0
        %v473 = vsel %vm392, %v468, 0
        %475 = vmatpush.bf16.xpose.msra.mxu0 0
        %476 = vmatpush.bf16.xpose.msra.mxu0 0
        %477 = vmatpush.bf16.xpose.msra.mxu0 0
        %478 = vmatpush.bf16.xpose.msra.mxu0 0
        %479 = vmatpush.bf16.xpose.msra.mxu0 0
        %480 = vmatpush.bf16.xpose.msra.mxu0 0
        %481 = vmatpush.bf16.xpose.msra.mxu0 0
        %482 = vmatpush.bf16.xpose.msra.mxu0 %v473
        %483 = vmatmul.bf16.gmra.mxu0 %v470
        %v484 = vpop.f32.mrf.mxu0
        %v485 = vadd.f32 %v390, %v484
        %v486 = vpop.f32.mrf.mxu0
        %487 = vdwg.mxu0
        %v488 = vsel %vm392, %v485, -inf
        %489 = vmax.xlane.f32.xlu0 %v488
        %v490 = vpop.xlane.xlu0 %489
        %v491 = vsub.f32 %v485, %v490
        %v492 = vmul.f32 %v491, 1.442695
        %v493 = vpow.pop %v492
        %v494 = vsel %vm392, %v493, 0.0
        %495 = vadd.xlane.f32.xlu0 %v494
        %v496 = vpop.xlane.xlu0 %495
        %v497 = vrcp.pop %v496
        %v498 = vmul.f32 %v496, %v497
        %v499 = vsub.f32 1.0, %v498
        %v500 = vmul.f32 %v497, %v499
        %v501 = vadd.f32 %v497, %v500
        %vm502 = vweird.f32 %v496
        %vm503 = vweird.f32 %v497
        %vm504 = vmor %vm502, %vm503
        %v505 = vsel %vm504, %v497, %v501
        %v506 = vand.u32 2147483647, %v496
        %vm507 = vcmp.eq.f32.partialorder %v506, 8.507059e+37
        %v508 = vand.u32 %v496, 2147483648
        %v509 = vor.u32 1.1754944e-38, %v508
        %v510 = vsel %vm507, %v509, %v505
        %v511 = vmul.f32 %v493, %v510
        %v512 = vadd.f32 %v435, %v511
        %v513 = vpack.c.bf16 %v511, %v511
        %514 = vrot.lane.b32.xlu0 %v439, 88
        %v515 = vpop.permute.xlu0 %514
        %v517 = vsel %vm392, %v513, 0
        %v520 = vsel %vm445, %v515, 0
        %522 = vmatpush.bf16.msra.mxu0 0
        %523 = vmatpush.bf16.msra.mxu0 0
        %524 = vmatpush.bf16.msra.mxu0 0
        %525 = vmatpush.bf16.msra.mxu0 0
        %526 = vmatpush.bf16.msra.mxu0 0
        %527 = vmatpush.bf16.msra.mxu0 0
        %528 = vmatpush.bf16.msra.mxu0 0
        %529 = vmatpush.bf16.msra.mxu0 %v520
        %530 = vmatmul.bf16.gmra.mxu0 %v517
        %v531 = vpop.f32.mrf.mxu0
        %v532 = vadd.f32 0.0, %v531
        %v533 = vpop.f32.mrf.mxu0
        %534 = vdwg.mxu0
        %535 = vrot.lane.b32.xlu0 %v464, 112
        %v536 = vpop.permute.xlu0 %535
        %537 = vrot.lane.b32.xlu0 %v439, 112
        %v538 = vpop.permute.xlu0 %537
        %v540 = vsel %vm392, %v536, 0
        %v543 = vsel %vm392, %v538, 0
        %545 = vmatpush.bf16.xpose.msra.mxu0 0
        %546 = vmatpush.bf16.xpose.msra.mxu0 0
        %547 = vmatpush.bf16.xpose.msra.mxu0 0
        %548 = vmatpush.bf16.xpose.msra.mxu0 0
        %549 = vmatpush.bf16.xpose.msra.mxu0 0
        %550 = vmatpush.bf16.xpose.msra.mxu0 0
        %551 = vmatpush.bf16.xpose.msra.mxu0 0
        %552 = vmatpush.bf16.xpose.msra.mxu0 %v543
        %553 = vmatmul.bf16.gmra.mxu0 %v540
        %v554 = vpop.f32.mrf.mxu0
        %v555 = vadd.f32 %v390, %v554
        %v556 = vpop.f32.mrf.mxu0
        %557 = vdwg.mxu0
        %v558 = vsel %vm392, %v555, -inf
        %559 = vmax.xlane.f32.xlu0 %v558
        %v560 = vpop.xlane.xlu0 %559
        %v561 = vsub.f32 %v555, %v560
        %v562 = vmul.f32 %v561, 1.442695
        %v563 = vpow.pop %v562
        %v564 = vsel %vm392, %v563, 0.0
        %565 = vadd.xlane.f32.xlu0 %v564
        %v566 = vpop.xlane.xlu0 %565
        %v567 = vrcp.pop %v566
        %v568 = vmul.f32 %v566, %v567
        %v569 = vsub.f32 1.0, %v568
        %v570 = vmul.f32 %v567, %v569
        %v571 = vadd.f32 %v567, %v570
        %vm572 = vweird.f32 %v566
        %vm573 = vweird.f32 %v567
        %vm574 = vmor %vm572, %vm573
        %v575 = vsel %vm574, %v567, %v571
        %v576 = vand.u32 2147483647, %v566
        %vm577 = vcmp.eq.f32.partialorder %v576, 8.507059e+37
        %v578 = vand.u32 %v566, 2147483648
        %v579 = vor.u32 1.1754944e-38, %v578
        %v580 = vsel %vm577, %v579, %v575
        %v581 = vmul.f32 %v563, %v580
        %v582 = vadd.f32 %v512, %v581
        %v583 = vpack.c.bf16 %v581, %v581
        %584 = vrot.lane.b32.xlu0 %v439, 80
        %v585 = vpop.permute.xlu0 %584
        %v587 = vsel %vm392, %v583, 0
        %v590 = vsel %vm445, %v585, 0
        %592 = vmatpush.bf16.msra.mxu0 0
        %593 = vmatpush.bf16.msra.mxu0 0
        %594 = vmatpush.bf16.msra.mxu0 0
        %595 = vmatpush.bf16.msra.mxu0 0
        %596 = vmatpush.bf16.msra.mxu0 0
        %597 = vmatpush.bf16.msra.mxu0 0
        %598 = vmatpush.bf16.msra.mxu0 0
        %599 = vmatpush.bf16.msra.mxu0 %v590
        %600 = vmatmul.bf16.gmra.mxu0 %v587
        %v601 = vpop.f32.mrf.mxu0
        %v602 = vadd.f32 0.0, %v601
        %v603 = vpop.f32.mrf.mxu0
        %604 = vdwg.mxu0
        %605 = vrot.lane.b32.xlu0 %v464, 104
        %v606 = vpop.permute.xlu0 %605
        %607 = vrot.lane.b32.xlu0 %v439, 104
        %v608 = vpop.permute.xlu0 %607
        %v610 = vsel %vm392, %v606, 0
        %v613 = vsel %vm392, %v608, 0
        %615 = vmatpush.bf16.xpose.msra.mxu0 0
        %616 = vmatpush.bf16.xpose.msra.mxu0 0
        %617 = vmatpush.bf16.xpose.msra.mxu0 0
        %618 = vmatpush.bf16.xpose.msra.mxu0 0
        %619 = vmatpush.bf16.xpose.msra.mxu0 0
        %620 = vmatpush.bf16.xpose.msra.mxu0 0
        %621 = vmatpush.bf16.xpose.msra.mxu0 0
        %622 = vmatpush.bf16.xpose.msra.mxu0 %v613
        %623 = vmatmul.bf16.gmra.mxu0 %v610
        %v624 = vpop.f32.mrf.mxu0
        %v625 = vadd.f32 %v390, %v624
        %v626 = vpop.f32.mrf.mxu0
        %627 = vdwg.mxu0
        %v628 = vsel %vm392, %v625, -inf
        %629 = vmax.xlane.f32.xlu0 %v628
        %v630 = vpop.xlane.xlu0 %629
        %v631 = vsub.f32 %v625, %v630
        %v632 = vmul.f32 %v631, 1.442695
        %v633 = vpow.pop %v632
        %v634 = vsel %vm392, %v633, 0.0
        %635 = vadd.xlane.f32.xlu0 %v634
        %v636 = vpop.xlane.xlu0 %635
        %v637 = vrcp.pop %v636
        %v638 = vmul.f32 %v636, %v637
        %v639 = vsub.f32 1.0, %v638
        %v640 = vmul.f32 %v637, %v639
        %v641 = vadd.f32 %v637, %v640
        %vm642 = vweird.f32 %v636
        %vm643 = vweird.f32 %v637
        %vm644 = vmor %vm642, %vm643
        %v645 = vsel %vm644, %v637, %v641
        %v646 = vand.u32 2147483647, %v636
        %vm647 = vcmp.eq.f32.partialorder %v646, 8.507059e+37
        %v648 = vand.u32 %v636, 2147483648
        %v649 = vor.u32 1.1754944e-38, %v648
        %v650 = vsel %vm647, %v649, %v645
        %v651 = vmul.f32 %v633, %v650
        %v652 = vadd.f32 %v582, %v651
        %v653 = vpack.c.bf16 %v651, %v651
        %654 = vrot.lane.b32.xlu0 %v439, 72
        %v655 = vpop.permute.xlu0 %654
        %v657 = vsel %vm392, %v653, 0
        %v660 = vsel %vm445, %v655, 0
        %662 = vmatpush.bf16.msra.mxu0 0
        %663 = vmatpush.bf16.msra.mxu0 0
        %664 = vmatpush.bf16.msra.mxu0 0
        %665 = vmatpush.bf16.msra.mxu0 0
        %666 = vmatpush.bf16.msra.mxu0 0
        %667 = vmatpush.bf16.msra.mxu0 0
        %668 = vmatpush.bf16.msra.mxu0 0
        %669 = vmatpush.bf16.msra.mxu0 %v660
        %670 = vmatmul.bf16.gmra.mxu0 %v657
        %v671 = vpop.f32.mrf.mxu0
        %v672 = vadd.f32 0.0, %v671
        %v673 = vpop.f32.mrf.mxu0
        %674 = vdwg.mxu0
        %676 = vrot.lane.b32.xlu0 %v532, 8
        %v677 = vpop.permute.xlu0 %676
        %680 = vrot.lane.b32.xlu0 %v602, 16
        %v681 = vpop.permute.xlu0 %680
        %684 = vrot.lane.b32.xlu0 %v672, 24
        %v685 = vpop.permute.xlu0 %684
        %v687 = vsel %vm392, %v459, %v677
        %vm688 = vcmask 130048
        %v689 = vsel %vm688, %v687, %v681
        %vm690 = vcmask 195584
        %v691 = vsel %vm690, %v689, %v685
        %v692 = vpack.c.bf16 %v691, %v691
        %v694 = vperm.slane %v387, 0
        %v700 = vunpack.c.l.b16 %v383
        %v701 = vunpack.c.l.b16 %v384
        %v702 = vunpack.c.l.b16 %v385
        %v703 = vunpack.c.l.b16 %v386
        %v704 = vpack.c.b16 %v701, %v700
        %v705 = vpack.c.b16 %v703, %v702
        %vm708 = vcmask 261120
        %v710 = vsel %vm708, %v692, 0
        %712 = vmatpush.bf16.msra.mxu0 0
        %713 = vmatpush.bf16.msra.mxu0 0
        %714 = vmatpush.bf16.msra.mxu0 0
        %715 = vmatpush.bf16.msra.mxu0 0
        %716 = vmatpush.bf16.msra.mxu0 0
        %717 = vmatpush.bf16.msra.mxu0 0
        %718 = vmatpush.bf16.msra.mxu0 %v705
        %719 = vmatpush.bf16.msra.mxu0 %v704
        %720 = vmatmul.bf16.gmra.mxu0 %v710
        %v721 = vpop.f32.mrf.mxu0
        %v722 = vadd.f32 %v694, %v721
        %v723 = vpop.f32.mrf.mxu0
        %724 = vdwg.mxu0
        %v725 = vadd.f32 %v722, %v388
        %v726 = vmul.f32 %v652, 0.25
        %727 = vst.msk [vmem:[%s376] sm:$0xff] %vm708, %v725
        %728 = vst.msk [vmem:[%s348] sm:$0xff] %vm392, %v726
        %p729 = scmp.lt.s32.totalorder %s26, 1
        %s730 = scalar_select %p729, %s26, 1
        %p731 = scmp.lt.s32.totalorder %s27, 0
        %s732 = scalar_select %p731, %s27, 0
        %s733 = sadd.s32 %s732, %s730
        %s734 = smul.addr %s733, 8
        %s735 = scalar_lea.vmem %s6, %s734
        %s736 = sand.u32 %s222, 1
        %s737 = scalar_lea.sflag [#allocation3], %s736
        %s738 = sand.u32 %s222, 1
        %s739 = smul.addr %s738, 8
        %s740 = scalar_lea.vmem [#allocation2], %s739
        // Predicated region
        $region45: #{transformer_decoder_forward.18} parent=43 // pred_check
          %p741 = pneg %p204
        $region46: #{transformer_decoder_forward.18} parent=43 // pred_check_branch
          %743 = sbr.rel (%p741) target = $region48
        $region47: #{transformer_decoder_forward.18} parent=43 // pred_region
          _
        $region48: #{transformer_decoder_forward.18} parent=43 // pred_fallthru
          _
        // Predicated region
        $region49: #{transformer_decoder_forward.18} parent=43 // pred_check
          %p744 = pneg %p232
        $region50: #{transformer_decoder_forward.18} parent=43 // pred_check_branch
          %746 = sbr.rel (%p744) target = $region52
        $region51: #{transformer_decoder_forward.18} parent=43 // pred_region
          %748 = vsyncadd %s737, 0
          %s749 = sadd.s32 %s27, %s26
          %s750 = smul.addr %s749, 8
          %s751 = scalar_lea.hbm %s7, %s750
          %s753 = sshll.u32 %s740, 4
          %s754 = int_to_ptr.vmem [resolvable:$true] %s753
          %s755 = sshll.u32 %s751, 4
          %s756 = int_to_ptr.hbm [resolvable:$true] %s755
          %758 = dma.vmem_to_hbm [thread:$0]  %s754, 128, %s756, %s737
        $region52: #{transformer_decoder_forward.18} parent=43 // pred_fallthru
          _
      $region44: #{transformer_decoder_forward.18} parent=5 // pred_fallthru
        _
      %p759 = scmp.le.s32.totalorder 2, %s17
      // Predicated region
      $region53: #{transformer_decoder_forward.18} parent=5 // pred_check
        %p760 = pneg %p759
      $region54: #{transformer_decoder_forward.18} parent=5 // pred_check_branch
        %762 = sbr.rel (%p760) target = $region56
      $region55: #{transformer_decoder_forward.18} parent=5 // pred_region
        %s763 = ssub.s32 %s17, 2
        // Predicated region
        $region57: #{transformer_decoder_forward.18} parent=55 // pred_check
          %p764 = pneg %p210
        $region58: #{transformer_decoder_forward.18} parent=55 // pred_check_branch
          %766 = sbr.rel (%p764) target = $region60
        $region59: #{transformer_decoder_forward.18} parent=55 // pred_region
          %p767 = scmp.lt.s32.totalorder %s28, 1
          %s768 = scalar_select %p767, %s28, 1
          %p769 = scmp.lt.s32.totalorder %s29, 0
          %s770 = scalar_select %p769, %s29, 0
          %s771 = sadd.s32 %s770, %s768
          %s772 = smul.addr %s771, 8
          %s773 = scalar_lea.vmem %s6, %s772
        $region60: #{transformer_decoder_forward.18} parent=55 // pred_fallthru
          _
        // Predicated region
        $region61: #{transformer_decoder_forward.18} parent=55 // pred_check
          %p774 = pneg %p238
        $region62: #{transformer_decoder_forward.18} parent=55 // pred_check_branch
          %776 = sbr.rel (%p774) target = $region64
        $region63: #{transformer_decoder_forward.18} parent=55 // pred_region
          %s777 = sand.u32 %s223, 1
          %s778 = scalar_lea.sflag [#allocation3], %s777
          %s779 = sand.u32 %s223, 1
          %s780 = smul.addr %s779, 8
          %s781 = scalar_lea.vmem [#allocation2], %s780
          %783 = dma.done %s778, 128
        $region64: #{transformer_decoder_forward.18} parent=55 // pred_fallthru
          _
      $region56: #{transformer_decoder_forward.18} parent=5 // pred_fallthru
        _
    $region6: #{transformer_decoder_forward.18} parent=1 // loop_footer
      %s21 = sadd.s32 1, %s17
    $region7: #{transformer_decoder_forward.18} parent=1 // loop_footer_branch
      %16 = sbr.rel target = $region3
    $region8: #{transformer_decoder_forward.18} parent=1 // loop_exit
      _
    %784 = vsyncpa [#allocation3], 1
    %s785 = scalar_lea.sflag [#allocation3], 1
    %786 = vsyncpa %s785, 1

// kernel: transformer_decoder_forward.19
$region0: #{transformer_decoder_forward.19}
  #allocation0 [shape = 'u32[]', space=smem, size = 0x4, offset = 0x4, fixed_abs, tag = 'smem constant byte address 0x4 - core index']
  #allocation1 [shape = 'u32[72,128]{1,0:T(1,128)}', space=vmem, size = 0x9000, scoped, tag = 'internal scratch']
  #allocation2 [shape = 'f32[16,32]{1,0:T(8,128)}', space=vmem, size = 0x2000, scoped, tag = 'scratch operand']
  #allocation3 [shape = 'bf16[16,32]{1,0:T(8,128)(2,1)}', space=vmem, size = 0x1000, scoped, tag = 'scratch operand']
  %s0 = inlined_call_operand.vmem [shape: f32[16,32], index: 0, kind: input, shape index: {}]
  %s1 = inlined_call_operand.vmem [shape: f32[1,32], index: 1, kind: input, shape index: {}]
  %s2 = inlined_call_operand.vmem [shape: f32[1,32], index: 2, kind: input, shape index: {}]
  %s3 = inlined_call_operand.vmem [shape: bf16[32,64], index: 3, kind: input, shape index: {}]
  %s4 = inlined_call_operand.vmem [shape: f32[1,64], index: 4, kind: input, shape index: {}]
  %s5 = inlined_call_operand.vmem [shape: bf16[64,32], index: 5, kind: input, shape index: {}]
  %s6 = inlined_call_operand.vmem [shape: f32[1,32], index: 6, kind: input, shape index: {}]
  %s7 = inlined_call_operand.vmem [shape: f32[1,32], index: 7, kind: input, shape index: {}]
  %s8 = inlined_call_operand.vmem [shape: f32[1,32], index: 8, kind: input, shape index: {}]
  %s9 = inlined_call_operand.hbm [shape: f32[16,32], index: 9, kind: output, shape index: {}]
  %s10 = sld [smem:[#allocation0]]
  $region54: #{transformer_decoder_forward.19} parent=0
    _
  %s12 = ssub.s32 1, %s10
  %s13 = scalar_select 0, %s12, %s10
  $region1: #{transformer_decoder_forward.19} parent=0
    #allocation4 [shape = 'u8[8192]{0}', space=vmem, size = 0x2000, scoped, tag = 'output window, operand 0, single buffered']
    #allocation5 [shape = 's32[1]{0}', space=sflag, size = 0x4, scoped, tag = 'scoped memory for transformer_decoder_forward.19']
    %14 = vsyncpa [#allocation5], 0
    // Predicated region
    $region2: #{transformer_decoder_forward.19} parent=1 // pred_check
      _
    $region3: #{transformer_decoder_forward.19} parent=1 // pred_check_branch
      %16 = sbr.rel (0) target = $region5
    $region4: #{transformer_decoder_forward.19} parent=1 // pred_region
      _
    $region5: #{transformer_decoder_forward.19} parent=1 // pred_fallthru
      _
    // Predicated region
    $region6: #{transformer_decoder_forward.19} parent=1 // pred_check
      _
    $region7: #{transformer_decoder_forward.19} parent=1 // pred_check_branch
      %18 = sbr.rel (0) target = $region9
    $region8: #{transformer_decoder_forward.19} parent=1 // pred_region
      _
    $region9: #{transformer_decoder_forward.19} parent=1 // pred_fallthru
      _
    // Predicated region
    $region10: #{transformer_decoder_forward.19} parent=1 // pred_check
      _
    $region11: #{transformer_decoder_forward.19} parent=1 // pred_check_branch
      %20 = sbr.rel (0) target = $region13
    $region12: #{transformer_decoder_forward.19} parent=1 // pred_region
      _
    $region13: #{transformer_decoder_forward.19} parent=1 // pred_fallthru
      _
    // Predicated region
    $region14: #{transformer_decoder_forward.19} parent=1 // pred_check
      _
    $region15: #{transformer_decoder_forward.19} parent=1 // pred_check_branch
      %22 = sbr.rel (0) target = $region17
    $region16: #{transformer_decoder_forward.19} parent=1 // pred_region
      _
    $region17: #{transformer_decoder_forward.19} parent=1 // pred_fallthru
      _
    // Predicated region
    $region18: #{transformer_decoder_forward.19} parent=1 // pred_check
      _
    $region19: #{transformer_decoder_forward.19} parent=1 // pred_check_branch
      %24 = sbr.rel (0) target = $region21
    $region20: #{transformer_decoder_forward.19} parent=1 // pred_region
      _
    $region21: #{transformer_decoder_forward.19} parent=1 // pred_fallthru
      _
    // Predicated region
    $region22: #{transformer_decoder_forward.19} parent=1 // pred_check
      _
    $region23: #{transformer_decoder_forward.19} parent=1 // pred_check_branch
      %26 = sbr.rel (0) target = $region25
    $region24: #{transformer_decoder_forward.19} parent=1 // pred_region
      _
    $region25: #{transformer_decoder_forward.19} parent=1 // pred_fallthru
      _
    // Predicated region
    $region26: #{transformer_decoder_forward.19} parent=1 // pred_check
      _
    $region27: #{transformer_decoder_forward.19} parent=1 // pred_check_branch
      %28 = sbr.rel (0) target = $region29
    $region28: #{transformer_decoder_forward.19} parent=1 // pred_region
      _
    $region29: #{transformer_decoder_forward.19} parent=1 // pred_fallthru
      _
    // Predicated region
    $region30: #{transformer_decoder_forward.19} parent=1 // pred_check
      _
    $region31: #{transformer_decoder_forward.19} parent=1 // pred_check_branch
      %30 = sbr.rel (0) target = $region33
    $region32: #{transformer_decoder_forward.19} parent=1 // pred_region
      _
    $region33: #{transformer_decoder_forward.19} parent=1 // pred_fallthru
      _
    // Predicated region
    $region34: #{transformer_decoder_forward.19} parent=1 // pred_check
      _
    $region35: #{transformer_decoder_forward.19} parent=1 // pred_check_branch
      %32 = sbr.rel (0) target = $region37
    $region36: #{transformer_decoder_forward.19} parent=1 // pred_region
      _
    $region37: #{transformer_decoder_forward.19} parent=1 // pred_fallthru
      _
    %p34 = scmp.eq.s32.totalorder 0, 0
    // Predicated region
    $region38: #{transformer_decoder_forward.19} parent=1 // pred_check
      %p35 = pneg %p34
    $region39: #{transformer_decoder_forward.19} parent=1 // pred_check_branch
      %37 = sbr.rel (%p35) target = $region41
    $region40: #{transformer_decoder_forward.19} parent=1 // pred_region
      %v38 = vld [vmem:[%s0] sm:$0xff]
      %v39 = vld [vmem:[%s0 + $0x8] sm:$0xff]
      %v40 = vld [vmem:[%s1] sm:$0x1]
      %v41 = vld [vmem:[%s2] sm:$0x1]
      %vm42 = vcmask 261120
      %v43 = vsel %vm42, %v38, 0.0
      %44 = vadd.xlane.f32.xlu0 %v43
      %v45 = vpop.xlane.xlu0 %44
      %v46 = vsel %vm42, %v39, 0.0
      %47 = vadd.xlane.f32.xlu0 %v46
      %v48 = vpop.xlane.xlu0 %47
      %v49 = vrcp.pop 32.0
      %v50 = vmul.f32 32.0, %v49
      %v51 = vsub.f32 1.0, %v50
      %v52 = vmul.f32 %v49, %v51
      %v53 = vadd.f32 %v49, %v52
      %vm54 = vweird.f32 %v49
      %v55 = vsel %vm54, %v49, %v53
      %v56 = vmul.f32 %v45, %v55
      %v57 = vmul.f32 %v48, %v55
      %v58 = vsub.f32 %v38, %v56
      %v59 = vsub.f32 %v39, %v57
      %v60 = vmul.f32 %v58, %v58
      %v61 = vmul.f32 %v59, %v59
      %v62 = vsel %vm42, %v60, 0.0
      %63 = vadd.xlane.f32.xlu0 %v62
      %v64 = vpop.xlane.xlu0 %63
      %v65 = vsel %vm42, %v61, 0.0
      %66 = vadd.xlane.f32.xlu0 %v65
      %v67 = vpop.xlane.xlu0 %66
      %v68 = vmul.f32 %v64, %v55
      %v69 = vmul.f32 %v67, %v55
      %v70 = vadd.f32 %v68, 1e-05
      %v71 = vadd.f32 %v69, 1e-05
      %v72 = vrsqrt.pop %v70
      %v73 = vmul.f32 %v72, %v70
      %v74 = vmul.f32 %v73, %v72
      %v75 = vmul.f32 0.5, %v74
      %v76 = vsub.f32 1.5, %v75
      %v77 = vmul.f32 %v72, %v76
      %vm78 = vweird.f32 %v70
      %vm79 = vweird.f32 %v72
      %vm80 = vmor %vm78, %vm79
      %v81 = vsel %vm80, %v72, %v77
      %v82 = vrsqrt.pop %v71
      %v83 = vmul.f32 %v82, %v71
      %v84 = vmul.f32 %v83, %v82
      %v85 = vmul.f32 0.5, %v84
      %v86 = vsub.f32 1.5, %v85
      %v87 = vmul.f32 %v82, %v86
      %vm88 = vweird.f32 %v71
      %vm89 = vweird.f32 %v82
      %vm90 = vmor %vm88, %vm89
      %v91 = vsel %vm90, %v82, %v87
      %v92 = vmul.f32 %v58, %v81
      %v93 = vmul.f32 %v59, %v91
      %v95 = vperm.slane %v40, 0
      %v97 = vmul.f32 %v92, %v95
      %v98 = vmul.f32 %v93, %v95
      %v100 = vperm.slane %v41, 0
      %v102 = vadd.f32 %v97, %v100
      %v103 = vadd.f32 %v98, %v100
      %v104 = vpack.c.bf16 %v102, %v102
      %v105 = vpack.c.bf16 %v103, %v103
      %vm106 = vcmask 257024
      %107 = vst.msk [vmem:[#allocation3] sm:$0xf] %vm106, %v104
      %108 = vst.msk [vmem:[#allocation3 + $0x4] sm:$0xf] %vm106, %v105
      %109 = vst.msk [vmem:[#allocation2] sm:$0xff] %vm42, 0.0
      %110 = vst.msk [vmem:[#allocation2 + $0x8] sm:$0xff] %vm42, 0.0
    $region41: #{transformer_decoder_forward.19} parent=1 // pred_fallthru
      _
    %v111 = vld [vmem:[#allocation3] sm:$0xf]
    %v112 = vld [vmem:[#allocation3 + $0x4] sm:$0xf]
    %v113 = vld [vmem:[%s3] sm:$0xf]
    %v114 = vld [vmem:[%s3 + $0x4] sm:$0xf]
    %v115 = vld [vmem:[%s3 + $0x8] sm:$0xf]
    %v116 = vld [vmem:[%s3 + $0xc] sm:$0xf]
    %v117 = vld [vmem:[%s4] sm:$0x1]
    %v119 = vperm.slane %v117, 0
    %v123 = vunpack.c.l.b16 %v111
    %v124 = vunpack.c.l.b16 %v112
    %v125 = vpack.c.b16 %v124, %v123
    %v130 = vunpack.c.l.b16 %v113
    %v131 = vunpack.c.l.b16 %v114
    %v132 = vunpack.c.l.b16 %v115
    %v133 = vunpack.c.l.b16 %v116
    %v134 = vpack.c.b16 %v131, %v130
    %v135 = vpack.c.b16 %v133, %v132
    %vm138 = vcmask 261120
    %v140 = vsel %vm138, %v125, 0
    %142 = vmatpush.bf16.msra.mxu0 0
    %143 = vmatpush.bf16.msra.mxu0 0
    %144 = vmatpush.bf16.msra.mxu0 0
    %145 = vmatpush.bf16.msra.mxu0 0
    %146 = vmatpush.bf16.msra.mxu0 0
    %147 = vmatpush.bf16.msra.mxu0 0
    %148 = vmatpush.bf16.msra.mxu0 %v135
    %149 = vmatpush.bf16.msra.mxu0 %v134
    %150 = vmatmul.bf16.gmra.mxu0 %v140
    %v151 = vpop.f32.mrf.mxu0
    %v152 = vadd.f32 %v119, %v151
    %v153 = vpop.f32.mrf.mxu0
    %v154 = vadd.f32 %v119, %v153
    %155 = vdwg.mxu0
    %v156 = vmax.f32 %v152, 0.0
    %v157 = vmax.f32 %v154, 0.0
    %v158 = vld [vmem:[#allocation2] sm:$0xff]
    %v159 = vld [vmem:[#allocation2 + $0x8] sm:$0xff]
    %v160 = vpack.c.bf16 %v157, %v156
    %v161 = vld [vmem:[%s5] sm:$0xf]
    %v162 = vld [vmem:[%s5 + $0x4] sm:$0xf]
    %v163 = vld [vmem:[%s5 + $0x8] sm:$0xf]
    %v164 = vld [vmem:[%s5 + $0xc] sm:$0xf]
    %v165 = vld [vmem:[%s5 + $0x10] sm:$0xf]
    %v166 = vld [vmem:[%s5 + $0x14] sm:$0xf]
    %v167 = vld [vmem:[%s5 + $0x18] sm:$0xf]
    %v168 = vld [vmem:[%s5 + $0x1c] sm:$0xf]
    %v177 = vunpack.c.l.b16 %v161
    %v178 = vunpack.c.l.b16 %v162
    %v179 = vunpack.c.l.b16 %v163
    %v180 = vunpack.c.l.b16 %v164
    %v181 = vunpack.c.l.b16 %v165
    %v182 = vunpack.c.l.b16 %v166
    %v183 = vunpack.c.l.b16 %v167
    %v184 = vunpack.c.l.b16 %v168
    %v185 = vpack.c.b16 %v178, %v177
    %v186 = vpack.c.b16 %v180, %v179
    %v187 = vpack.c.b16 %v182, %v181
    %v188 = vpack.c.b16 %v184, %v183
    %vm193 = vcmask 523264
    %v195 = vsel %vm193, %v160, 0
    %197 = vmatpush.bf16.msra.mxu0 0
    %198 = vmatpush.bf16.msra.mxu0 0
    %199 = vmatpush.bf16.msra.mxu0 0
    %200 = vmatpush.bf16.msra.mxu0 0
    %201 = vmatpush.bf16.msra.mxu0 %v188
    %202 = vmatpush.bf16.msra.mxu0 %v187
    %203 = vmatpush.bf16.msra.mxu0 %v186
    %204 = vmatpush.bf16.msra.mxu0 %v185
    %205 = vmatmul.bf16.gmra.mxu0 %v195
    %v206 = vpop.f32.mrf.mxu0
    %v207 = vadd.f32 0.0, %v206
    %v208 = vpop.f32.mrf.mxu0
    %v209 = vadd.f32 0.0, %v208
    %210 = vdwg.mxu0
    %v211 = vadd.f32 %v158, %v207
    %v212 = vadd.f32 %v159, %v209
    %213 = vst.msk [vmem:[#allocation2] sm:$0xff] %vm138, %v211
    %214 = vst.msk [vmem:[#allocation2 + $0x8] sm:$0xff] %vm138, %v212
    // Predicated region
    $region42: #{transformer_decoder_forward.19} parent=1 // pred_check
      %p215 = pneg %p34
    $region43: #{transformer_decoder_forward.19} parent=1 // pred_check_branch
      %217 = sbr.rel (%p215) target = $region45
    $region44: #{transformer_decoder_forward.19} parent=1 // pred_region
      %v218 = vld [vmem:[#allocation2] sm:$0xff]
      %v219 = vld [vmem:[#allocation2 + $0x8] sm:$0xff]
      %v220 = vld [vmem:[%s6] sm:$0x1]
      %v222 = vperm.slane %v220, 0
      %v224 = vadd.f32 %v218, %v222
      %v225 = vadd.f32 %v219, %v222
      %v226 = vld [vmem:[%s0] sm:$0xff]
      %v227 = vld [vmem:[%s0 + $0x8] sm:$0xff]
      %v228 = vadd.f32 %v224, %v226
      %v229 = vadd.f32 %v225, %v227
      %v230 = vld [vmem:[%s7] sm:$0x1]
      %v231 = vld [vmem:[%s8] sm:$0x1]
      %v232 = vsel %vm138, %v228, 0.0
      %233 = vadd.xlane.f32.xlu0 %v232
      %v234 = vpop.xlane.xlu0 %233
      %v235 = vsel %vm138, %v229, 0.0
      %236 = vadd.xlane.f32.xlu0 %v235
      %v237 = vpop.xlane.xlu0 %236
      %v238 = vrcp.pop 32.0
      %v239 = vmul.f32 32.0, %v238
      %v240 = vsub.f32 1.0, %v239
      %v241 = vmul.f32 %v238, %v240
      %v242 = vadd.f32 %v238, %v241
      %vm243 = vweird.f32 %v238
      %v244 = vsel %vm243, %v238, %v242
      %v245 = vmul.f32 %v234, %v244
      %v246 = vmul.f32 %v237, %v244
      %v247 = vsub.f32 %v228, %v245
      %v248 = vsub.f32 %v229, %v246
      %v249 = vmul.f32 %v247, %v247
      %v250 = vmul.f32 %v248, %v248
      %v251 = vsel %vm138, %v249, 0.0
      %252 = vadd.xlane.f32.xlu0 %v251
      %v253 = vpop.xlane.xlu0 %252
      %v254 = vsel %vm138, %v250, 0.0
      %255 = vadd.xlane.f32.xlu0 %v254
      %v256 = vpop.xlane.xlu0 %255
      %v257 = vmul.f32 %v253, %v244
      %v258 = vmul.f32 %v256, %v244
      %v259 = vadd.f32 %v257, 1e-05
      %v260 = vadd.f32 %v258, 1e-05
      %v261 = vrsqrt.pop %v259
      %v262 = vmul.f32 %v261, %v259
      %v263 = vmul.f32 %v262, %v261
      %v264 = vmul.f32 0.5, %v263
      %v265 = vsub.f32 1.5, %v264
      %v266 = vmul.f32 %v261, %v265
      %vm267 = vweird.f32 %v259
      %vm268 = vweird.f32 %v261
      %vm269 = vmor %vm267, %vm268
      %v270 = vsel %vm269, %v261, %v266
      %v271 = vrsqrt.pop %v260
      %v272 = vmul.f32 %v271, %v260
      %v273 = vmul.f32 %v272, %v271
      %v274 = vmul.f32 0.5, %v273
      %v275 = vsub.f32 1.5, %v274
      %v276 = vmul.f32 %v271, %v275
      %vm277 = vweird.f32 %v260
      %vm278 = vweird.f32 %v271
      %vm279 = vmor %vm277, %vm278
      %v280 = vsel %vm279, %v271, %v276
      %v281 = vmul.f32 %v247, %v270
      %v282 = vmul.f32 %v248, %v280
      %v284 = vperm.slane %v230, 0
      %v286 = vmul.f32 %v281, %v284
      %v287 = vmul.f32 %v282, %v284
      %v289 = vperm.slane %v231, 0
      %v291 = vadd.f32 %v286, %v289
      %v292 = vadd.f32 %v287, %v289
      %293 = vst.msk [vmem:[#allocation4] sm:$0xff] %vm138, %v291
      %294 = vst.msk [vmem:[#allocation4 + $0x8] sm:$0xff] %vm138, %v292
    $region45: #{transformer_decoder_forward.19} parent=1 // pred_fallthru
      _
    // Predicated region
    $region46: #{transformer_decoder_forward.19} parent=1 // pred_check
      _
    $region47: #{transformer_decoder_forward.19} parent=1 // pred_check_branch
      %296 = sbr.rel (0) target = $region49
    $region48: #{transformer_decoder_forward.19} parent=1 // pred_region
      %298 = vsyncadd [#allocation5], 0
      %s299 = sshll.u32 [#allocation4], 4
      %s300 = int_to_ptr.vmem [resolvable:$true] %s299
      %s301 = sshll.u32 %s9, 4
      %s302 = int_to_ptr.hbm [resolvable:$true] %s301
      %307 = dma.vmem_to_hbm [thread:$0]  %s300, 256, %s302, [#allocation5], 128, 128, 8
    $region49: #{transformer_decoder_forward.19} parent=1 // pred_fallthru
      _
    // Predicated region
    $region50: #{transformer_decoder_forward.19} parent=1 // pred_check
      _
    $region51: #{transformer_decoder_forward.19} parent=1 // pred_check_branch
      %309 = sbr.rel (0) target = $region53
    $region52: #{transformer_decoder_forward.19} parent=1 // pred_region
      %311 = dma.done [#allocation5], 256
    $region53: #{transformer_decoder_forward.19} parent=1 // pred_fallthru
      _
    %312 = vsyncpa [#allocation5], 1

</llo_original>
